<compile_context>
chip_gen: v6e
topology: v6e:2x2x1
jax: 0.10.0
libtpu: 0.0.40
codegen_flags: <defaults>
</compile_context>

<pallas_src>
import jax
import jax.numpy as jnp
from jax.experimental import pallas as pl
from jax.experimental.pallas import tpu as pltpu


# --------------------------------------------------------------------------- #
# Kernels
# --------------------------------------------------------------------------- #
def ffn_kernel_single(x_ref, w1_ref, b1_ref, w2_ref, b2_ref, o_ref):
    """Full FFN for one row tile; weights fully resident (1-D grid)."""
    h = jnp.dot(x_ref[...], w1_ref[...], preferred_element_type=jnp.float32)
    h = jnp.maximum(h + b1_ref[...], 0.0)                      # f32 bias + ReLU
    out = jnp.dot(h.astype(w2_ref.dtype), w2_ref[...],
                  preferred_element_type=jnp.float32)
    o_ref[...] = (out + b2_ref[...]).astype(o_ref.dtype)


def ffn_kernel_stream(x_ref, w1_ref, b1_ref, w2_ref, b2_ref, o_ref, acc_ref):
    """d_ff streamed in chunks (grid axis 1 = reduction, 'arbitrary')."""
    k = pl.program_id(1)

    @pl.when(k == 0)
    def _():
        acc_ref[...] = jnp.zeros_like(acc_ref)

    # First matmul on the current d_ff chunk; bias add + ReLU in f32.
    h = jnp.dot(x_ref[...], w1_ref[...], preferred_element_type=jnp.float32)
    h = jnp.maximum(h + b1_ref[...], 0.0)

    # Second matmul accumulates partial products over the d_ff chunks.
    acc_ref[...] += jnp.dot(h.astype(w2_ref.dtype), w2_ref[...],
                            preferred_element_type=jnp.float32)

    @pl.when(k == pl.num_programs(1) - 1)
    def _():
        o_ref[...] = (acc_ref[...] + b2_ref[...]).astype(o_ref.dtype)


# --------------------------------------------------------------------------- #
# Helpers
# --------------------------------------------------------------------------- #
def _round_up(x, m):
    return ((x + m - 1) // m) * m


def _vmem_estimate(row_tile, d_model, ff_tile, in_sz, out_sz):
    """Rough VMEM bytes: double-buffered tiles + accumulator + h spill."""
    x_t = row_tile * d_model * in_sz
    w1_t = d_model * ff_tile * in_sz
    w2_t = ff_tile * d_model * in_sz
    b1_t = 8 * ff_tile * 4          # (1, ff_tile) pads to 8 sublanes, f32
    b2_t = 8 * d_model * 4
    o_t = row_tile * d_model * out_sz
    acc_t = row_tile * d_model * 4
    h_t = row_tile * ff_tile * (4 + in_sz)   # f32 intermediate + cast copy
    return 2 * (x_t + w1_t + w2_t + b1_t + b2_t + o_t) + acc_t + h_t


def _vmem_capacity_bytes():
    cap = 64 << 20  # conservative default: v7x per-TC VMEM
    try:
        info = pltpu.get_tpu_info()
        cap = int(getattr(info, "vmem_capacity_bytes", cap) or cap)
    except Exception:
        pass
    return cap


# --------------------------------------------------------------------------- #
# Wrapper
# --------------------------------------------------------------------------- #
def feed_forward(x, w1, b1, w2, b2, *, row_tile=256, ff_tile=None,
                 compute_dtype=None, vmem_limit_bytes=None):
    """x: (batch, seq, d_model) -> (batch, seq, d_model)."""
    batch, seq, d_model = x.shape
    d_ff = w1.shape[1]
    out_dtype = x.dtype
    M = batch * seq

    assert d_model % 128 == 0, "d_model must be a multiple of 128 (lane dim)"
    assert d_ff % 128 == 0, "d_ff must be a multiple of 128 (lane dim)"

    # Shrink the row tile for tiny inputs, otherwise pad M up to a tile multiple.
    eff_row_tile = min(row_tile, _round_up(M, 8))
    M_pad = _round_up(M, eff_row_tile)

    x2 = x.reshape(M, d_model)
    if M_pad != M:
        x2 = jnp.pad(x2, ((0, M_pad - M), (0, 0)))
    # Biases pre-cast to f32 once (bias add / ReLU run in f32 vregs).
    b1_2 = b1.reshape(1, d_ff).astype(jnp.float32)
    b2_2 = b2.reshape(1, d_model).astype(jnp.float32)

    # Optional low-precision matmul operands (biases / accumulation stay f32).
    if compute_dtype is not None:
        x2 = x2.astype(compute_dtype)
        w1 = w1.astype(compute_dtype)
        w2 = w2.astype(compute_dtype)

    in_sz = jnp.dtype(x2.dtype).itemsize
    out_sz = jnp.dtype(out_dtype).itemsize

    vmem_cap = _vmem_capacity_bytes()
    budget = int(vmem_cap * 0.55)

    # Pick the largest d_ff chunk that fits the budget (full d_ff preferred ->
    # weights loaded once; otherwise stream them in ff_tile-wide chunks).
    if ff_tile is None:
        ff_tile = 128
        t = d_ff
        while t >= 128:
            if (d_ff % t == 0 and t % 128 == 0 and
                    _vmem_estimate(eff_row_tile, d_model, t, in_sz, out_sz)
                    <= budget):
                ff_tile = t
                break
            t -= 128
    else:
        ff_tile = min(ff_tile, d_ff)
        assert ff_tile % 128 == 0 and d_ff % ff_tile == 0, \
            "d_ff must be a multiple of ff_tile, ff_tile a multiple of 128"

    est = _vmem_estimate(eff_row_tile, d_model, ff_tile, in_sz, out_sz)
    if vmem_limit_bytes is None:
        vmem_limit_bytes = min(max(int(est * 1.5) + (2 << 20), 32 << 20),
                               int(vmem_cap * 0.85))

    cost = pl.CostEstimate(
        flops=4 * M * d_model * d_ff,
        transcendentals=0,
        bytes_accessed=(M * d_model * in_sz            # x
                        + d_model * d_ff * in_sz       # W1
                        + d_ff * d_model * in_sz       # W2
                        + d_ff * 4 + d_model * 4       # biases
                        + M * d_model * out_sz))       # out

    num_k = d_ff // ff_tile
    if num_k == 1:
        # Fused single-pass path: weights fully resident, no reduction axis.
        kernel = ffn_kernel_single
        grid = (M_pad // eff_row_tile,)
        in_specs = [
            pl.BlockSpec((eff_row_tile, d_model), lambda i: (i, 0)),  # x rows
            pl.BlockSpec((d_model, d_ff),         lambda i: (0, 0)),  # W1
            pl.BlockSpec((1, d_ff),               lambda i: (0, 0)),  # b1
            pl.BlockSpec((d_ff, d_model),         lambda i: (0, 0)),  # W2
            pl.BlockSpec((1, d_model),            lambda i: (0, 0)),  # b2
        ]
        out_specs = pl.BlockSpec((eff_row_tile, d_model), lambda i: (i, 0))
        scratch_shapes = []
        dims = ("parallel",)
    else:
        # Streamed-d_ff path with f32 VMEM accumulator.
        kernel = ffn_kernel_stream
        grid = (M_pad // eff_row_tile, num_k)
        in_specs = [
            pl.BlockSpec((eff_row_tile, d_model), lambda i, k: (i, 0)),  # x rows
            pl.BlockSpec((d_model, ff_tile),      lambda i, k: (0, k)),  # W1 chunk
            pl.BlockSpec((1, ff_tile),            lambda i, k: (0, k)),  # b1 chunk
            pl.BlockSpec((ff_tile, d_model),      lambda i, k: (k, 0)),  # W2 chunk
            pl.BlockSpec((1, d_model),            lambda i, k: (0, 0)),  # b2
        ]
        out_specs = pl.BlockSpec((eff_row_tile, d_model), lambda i, k: (i, 0))
        scratch_shapes = [pltpu.VMEM((eff_row_tile, d_model), jnp.float32)]
        dims = ("parallel", "arbitrary")

    out = pl.pallas_call(
        kernel,
        out_shape=jax.ShapeDtypeStruct((M_pad, d_model), out_dtype),
        grid_spec=pltpu.PrefetchScalarGridSpec(
            num_scalar_prefetch=0,
            grid=grid,
            in_specs=in_specs,
            out_specs=out_specs,
            scratch_shapes=scratch_shapes,
        ),
        compiler_params=pltpu.CompilerParams(
            dimension_semantics=dims,
            vmem_limit_bytes=vmem_limit_bytes),
        cost_estimate=cost,
    )(x2, w1, b1_2, w2, b2_2)

    return out[:M].reshape(batch, seq, d_model)


def init_params(key, d_model, d_ff, dtype=jnp.float32):
    """Deterministic init mirroring nn.Linear's U(-1/sqrt(fan_in), 1/sqrt(fan_in))."""
    k1, k2, k3, k4 = jax.random.split(key, 4)
    bound1 = 1.0 / jnp.sqrt(d_model)
    bound2 = 1.0 / jnp.sqrt(d_ff)
    # stored as (in, out) == transpose of torch's (out, in)
    w1 = jax.random.uniform(k1, (d_model, d_ff), dtype, -bound1, bound1)
    b1 = jax.random.uniform(k2, (d_ff,), dtype, -bound1, bound1)
    w2 = jax.random.uniform(k3, (d_ff, d_model), dtype, -bound2, bound2)
    b2 = jax.random.uniform(k4, (d_model,), dtype, -bound2, bound2)
    return w1, b1, w2, b2


if __name__ == "__main__":
    # Module defaults (d_model=512, d_ff=2048) at a small batch/seq.
    batch, seq, d_model, d_ff = 2, 8, 512, 2048

    key = jax.random.PRNGKey(0)
    kx, kp = jax.random.split(key)
    x = jax.random.normal(kx, (batch, seq, d_model), dtype=jnp.float32)
    w1, b1, w2, b2 = init_params(kp, d_model, d_ff)

    # Pure-JAX reference.
    ref = jnp.maximum(x @ w1 + b1, 0.0) @ w2 + b2

    # f32, auto-selected (single-pass) path.
    out = jax.block_until_ready(feed_forward(x, w1, b1, w2, b2))
    assert out.shape == (batch, seq, d_model)
    assert jnp.allclose(out, ref, atol=1e-3, rtol=1e-3), \
        float(jnp.max(jnp.abs(out - ref)))

    # Force the streamed-d_ff path to exercise the reduction-axis kernel.
    out_s = jax.block_until_ready(feed_forward(x, w1, b1, w2, b2, ff_tile=512))
    assert jnp.allclose(out_s, ref, atol=1e-3, rtol=1e-3), \
        float(jnp.max(jnp.abs(out_s - ref)))

    # bf16 matmul operands (f32 accumulation) — looser tolerance.
    out_bf16 = jax.block_until_ready(
        feed_forward(x, w1, b1, w2, b2, compute_dtype=jnp.bfloat16))
    assert jnp.allclose(out_bf16.astype(jnp.float32), ref, atol=2e-1, rtol=2e-1)

    print("KERNEL_OK")
</pallas_src>

<mosaic_0001>
module attributes {stable_mosaic.version = 11 : i64} {
  func.func @ffn_kernel_single(%arg0: i32, %arg1: memref<16x512xf32, #tpu.memory_space<vmem>>, %arg2: memref<512x2048xf32, #tpu.memory_space<vmem>>, %arg3: memref<1x2048xf32, #tpu.memory_space<vmem>>, %arg4: memref<2048x512xf32, #tpu.memory_space<vmem>>, %arg5: memref<1x512xf32, #tpu.memory_space<vmem>>, %arg6: memref<16x512xf32, #tpu.memory_space<vmem>>) attributes {dimension_semantics = [#tpu.dimension_semantics<parallel>], iteration_bounds = array<i64: 1>, scalar_prefetch = 0 : i64, scratch_operands = 0 : i64, tpu.core_type = #tpu.core_type<tc>, window_params = [{transform_indices = @transform_0, window_bounds = array<i64: 16, 512>}, {pipeline_mode = #tpu.pipeline_mode<synchronous>, transform_indices = @transform_1, window_bounds = array<i64: 512, 2048>}, {pipeline_mode = #tpu.pipeline_mode<synchronous>, transform_indices = @transform_2, window_bounds = array<i64: 1, 2048>}, {pipeline_mode = #tpu.pipeline_mode<synchronous>, transform_indices = @transform_3, window_bounds = array<i64: 2048, 512>}, {pipeline_mode = #tpu.pipeline_mode<synchronous>, transform_indices = @transform_4, window_bounds = array<i64: 1, 512>}, {transform_indices = @transform_5, window_bounds = array<i64: 16, 512>}]} {
    %c0 = arith.constant 0 : index
    %c0_0 = arith.constant 0 : index
    %0 = vector.load %arg1[%c0, %c0_0] : memref<16x512xf32, #tpu.memory_space<vmem>>, vector<16x512xf32>
    %c0_1 = arith.constant 0 : index
    %c0_2 = arith.constant 0 : index
    %1 = vector.load %arg2[%c0_1, %c0_2] : memref<512x2048xf32, #tpu.memory_space<vmem>>, vector<512x2048xf32>
    %cst = arith.constant dense<0.000000e+00> : vector<16x2048xf32>
    %2 = tpu.matmul %0, %1, %cst {dimension_numbers = #tpu.dot_dimension_numbers<[1], [0], [0], [1], [0, 0, 1, 1], [], []>} : vector<16x512xf32>, vector<512x2048xf32>, vector<16x2048xf32> -> vector<16x2048xf32>
    %c0_3 = arith.constant 0 : index
    %c0_4 = arith.constant 0 : index
    %3 = vector.load %arg3[%c0_3, %c0_4] : memref<1x2048xf32, #tpu.memory_space<vmem>>, vector<1x2048xf32>
    %4 = vector.broadcast %3 : vector<1x2048xf32> to vector<16x2048xf32>
    %5 = arith.addf %2, %4 : vector<16x2048xf32>
    %cst_5 = arith.constant 0.000000e+00 : f32
    %6 = vector.broadcast %cst_5 : f32 to vector<16x2048xf32>
    %7 = arith.maximumf %5, %6 : vector<16x2048xf32>
    %c0_6 = arith.constant 0 : index
    %c0_7 = arith.constant 0 : index
    %8 = vector.load %arg4[%c0_6, %c0_7] : memref<2048x512xf32, #tpu.memory_space<vmem>>, vector<2048x512xf32>
    %cst_8 = arith.constant dense<0.000000e+00> : vector<16x512xf32>
    %9 = tpu.matmul %7, %8, %cst_8 {dimension_numbers = #tpu.dot_dimension_numbers<[1], [0], [0], [1], [0, 0, 1, 1], [], []>} : vector<16x2048xf32>, vector<2048x512xf32>, vector<16x512xf32> -> vector<16x512xf32>
    %c0_9 = arith.constant 0 : index
    %c0_10 = arith.constant 0 : index
    %10 = vector.load %arg5[%c0_9, %c0_10] : memref<1x512xf32, #tpu.memory_space<vmem>>, vector<1x512xf32>
    %11 = vector.broadcast %10 : vector<1x512xf32> to vector<16x512xf32>
    %12 = arith.addf %9, %11 : vector<16x512xf32>
    %c0_11 = arith.constant 0 : index
    %c0_12 = arith.constant 0 : index
    %13 = vector.load %arg6[%c0_11, %c0_12] : memref<16x512xf32, #tpu.memory_space<vmem>>, vector<16x512xf32>
    tpu.vector_store %arg6[%c0_11, %c0_12], %12 {strides = array<i32>} : memref<16x512xf32, #tpu.memory_space<vmem>>, vector<16x512xf32>,
    return
  }
  func.func @transform_0(%arg0: i32) -> (i32, i32) {
    %c0_i32 = arith.constant 0 : i32
    %c0_i32_0 = arith.constant 0 : i32
    return %arg0, %c0_i32 : i32, i32
  }
  func.func @transform_1(%arg0: i32) -> (i32, i32) {
    %c0_i32 = arith.constant 0 : i32
    %c0_i32_0 = arith.constant 0 : i32
    %c0_i32_1 = arith.constant 0 : i32
    return %c0_i32, %c0_i32_0 : i32, i32
  }
  func.func @transform_2(%arg0: i32) -> (i32, i32) {
    %c0_i32 = arith.constant 0 : i32
    %c0_i32_0 = arith.constant 0 : i32
    %c0_i32_1 = arith.constant 0 : i32
    return %c0_i32, %c0_i32_0 : i32, i32
  }
  func.func @transform_3(%arg0: i32) -> (i32, i32) {
    %c0_i32 = arith.constant 0 : i32
    %c0_i32_0 = arith.constant 0 : i32
    %c0_i32_1 = arith.constant 0 : i32
    return %c0_i32, %c0_i32_0 : i32, i32
  }
  func.func @transform_4(%arg0: i32) -> (i32, i32) {
    %c0_i32 = arith.constant 0 : i32
    %c0_i32_0 = arith.constant 0 : i32
    %c0_i32_1 = arith.constant 0 : i32
    return %c0_i32, %c0_i32_0 : i32, i32
  }
  func.func @transform_5(%arg0: i32) -> (i32, i32) {
    %c0_i32 = arith.constant 0 : i32
    %c0_i32_0 = arith.constant 0 : i32
    return %arg0, %c0_i32 : i32, i32
  }
}

</mosaic_0001>

<llo_original>
// kernel: tpu_custom_call.1
$region0: #{tpu_custom_call.1}
  #allocation0 [shape = 'u32[]', space=smem, size = 0x4, offset = 0x4, fixed_abs, tag = 'smem constant byte address 0x4 - core index']
  #allocation1 [shape = 'u32[144,128]{1,0:T(1,128)}', space=vmem, size = 0x12000, scoped, tag = 'internal scratch']
  %s0 = inlined_call_operand.hbm [shape: f32[16,512], index: 0, kind: input, shape index: {}]
  %s1 = inlined_call_operand.hbm [shape: f32[512,2048], index: 1, kind: input, shape index: {}]
  %s2 = inlined_call_operand.hbm [shape: f32[1,2048], index: 2, kind: input, shape index: {}]
  %s3 = inlined_call_operand.hbm [shape: f32[2048,512], index: 3, kind: input, shape index: {}]
  %s4 = inlined_call_operand.hbm [shape: f32[1,512], index: 4, kind: input, shape index: {}]
  %s5 = inlined_call_operand.hbm [shape: f32[16,512], index: 5, kind: output, shape index: {}]
  %s6 = sld [smem:[#allocation0]]
  $region50: #{tpu_custom_call.1} parent=0
    _
  %s8 = ssub.s32 1, %s6
  %s9 = scalar_select 0, %s8, %s6
  $region1: #{tpu_custom_call.1} parent=0
    #allocation2 [shape = 'u8[32768]{0}', space=vmem, size = 0x8000, scoped, tag = 'input window, operand 0, single buffered']
    #allocation3 [shape = 's32[1]{0}', space=sflag, size = 0x4, scoped, tag = 'scoped memory for tpu_custom_call.1']
    #allocation4 [shape = 's32[1]{0}', space=sflag, size = 0x4, scoped, tag = 'scoped memory for tpu_custom_call.1']
    #allocation5 [shape = 'u8[4194304]{0}', space=vmem, size = 0x400000, scoped, tag = 'input window, operand 1, single buffered']
    #allocation6 [shape = 's32[1]{0}', space=sflag, size = 0x4, scoped, tag = 'scoped memory for tpu_custom_call.1']
    #allocation7 [shape = 'u8[8192]{0}', space=vmem, size = 0x2000, scoped, tag = 'input window, operand 2, single buffered']
    #allocation8 [shape = 'u8[4194304]{0}', space=vmem, size = 0x400000, scoped, tag = 'input window, operand 3, single buffered']
    #allocation9 [shape = 's32[1]{0}', space=sflag, size = 0x4, scoped, tag = 'scoped memory for tpu_custom_call.1']
    #allocation10 [shape = 'u8[2048]{0}', space=vmem, size = 0x800, scoped, tag = 'input window, operand 4, single buffered']
    #allocation11 [shape = 'u8[32768]{0}', space=vmem, size = 0x8000, scoped, tag = 'output window, operand 0, single buffered']
    %10 = vsyncpa [#allocation3], 0
    %11 = vsyncpa [#allocation6], 0
    %12 = vsyncpa [#allocation9], 0
    %13 = vsyncpa [#allocation4], 0
    // Predicated region
    $region2: #{tpu_custom_call.1} parent=1 // pred_check
      _
    $region3: #{tpu_custom_call.1} parent=1 // pred_check_branch
      %15 = sbr.rel (0) target = $region5
    $region4: #{tpu_custom_call.1} parent=1 // pred_region
      %s17 = ssub.s32 1024, 1024
      %18 = vsyncadd [#allocation3], %s17
      %s19 = sshll.u32 [#allocation2], 4
      %s20 = int_to_ptr.vmem [resolvable:$true] %s19
      %25 = dma.hbm_to_vmem [thread:$0]  %s0, 1024, %s20, [#allocation3], 512, 512, 32
    $region5: #{tpu_custom_call.1} parent=1 // pred_fallthru
      _
    // Predicated region
    $region6: #{tpu_custom_call.1} parent=1 // pred_check
      _
    $region7: #{tpu_custom_call.1} parent=1 // pred_check_branch
      %27 = sbr.rel (0) target = $region9
    $region8: #{tpu_custom_call.1} parent=1 // pred_region
      %s29 = ssub.s32 131072, 131072
      %30 = vsyncadd [#allocation6], %s29
      %s31 = sshll.u32 [#allocation5], 4
      %s32 = int_to_ptr.vmem [resolvable:$true] %s31
      %37 = dma.hbm_to_vmem [thread:$0]  %s1, 131072, %s32, [#allocation6], 2048, 2048, 128
    $region9: #{tpu_custom_call.1} parent=1 // pred_fallthru
      _
    // Predicated region
    $region10: #{tpu_custom_call.1} parent=1 // pred_check
      _
    $region11: #{tpu_custom_call.1} parent=1 // pred_check_branch
      %39 = sbr.rel (0) target = $region13
    $region12: #{tpu_custom_call.1} parent=1 // pred_region
      %s41 = ssub.s32 256, 256
      %42 = vsyncadd [#allocation6], %s41
      %s44 = sshll.u32 [#allocation7], 4
      %s45 = int_to_ptr.vmem [resolvable:$true] %s44
      %47 = dma.hbm_to_vmem [thread:$0]  %s2, 256, %s45, [#allocation6]
    $region13: #{tpu_custom_call.1} parent=1 // pred_fallthru
      _
    // Predicated region
    $region14: #{tpu_custom_call.1} parent=1 // pred_check
      _
    $region15: #{tpu_custom_call.1} parent=1 // pred_check_branch
      %49 = sbr.rel (0) target = $region17
    $region16: #{tpu_custom_call.1} parent=1 // pred_region
      %s51 = ssub.s32 131072, 131072
      %52 = vsyncadd [#allocation9], %s51
      %s53 = sshll.u32 [#allocation8], 4
      %s54 = int_to_ptr.vmem [resolvable:$true] %s53
      %59 = dma.hbm_to_vmem [thread:$0]  %s3, 131072, %s54, [#allocation9], 512, 512, 32
    $region17: #{tpu_custom_call.1} parent=1 // pred_fallthru
      _
    // Predicated region
    $region18: #{tpu_custom_call.1} parent=1 // pred_check
      _
    $region19: #{tpu_custom_call.1} parent=1 // pred_check_branch
      %61 = sbr.rel (0) target = $region21
    $region20: #{tpu_custom_call.1} parent=1 // pred_region
      %s63 = ssub.s32 64, 64
      %64 = vsyncadd [#allocation9], %s63
      %s66 = sshll.u32 [#allocation10], 4
      %s67 = int_to_ptr.vmem [resolvable:$true] %s66
      %69 = dma.hbm_to_vmem [thread:$0]  %s4, 64, %s67, [#allocation9]
    $region21: #{tpu_custom_call.1} parent=1 // pred_fallthru
      _
    // Predicated region
    $region22: #{tpu_custom_call.1} parent=1 // pred_check
      _
    $region23: #{tpu_custom_call.1} parent=1 // pred_check_branch
      %71 = sbr.rel (0) target = $region25
    $region24: #{tpu_custom_call.1} parent=1 // pred_region
      %72 = dma.done [#allocation3], 1024
    $region25: #{tpu_custom_call.1} parent=1 // pred_fallthru
      _
    // Predicated region
    $region26: #{tpu_custom_call.1} parent=1 // pred_check
      _
    $region27: #{tpu_custom_call.1} parent=1 // pred_check_branch
      %74 = sbr.rel (0) target = $region29
    $region28: #{tpu_custom_call.1} parent=1 // pred_region
      %75 = dma.done [#allocation6], 131072
    $region29: #{tpu_custom_call.1} parent=1 // pred_fallthru
      _
    // Predicated region
    $region30: #{tpu_custom_call.1} parent=1 // pred_check
      _
    $region31: #{tpu_custom_call.1} parent=1 // pred_check_branch
      %77 = sbr.rel (0) target = $region33
    $region32: #{tpu_custom_call.1} parent=1 // pred_region
      %78 = dma.done [#allocation6], 256
    $region33: #{tpu_custom_call.1} parent=1 // pred_fallthru
      _
    // Predicated region
    $region34: #{tpu_custom_call.1} parent=1 // pred_check
      _
    $region35: #{tpu_custom_call.1} parent=1 // pred_check_branch
      %80 = sbr.rel (0) target = $region37
    $region36: #{tpu_custom_call.1} parent=1 // pred_region
      %81 = dma.done [#allocation9], 131072
    $region37: #{tpu_custom_call.1} parent=1 // pred_fallthru
      _
    // Predicated region
    $region38: #{tpu_custom_call.1} parent=1 // pred_check
      _
    $region39: #{tpu_custom_call.1} parent=1 // pred_check_branch
      %83 = sbr.rel (0) target = $region41
    $region40: #{tpu_custom_call.1} parent=1 // pred_region
      %84 = dma.done [#allocation9], 64
    $region41: #{tpu_custom_call.1} parent=1 // pred_fallthru
      _
    %v85 = vld [vmem:[#allocation2] sm:$0xff]
    %v86 = vld [vmem:[#allocation2 + $0x8] sm:$0xff]
    %v87 = vld [vmem:[#allocation2 + $0x10] sm:$0xff]
    %v88 = vld [vmem:[#allocation2 + $0x18] sm:$0xff]
    %v89 = vld [vmem:[#allocation2 + $0x20] sm:$0xff]
    %v90 = vld [vmem:[#allocation2 + $0x28] sm:$0xff]
    %v91 = vld [vmem:[#allocation2 + $0x30] sm:$0xff]
    %v92 = vld [vmem:[#allocation2 + $0x38] sm:$0xff]
    %v93 = vld [vmem:[#allocation5] sm:$0xff]
    %v94 = vld [vmem:[#allocation5 + $0x8] sm:$0xff]
    %v95 = vld [vmem:[#allocation5 + $0x10] sm:$0xff]
    %v96 = vld [vmem:[#allocation5 + $0x18] sm:$0xff]
    %v97 = vld [vmem:[#allocation5 + $0x20] sm:$0xff]
    %v98 = vld [vmem:[#allocation5 + $0x28] sm:$0xff]
    %v99 = vld [vmem:[#allocation5 + $0x30] sm:$0xff]
    %v100 = vld [vmem:[#allocation5 + $0x38] sm:$0xff]
    %v101 = vld [vmem:[#allocation5 + $0x40] sm:$0xff]
    %v102 = vld [vmem:[#allocation5 + $0x48] sm:$0xff]
    %v103 = vld [vmem:[#allocation5 + $0x50] sm:$0xff]
    %v104 = vld [vmem:[#allocation5 + $0x58] sm:$0xff]
    %v105 = vld [vmem:[#allocation5 + $0x60] sm:$0xff]
    %v106 = vld [vmem:[#allocation5 + $0x68] sm:$0xff]
    %v107 = vld [vmem:[#allocation5 + $0x70] sm:$0xff]
    %v108 = vld [vmem:[#allocation5 + $0x78] sm:$0xff]
    %v109 = vld [vmem:[#allocation5 + $0x80] sm:$0xff]
    %v110 = vld [vmem:[#allocation5 + $0x88] sm:$0xff]
    %v111 = vld [vmem:[#allocation5 + $0x90] sm:$0xff]
    %v112 = vld [vmem:[#allocation5 + $0x98] sm:$0xff]
    %v113 = vld [vmem:[#allocation5 + $0xa0] sm:$0xff]
    %v114 = vld [vmem:[#allocation5 + $0xa8] sm:$0xff]
    %v115 = vld [vmem:[#allocation5 + $0xb0] sm:$0xff]
    %v116 = vld [vmem:[#allocation5 + $0xb8] sm:$0xff]
    %v117 = vld [vmem:[#allocation5 + $0xc0] sm:$0xff]
    %v118 = vld [vmem:[#allocation5 + $0xc8] sm:$0xff]
    %v119 = vld [vmem:[#allocation5 + $0xd0] sm:$0xff]
    %v120 = vld [vmem:[#allocation5 + $0xd8] sm:$0xff]
    %v121 = vld [vmem:[#allocation5 + $0xe0] sm:$0xff]
    %v122 = vld [vmem:[#allocation5 + $0xe8] sm:$0xff]
    %v123 = vld [vmem:[#allocation5 + $0xf0] sm:$0xff]
    %v124 = vld [vmem:[#allocation5 + $0xf8] sm:$0xff]
    %v125 = vld [vmem:[#allocation5 + $0x100] sm:$0xff]
    %v126 = vld [vmem:[#allocation5 + $0x108] sm:$0xff]
    %v127 = vld [vmem:[#allocation5 + $0x110] sm:$0xff]
    %v128 = vld [vmem:[#allocation5 + $0x118] sm:$0xff]
    %v129 = vld [vmem:[#allocation5 + $0x120] sm:$0xff]
    %v130 = vld [vmem:[#allocation5 + $0x128] sm:$0xff]
    %v131 = vld [vmem:[#allocation5 + $0x130] sm:$0xff]
    %v132 = vld [vmem:[#allocation5 + $0x138] sm:$0xff]
    %v133 = vld [vmem:[#allocation5 + $0x140] sm:$0xff]
    %v134 = vld [vmem:[#allocation5 + $0x148] sm:$0xff]
    %v135 = vld [vmem:[#allocation5 + $0x150] sm:$0xff]
    %v136 = vld [vmem:[#allocation5 + $0x158] sm:$0xff]
    %v137 = vld [vmem:[#allocation5 + $0x160] sm:$0xff]
    %v138 = vld [vmem:[#allocation5 + $0x168] sm:$0xff]
    %v139 = vld [vmem:[#allocation5 + $0x170] sm:$0xff]
    %v140 = vld [vmem:[#allocation5 + $0x178] sm:$0xff]
    %v141 = vld [vmem:[#allocation5 + $0x180] sm:$0xff]
    %v142 = vld [vmem:[#allocation5 + $0x188] sm:$0xff]
    %v143 = vld [vmem:[#allocation5 + $0x190] sm:$0xff]
    %v144 = vld [vmem:[#allocation5 + $0x198] sm:$0xff]
    %v145 = vld [vmem:[#allocation5 + $0x1a0] sm:$0xff]
    %v146 = vld [vmem:[#allocation5 + $0x1a8] sm:$0xff]
    %v147 = vld [vmem:[#allocation5 + $0x1b0] sm:$0xff]
    %v148 = vld [vmem:[#allocation5 + $0x1b8] sm:$0xff]
    %v149 = vld [vmem:[#allocation5 + $0x1c0] sm:$0xff]
    %v150 = vld [vmem:[#allocation5 + $0x1c8] sm:$0xff]
    %v151 = vld [vmem:[#allocation5 + $0x1d0] sm:$0xff]
    %v152 = vld [vmem:[#allocation5 + $0x1d8] sm:$0xff]
    %v153 = vld [vmem:[#allocation5 + $0x1e0] sm:$0xff]
    %v154 = vld [vmem:[#allocation5 + $0x1e8] sm:$0xff]
    %v155 = vld [vmem:[#allocation5 + $0x1f0] sm:$0xff]
    %v156 = vld [vmem:[#allocation5 + $0x1f8] sm:$0xff]
    %v157 = vld [vmem:[#allocation5 + $0x200] sm:$0xff]
    %v158 = vld [vmem:[#allocation5 + $0x208] sm:$0xff]
    %v159 = vld [vmem:[#allocation5 + $0x210] sm:$0xff]
    %v160 = vld [vmem:[#allocation5 + $0x218] sm:$0xff]
    %v161 = vld [vmem:[#allocation5 + $0x220] sm:$0xff]
    %v162 = vld [vmem:[#allocation5 + $0x228] sm:$0xff]
    %v163 = vld [vmem:[#allocation5 + $0x230] sm:$0xff]
    %v164 = vld [vmem:[#allocation5 + $0x238] sm:$0xff]
    %v165 = vld [vmem:[#allocation5 + $0x240] sm:$0xff]
    %v166 = vld [vmem:[#allocation5 + $0x248] sm:$0xff]
    %v167 = vld [vmem:[#allocation5 + $0x250] sm:$0xff]
    %v168 = vld [vmem:[#allocation5 + $0x258] sm:$0xff]
    %v169 = vld [vmem:[#allocation5 + $0x260] sm:$0xff]
    %v170 = vld [vmem:[#allocation5 + $0x268] sm:$0xff]
    %v171 = vld [vmem:[#allocation5 + $0x270] sm:$0xff]
    %v172 = vld [vmem:[#allocation5 + $0x278] sm:$0xff]
    %v173 = vld [vmem:[#allocation5 + $0x280] sm:$0xff]
    %v174 = vld [vmem:[#allocation5 + $0x288] sm:$0xff]
    %v175 = vld [vmem:[#allocation5 + $0x290] sm:$0xff]
    %v176 = vld [vmem:[#allocation5 + $0x298] sm:$0xff]
    %v177 = vld [vmem:[#allocation5 + $0x2a0] sm:$0xff]
    %v178 = vld [vmem:[#allocation5 + $0x2a8] sm:$0xff]
    %v179 = vld [vmem:[#allocation5 + $0x2b0] sm:$0xff]
    %v180 = vld [vmem:[#allocation5 + $0x2b8] sm:$0xff]
    %v181 = vld [vmem:[#allocation5 + $0x2c0] sm:$0xff]
    %v182 = vld [vmem:[#allocation5 + $0x2c8] sm:$0xff]
    %v183 = vld [vmem:[#allocation5 + $0x2d0] sm:$0xff]
    %v184 = vld [vmem:[#allocation5 + $0x2d8] sm:$0xff]
    %v185 = vld [vmem:[#allocation5 + $0x2e0] sm:$0xff]
    %v186 = vld [vmem:[#allocation5 + $0x2e8] sm:$0xff]
    %v187 = vld [vmem:[#allocation5 + $0x2f0] sm:$0xff]
    %v188 = vld [vmem:[#allocation5 + $0x2f8] sm:$0xff]
    %v189 = vld [vmem:[#allocation5 + $0x300] sm:$0xff]
    %v190 = vld [vmem:[#allocation5 + $0x308] sm:$0xff]
    %v191 = vld [vmem:[#allocation5 + $0x310] sm:$0xff]
    %v192 = vld [vmem:[#allocation5 + $0x318] sm:$0xff]
    %v193 = vld [vmem:[#allocation5 + $0x320] sm:$0xff]
    %v194 = vld [vmem:[#allocation5 + $0x328] sm:$0xff]
    %v195 = vld [vmem:[#allocation5 + $0x330] sm:$0xff]
    %v196 = vld [vmem:[#allocation5 + $0x338] sm:$0xff]
    %v197 = vld [vmem:[#allocation5 + $0x340] sm:$0xff]
    %v198 = vld [vmem:[#allocation5 + $0x348] sm:$0xff]
    %v199 = vld [vmem:[#allocation5 + $0x350] sm:$0xff]
    %v200 = vld [vmem:[#allocation5 + $0x358] sm:$0xff]
    %v201 = vld [vmem:[#allocation5 + $0x360] sm:$0xff]
    %v202 = vld [vmem:[#allocation5 + $0x368] sm:$0xff]
    %v203 = vld [vmem:[#allocation5 + $0x370] sm:$0xff]
    %v204 = vld [vmem:[#allocation5 + $0x378] sm:$0xff]
    %v205 = vld [vmem:[#allocation5 + $0x380] sm:$0xff]
    %v206 = vld [vmem:[#allocation5 + $0x388] sm:$0xff]
    %v207 = vld [vmem:[#allocation5 + $0x390] sm:$0xff]
    %v208 = vld [vmem:[#allocation5 + $0x398] sm:$0xff]
    %v209 = vld [vmem:[#allocation5 + $0x3a0] sm:$0xff]
    %v210 = vld [vmem:[#allocation5 + $0x3a8] sm:$0xff]
    %v211 = vld [vmem:[#allocation5 + $0x3b0] sm:$0xff]
    %v212 = vld [vmem:[#allocation5 + $0x3b8] sm:$0xff]
    %v213 = vld [vmem:[#allocation5 + $0x3c0] sm:$0xff]
    %v214 = vld [vmem:[#allocation5 + $0x3c8] sm:$0xff]
    %v215 = vld [vmem:[#allocation5 + $0x3d0] sm:$0xff]
    %v216 = vld [vmem:[#allocation5 + $0x3d8] sm:$0xff]
    %v217 = vld [vmem:[#allocation5 + $0x3e0] sm:$0xff]
    %v218 = vld [vmem:[#allocation5 + $0x3e8] sm:$0xff]
    %v219 = vld [vmem:[#allocation5 + $0x3f0] sm:$0xff]
    %v220 = vld [vmem:[#allocation5 + $0x3f8] sm:$0xff]
    %v221 = vld [vmem:[#allocation5 + $0x400] sm:$0xff]
    %v222 = vld [vmem:[#allocation5 + $0x408] sm:$0xff]
    %v223 = vld [vmem:[#allocation5 + $0x410] sm:$0xff]
    %v224 = vld [vmem:[#allocation5 + $0x418] sm:$0xff]
    %v225 = vld [vmem:[#allocation5 + $0x420] sm:$0xff]
    %v226 = vld [vmem:[#allocation5 + $0x428] sm:$0xff]
    %v227 = vld [vmem:[#allocation5 + $0x430] sm:$0xff]
    %v228 = vld [vmem:[#allocation5 + $0x438] sm:$0xff]
    %v229 = vld [vmem:[#allocation5 + $0x440] sm:$0xff]
    %v230 = vld [vmem:[#allocation5 + $0x448] sm:$0xff]
    %v231 = vld [vmem:[#allocation5 + $0x450] sm:$0xff]
    %v232 = vld [vmem:[#allocation5 + $0x458] sm:$0xff]
    %v233 = vld [vmem:[#allocation5 + $0x460] sm:$0xff]
    %v234 = vld [vmem:[#allocation5 + $0x468] sm:$0xff]
    %v235 = vld [vmem:[#allocation5 + $0x470] sm:$0xff]
    %v236 = vld [vmem:[#allocation5 + $0x478] sm:$0xff]
    %v237 = vld [vmem:[#allocation5 + $0x480] sm:$0xff]
    %v238 = vld [vmem:[#allocation5 + $0x488] sm:$0xff]
    %v239 = vld [vmem:[#allocation5 + $0x490] sm:$0xff]
    %v240 = vld [vmem:[#allocation5 + $0x498] sm:$0xff]
    %v241 = vld [vmem:[#allocation5 + $0x4a0] sm:$0xff]
    %v242 = vld [vmem:[#allocation5 + $0x4a8] sm:$0xff]
    %v243 = vld [vmem:[#allocation5 + $0x4b0] sm:$0xff]
    %v244 = vld [vmem:[#allocation5 + $0x4b8] sm:$0xff]
    %v245 = vld [vmem:[#allocation5 + $0x4c0] sm:$0xff]
    %v246 = vld [vmem:[#allocation5 + $0x4c8] sm:$0xff]
    %v247 = vld [vmem:[#allocation5 + $0x4d0] sm:$0xff]
    %v248 = vld [vmem:[#allocation5 + $0x4d8] sm:$0xff]
    %v249 = vld [vmem:[#allocation5 + $0x4e0] sm:$0xff]
    %v250 = vld [vmem:[#allocation5 + $0x4e8] sm:$0xff]
    %v251 = vld [vmem:[#allocation5 + $0x4f0] sm:$0xff]
    %v252 = vld [vmem:[#allocation5 + $0x4f8] sm:$0xff]
    %v253 = vld [vmem:[#allocation5 + $0x500] sm:$0xff]
    %v254 = vld [vmem:[#allocation5 + $0x508] sm:$0xff]
    %v255 = vld [vmem:[#allocation5 + $0x510] sm:$0xff]
    %v256 = vld [vmem:[#allocation5 + $0x518] sm:$0xff]
    %v257 = vld [vmem:[#allocation5 + $0x520] sm:$0xff]
    %v258 = vld [vmem:[#allocation5 + $0x528] sm:$0xff]
    %v259 = vld [vmem:[#allocation5 + $0x530] sm:$0xff]
    %v260 = vld [vmem:[#allocation5 + $0x538] sm:$0xff]
    %v261 = vld [vmem:[#allocation5 + $0x540] sm:$0xff]
    %v262 = vld [vmem:[#allocation5 + $0x548] sm:$0xff]
    %v263 = vld [vmem:[#allocation5 + $0x550] sm:$0xff]
    %v264 = vld [vmem:[#allocation5 + $0x558] sm:$0xff]
    %v265 = vld [vmem:[#allocation5 + $0x560] sm:$0xff]
    %v266 = vld [vmem:[#allocation5 + $0x568] sm:$0xff]
    %v267 = vld [vmem:[#allocation5 + $0x570] sm:$0xff]
    %v268 = vld [vmem:[#allocation5 + $0x578] sm:$0xff]
    %v269 = vld [vmem:[#allocation5 + $0x580] sm:$0xff]
    %v270 = vld [vmem:[#allocation5 + $0x588] sm:$0xff]
    %v271 = vld [vmem:[#allocation5 + $0x590] sm:$0xff]
    %v272 = vld [vmem:[#allocation5 + $0x598] sm:$0xff]
    %v273 = vld [vmem:[#allocation5 + $0x5a0] sm:$0xff]
    %v274 = vld [vmem:[#allocation5 + $0x5a8] sm:$0xff]
    %v275 = vld [vmem:[#allocation5 + $0x5b0] sm:$0xff]
    %v276 = vld [vmem:[#allocation5 + $0x5b8] sm:$0xff]
    %v277 = vld [vmem:[#allocation5 + $0x5c0] sm:$0xff]
    %v278 = vld [vmem:[#allocation5 + $0x5c8] sm:$0xff]
    %v279 = vld [vmem:[#allocation5 + $0x5d0] sm:$0xff]
    %v280 = vld [vmem:[#allocation5 + $0x5d8] sm:$0xff]
    %v281 = vld [vmem:[#allocation5 + $0x5e0] sm:$0xff]
    %v282 = vld [vmem:[#allocation5 + $0x5e8] sm:$0xff]
    %v283 = vld [vmem:[#allocation5 + $0x5f0] sm:$0xff]
    %v284 = vld [vmem:[#allocation5 + $0x5f8] sm:$0xff]
    %v285 = vld [vmem:[#allocation5 + $0x600] sm:$0xff]
    %v286 = vld [vmem:[#allocation5 + $0x608] sm:$0xff]
    %v287 = vld [vmem:[#allocation5 + $0x610] sm:$0xff]
    %v288 = vld [vmem:[#allocation5 + $0x618] sm:$0xff]
    %v289 = vld [vmem:[#allocation5 + $0x620] sm:$0xff]
    %v290 = vld [vmem:[#allocation5 + $0x628] sm:$0xff]
    %v291 = vld [vmem:[#allocation5 + $0x630] sm:$0xff]
    %v292 = vld [vmem:[#allocation5 + $0x638] sm:$0xff]
    %v293 = vld [vmem:[#allocation5 + $0x640] sm:$0xff]
    %v294 = vld [vmem:[#allocation5 + $0x648] sm:$0xff]
    %v295 = vld [vmem:[#allocation5 + $0x650] sm:$0xff]
    %v296 = vld [vmem:[#allocation5 + $0x658] sm:$0xff]
    %v297 = vld [vmem:[#allocation5 + $0x660] sm:$0xff]
    %v298 = vld [vmem:[#allocation5 + $0x668] sm:$0xff]
    %v299 = vld [vmem:[#allocation5 + $0x670] sm:$0xff]
    %v300 = vld [vmem:[#allocation5 + $0x678] sm:$0xff]
    %v301 = vld [vmem:[#allocation5 + $0x680] sm:$0xff]
    %v302 = vld [vmem:[#allocation5 + $0x688] sm:$0xff]
    %v303 = vld [vmem:[#allocation5 + $0x690] sm:$0xff]
    %v304 = vld [vmem:[#allocation5 + $0x698] sm:$0xff]
    %v305 = vld [vmem:[#allocation5 + $0x6a0] sm:$0xff]
    %v306 = vld [vmem:[#allocation5 + $0x6a8] sm:$0xff]
    %v307 = vld [vmem:[#allocation5 + $0x6b0] sm:$0xff]
    %v308 = vld [vmem:[#allocation5 + $0x6b8] sm:$0xff]
    %v309 = vld [vmem:[#allocation5 + $0x6c0] sm:$0xff]
    %v310 = vld [vmem:[#allocation5 + $0x6c8] sm:$0xff]
    %v311 = vld [vmem:[#allocation5 + $0x6d0] sm:$0xff]
    %v312 = vld [vmem:[#allocation5 + $0x6d8] sm:$0xff]
    %v313 = vld [vmem:[#allocation5 + $0x6e0] sm:$0xff]
    %v314 = vld [vmem:[#allocation5 + $0x6e8] sm:$0xff]
    %v315 = vld [vmem:[#allocation5 + $0x6f0] sm:$0xff]
    %v316 = vld [vmem:[#allocation5 + $0x6f8] sm:$0xff]
    %v317 = vld [vmem:[#allocation5 + $0x700] sm:$0xff]
    %v318 = vld [vmem:[#allocation5 + $0x708] sm:$0xff]
    %v319 = vld [vmem:[#allocation5 + $0x710] sm:$0xff]
    %v320 = vld [vmem:[#allocation5 + $0x718] sm:$0xff]
    %v321 = vld [vmem:[#allocation5 + $0x720] sm:$0xff]
    %v322 = vld [vmem:[#allocation5 + $0x728] sm:$0xff]
    %v323 = vld [vmem:[#allocation5 + $0x730] sm:$0xff]
    %v324 = vld [vmem:[#allocation5 + $0x738] sm:$0xff]
    %v325 = vld [vmem:[#allocation5 + $0x740] sm:$0xff]
    %v326 = vld [vmem:[#allocation5 + $0x748] sm:$0xff]
    %v327 = vld [vmem:[#allocation5 + $0x750] sm:$0xff]
    %v328 = vld [vmem:[#allocation5 + $0x758] sm:$0xff]
    %v329 = vld [vmem:[#allocation5 + $0x760] sm:$0xff]
    %v330 = vld [vmem:[#allocation5 + $0x768] sm:$0xff]
    %v331 = vld [vmem:[#allocation5 + $0x770] sm:$0xff]
    %v332 = vld [vmem:[#allocation5 + $0x778] sm:$0xff]
    %v333 = vld [vmem:[#allocation5 + $0x780] sm:$0xff]
    %v334 = vld [vmem:[#allocation5 + $0x788] sm:$0xff]
    %v335 = vld [vmem:[#allocation5 + $0x790] sm:$0xff]
    %v336 = vld [vmem:[#allocation5 + $0x798] sm:$0xff]
    %v337 = vld [vmem:[#allocation5 + $0x7a0] sm:$0xff]
    %v338 = vld [vmem:[#allocation5 + $0x7a8] sm:$0xff]
    %v339 = vld [vmem:[#allocation5 + $0x7b0] sm:$0xff]
    %v340 = vld [vmem:[#allocation5 + $0x7b8] sm:$0xff]
    %v341 = vld [vmem:[#allocation5 + $0x7c0] sm:$0xff]
    %v342 = vld [vmem:[#allocation5 + $0x7c8] sm:$0xff]
    %v343 = vld [vmem:[#allocation5 + $0x7d0] sm:$0xff]
    %v344 = vld [vmem:[#allocation5 + $0x7d8] sm:$0xff]
    %v345 = vld [vmem:[#allocation5 + $0x7e0] sm:$0xff]
    %v346 = vld [vmem:[#allocation5 + $0x7e8] sm:$0xff]
    %v347 = vld [vmem:[#allocation5 + $0x7f0] sm:$0xff]
    %v348 = vld [vmem:[#allocation5 + $0x7f8] sm:$0xff]
    %v349 = vld [vmem:[#allocation5 + $0x800] sm:$0xff]
    %v350 = vld [vmem:[#allocation5 + $0x808] sm:$0xff]
    %v351 = vld [vmem:[#allocation5 + $0x810] sm:$0xff]
    %v352 = vld [vmem:[#allocation5 + $0x818] sm:$0xff]
    %v353 = vld [vmem:[#allocation5 + $0x820] sm:$0xff]
    %v354 = vld [vmem:[#allocation5 + $0x828] sm:$0xff]
    %v355 = vld [vmem:[#allocation5 + $0x830] sm:$0xff]
    %v356 = vld [vmem:[#allocation5 + $0x838] sm:$0xff]
    %v357 = vld [vmem:[#allocation5 + $0x840] sm:$0xff]
    %v358 = vld [vmem:[#allocation5 + $0x848] sm:$0xff]
    %v359 = vld [vmem:[#allocation5 + $0x850] sm:$0xff]
    %v360 = vld [vmem:[#allocation5 + $0x858] sm:$0xff]
    %v361 = vld [vmem:[#allocation5 + $0x860] sm:$0xff]
    %v362 = vld [vmem:[#allocation5 + $0x868] sm:$0xff]
    %v363 = vld [vmem:[#allocation5 + $0x870] sm:$0xff]
    %v364 = vld [vmem:[#allocation5 + $0x878] sm:$0xff]
    %v365 = vld [vmem:[#allocation5 + $0x880] sm:$0xff]
    %v366 = vld [vmem:[#allocation5 + $0x888] sm:$0xff]
    %v367 = vld [vmem:[#allocation5 + $0x890] sm:$0xff]
    %v368 = vld [vmem:[#allocation5 + $0x898] sm:$0xff]
    %v369 = vld [vmem:[#allocation5 + $0x8a0] sm:$0xff]
    %v370 = vld [vmem:[#allocation5 + $0x8a8] sm:$0xff]
    %v371 = vld [vmem:[#allocation5 + $0x8b0] sm:$0xff]
    %v372 = vld [vmem:[#allocation5 + $0x8b8] sm:$0xff]
    %v373 = vld [vmem:[#allocation5 + $0x8c0] sm:$0xff]
    %v374 = vld [vmem:[#allocation5 + $0x8c8] sm:$0xff]
    %v375 = vld [vmem:[#allocation5 + $0x8d0] sm:$0xff]
    %v376 = vld [vmem:[#allocation5 + $0x8d8] sm:$0xff]
    %v377 = vld [vmem:[#allocation5 + $0x8e0] sm:$0xff]
    %v378 = vld [vmem:[#allocation5 + $0x8e8] sm:$0xff]
    %v379 = vld [vmem:[#allocation5 + $0x8f0] sm:$0xff]
    %v380 = vld [vmem:[#allocation5 + $0x8f8] sm:$0xff]
    %v381 = vld [vmem:[#allocation5 + $0x900] sm:$0xff]
    %v382 = vld [vmem:[#allocation5 + $0x908] sm:$0xff]
    %v383 = vld [vmem:[#allocation5 + $0x910] sm:$0xff]
    %v384 = vld [vmem:[#allocation5 + $0x918] sm:$0xff]
    %v385 = vld [vmem:[#allocation5 + $0x920] sm:$0xff]
    %v386 = vld [vmem:[#allocation5 + $0x928] sm:$0xff]
    %v387 = vld [vmem:[#allocation5 + $0x930] sm:$0xff]
    %v388 = vld [vmem:[#allocation5 + $0x938] sm:$0xff]
    %v389 = vld [vmem:[#allocation5 + $0x940] sm:$0xff]
    %v390 = vld [vmem:[#allocation5 + $0x948] sm:$0xff]
    %v391 = vld [vmem:[#allocation5 + $0x950] sm:$0xff]
    %v392 = vld [vmem:[#allocation5 + $0x958] sm:$0xff]
    %v393 = vld [vmem:[#allocation5 + $0x960] sm:$0xff]
    %v394 = vld [vmem:[#allocation5 + $0x968] sm:$0xff]
    %v395 = vld [vmem:[#allocation5 + $0x970] sm:$0xff]
    %v396 = vld [vmem:[#allocation5 + $0x978] sm:$0xff]
    %v397 = vld [vmem:[#allocation5 + $0x980] sm:$0xff]
    %v398 = vld [vmem:[#allocation5 + $0x988] sm:$0xff]
    %v399 = vld [vmem:[#allocation5 + $0x990] sm:$0xff]
    %v400 = vld [vmem:[#allocation5 + $0x998] sm:$0xff]
    %v401 = vld [vmem:[#allocation5 + $0x9a0] sm:$0xff]
    %v402 = vld [vmem:[#allocation5 + $0x9a8] sm:$0xff]
    %v403 = vld [vmem:[#allocation5 + $0x9b0] sm:$0xff]
    %v404 = vld [vmem:[#allocation5 + $0x9b8] sm:$0xff]
    %v405 = vld [vmem:[#allocation5 + $0x9c0] sm:$0xff]
    %v406 = vld [vmem:[#allocation5 + $0x9c8] sm:$0xff]
    %v407 = vld [vmem:[#allocation5 + $0x9d0] sm:$0xff]
    %v408 = vld [vmem:[#allocation5 + $0x9d8] sm:$0xff]
    %v409 = vld [vmem:[#allocation5 + $0x9e0] sm:$0xff]
    %v410 = vld [vmem:[#allocation5 + $0x9e8] sm:$0xff]
    %v411 = vld [vmem:[#allocation5 + $0x9f0] sm:$0xff]
    %v412 = vld [vmem:[#allocation5 + $0x9f8] sm:$0xff]
    %v413 = vld [vmem:[#allocation5 + $0xa00] sm:$0xff]
    %v414 = vld [vmem:[#allocation5 + $0xa08] sm:$0xff]
    %v415 = vld [vmem:[#allocation5 + $0xa10] sm:$0xff]
    %v416 = vld [vmem:[#allocation5 + $0xa18] sm:$0xff]
    %v417 = vld [vmem:[#allocation5 + $0xa20] sm:$0xff]
    %v418 = vld [vmem:[#allocation5 + $0xa28] sm:$0xff]
    %v419 = vld [vmem:[#allocation5 + $0xa30] sm:$0xff]
    %v420 = vld [vmem:[#allocation5 + $0xa38] sm:$0xff]
    %v421 = vld [vmem:[#allocation5 + $0xa40] sm:$0xff]
    %v422 = vld [vmem:[#allocation5 + $0xa48] sm:$0xff]
    %v423 = vld [vmem:[#allocation5 + $0xa50] sm:$0xff]
    %v424 = vld [vmem:[#allocation5 + $0xa58] sm:$0xff]
    %v425 = vld [vmem:[#allocation5 + $0xa60] sm:$0xff]
    %v426 = vld [vmem:[#allocation5 + $0xa68] sm:$0xff]
    %v427 = vld [vmem:[#allocation5 + $0xa70] sm:$0xff]
    %v428 = vld [vmem:[#allocation5 + $0xa78] sm:$0xff]
    %v429 = vld [vmem:[#allocation5 + $0xa80] sm:$0xff]
    %v430 = vld [vmem:[#allocation5 + $0xa88] sm:$0xff]
    %v431 = vld [vmem:[#allocation5 + $0xa90] sm:$0xff]
    %v432 = vld [vmem:[#allocation5 + $0xa98] sm:$0xff]
    %v433 = vld [vmem:[#allocation5 + $0xaa0] sm:$0xff]
    %v434 = vld [vmem:[#allocation5 + $0xaa8] sm:$0xff]
    %v435 = vld [vmem:[#allocation5 + $0xab0] sm:$0xff]
    %v436 = vld [vmem:[#allocation5 + $0xab8] sm:$0xff]
    %v437 = vld [vmem:[#allocation5 + $0xac0] sm:$0xff]
    %v438 = vld [vmem:[#allocation5 + $0xac8] sm:$0xff]
    %v439 = vld [vmem:[#allocation5 + $0xad0] sm:$0xff]
    %v440 = vld [vmem:[#allocation5 + $0xad8] sm:$0xff]
    %v441 = vld [vmem:[#allocation5 + $0xae0] sm:$0xff]
    %v442 = vld [vmem:[#allocation5 + $0xae8] sm:$0xff]
    %v443 = vld [vmem:[#allocation5 + $0xaf0] sm:$0xff]
    %v444 = vld [vmem:[#allocation5 + $0xaf8] sm:$0xff]
    %v445 = vld [vmem:[#allocation5 + $0xb00] sm:$0xff]
    %v446 = vld [vmem:[#allocation5 + $0xb08] sm:$0xff]
    %v447 = vld [vmem:[#allocation5 + $0xb10] sm:$0xff]
    %v448 = vld [vmem:[#allocation5 + $0xb18] sm:$0xff]
    %v449 = vld [vmem:[#allocation5 + $0xb20] sm:$0xff]
    %v450 = vld [vmem:[#allocation5 + $0xb28] sm:$0xff]
    %v451 = vld [vmem:[#allocation5 + $0xb30] sm:$0xff]
    %v452 = vld [vmem:[#allocation5 + $0xb38] sm:$0xff]
    %v453 = vld [vmem:[#allocation5 + $0xb40] sm:$0xff]
    %v454 = vld [vmem:[#allocation5 + $0xb48] sm:$0xff]
    %v455 = vld [vmem:[#allocation5 + $0xb50] sm:$0xff]
    %v456 = vld [vmem:[#allocation5 + $0xb58] sm:$0xff]
    %v457 = vld [vmem:[#allocation5 + $0xb60] sm:$0xff]
    %v458 = vld [vmem:[#allocation5 + $0xb68] sm:$0xff]
    %v459 = vld [vmem:[#allocation5 + $0xb70] sm:$0xff]
    %v460 = vld [vmem:[#allocation5 + $0xb78] sm:$0xff]
    %v461 = vld [vmem:[#allocation5 + $0xb80] sm:$0xff]
    %v462 = vld [vmem:[#allocation5 + $0xb88] sm:$0xff]
    %v463 = vld [vmem:[#allocation5 + $0xb90] sm:$0xff]
    %v464 = vld [vmem:[#allocation5 + $0xb98] sm:$0xff]
    %v465 = vld [vmem:[#allocation5 + $0xba0] sm:$0xff]
    %v466 = vld [vmem:[#allocation5 + $0xba8] sm:$0xff]
    %v467 = vld [vmem:[#allocation5 + $0xbb0] sm:$0xff]
    %v468 = vld [vmem:[#allocation5 + $0xbb8] sm:$0xff]
    %v469 = vld [vmem:[#allocation5 + $0xbc0] sm:$0xff]
    %v470 = vld [vmem:[#allocation5 + $0xbc8] sm:$0xff]
    %v471 = vld [vmem:[#allocation5 + $0xbd0] sm:$0xff]
    %v472 = vld [vmem:[#allocation5 + $0xbd8] sm:$0xff]
    %v473 = vld [vmem:[#allocation5 + $0xbe0] sm:$0xff]
    %v474 = vld [vmem:[#allocation5 + $0xbe8] sm:$0xff]
    %v475 = vld [vmem:[#allocation5 + $0xbf0] sm:$0xff]
    %v476 = vld [vmem:[#allocation5 + $0xbf8] sm:$0xff]
    %v477 = vld [vmem:[#allocation5 + $0xc00] sm:$0xff]
    %v478 = vld [vmem:[#allocation5 + $0xc08] sm:$0xff]
    %v479 = vld [vmem:[#allocation5 + $0xc10] sm:$0xff]
    %v480 = vld [vmem:[#allocation5 + $0xc18] sm:$0xff]
    %v481 = vld [vmem:[#allocation5 + $0xc20] sm:$0xff]
    %v482 = vld [vmem:[#allocation5 + $0xc28] sm:$0xff]
    %v483 = vld [vmem:[#allocation5 + $0xc30] sm:$0xff]
    %v484 = vld [vmem:[#allocation5 + $0xc38] sm:$0xff]
    %v485 = vld [vmem:[#allocation5 + $0xc40] sm:$0xff]
    %v486 = vld [vmem:[#allocation5 + $0xc48] sm:$0xff]
    %v487 = vld [vmem:[#allocation5 + $0xc50] sm:$0xff]
    %v488 = vld [vmem:[#allocation5 + $0xc58] sm:$0xff]
    %v489 = vld [vmem:[#allocation5 + $0xc60] sm:$0xff]
    %v490 = vld [vmem:[#allocation5 + $0xc68] sm:$0xff]
    %v491 = vld [vmem:[#allocation5 + $0xc70] sm:$0xff]
    %v492 = vld [vmem:[#allocation5 + $0xc78] sm:$0xff]
    %v493 = vld [vmem:[#allocation5 + $0xc80] sm:$0xff]
    %v494 = vld [vmem:[#allocation5 + $0xc88] sm:$0xff]
    %v495 = vld [vmem:[#allocation5 + $0xc90] sm:$0xff]
    %v496 = vld [vmem:[#allocation5 + $0xc98] sm:$0xff]
    %v497 = vld [vmem:[#allocation5 + $0xca0] sm:$0xff]
    %v498 = vld [vmem:[#allocation5 + $0xca8] sm:$0xff]
    %v499 = vld [vmem:[#allocation5 + $0xcb0] sm:$0xff]
    %v500 = vld [vmem:[#allocation5 + $0xcb8] sm:$0xff]
    %v501 = vld [vmem:[#allocation5 + $0xcc0] sm:$0xff]
    %v502 = vld [vmem:[#allocation5 + $0xcc8] sm:$0xff]
    %v503 = vld [vmem:[#allocation5 + $0xcd0] sm:$0xff]
    %v504 = vld [vmem:[#allocation5 + $0xcd8] sm:$0xff]
    %v505 = vld [vmem:[#allocation5 + $0xce0] sm:$0xff]
    %v506 = vld [vmem:[#allocation5 + $0xce8] sm:$0xff]
    %v507 = vld [vmem:[#allocation5 + $0xcf0] sm:$0xff]
    %v508 = vld [vmem:[#allocation5 + $0xcf8] sm:$0xff]
    %v509 = vld [vmem:[#allocation5 + $0xd00] sm:$0xff]
    %v510 = vld [vmem:[#allocation5 + $0xd08] sm:$0xff]
    %v511 = vld [vmem:[#allocation5 + $0xd10] sm:$0xff]
    %v512 = vld [vmem:[#allocation5 + $0xd18] sm:$0xff]
    %v513 = vld [vmem:[#allocation5 + $0xd20] sm:$0xff]
    %v514 = vld [vmem:[#allocation5 + $0xd28] sm:$0xff]
    %v515 = vld [vmem:[#allocation5 + $0xd30] sm:$0xff]
    %v516 = vld [vmem:[#allocation5 + $0xd38] sm:$0xff]
    %v517 = vld [vmem:[#allocation5 + $0xd40] sm:$0xff]
    %v518 = vld [vmem:[#allocation5 + $0xd48] sm:$0xff]
    %v519 = vld [vmem:[#allocation5 + $0xd50] sm:$0xff]
    %v520 = vld [vmem:[#allocation5 + $0xd58] sm:$0xff]
    %v521 = vld [vmem:[#allocation5 + $0xd60] sm:$0xff]
    %v522 = vld [vmem:[#allocation5 + $0xd68] sm:$0xff]
    %v523 = vld [vmem:[#allocation5 + $0xd70] sm:$0xff]
    %v524 = vld [vmem:[#allocation5 + $0xd78] sm:$0xff]
    %v525 = vld [vmem:[#allocation5 + $0xd80] sm:$0xff]
    %v526 = vld [vmem:[#allocation5 + $0xd88] sm:$0xff]
    %v527 = vld [vmem:[#allocation5 + $0xd90] sm:$0xff]
    %v528 = vld [vmem:[#allocation5 + $0xd98] sm:$0xff]
    %v529 = vld [vmem:[#allocation5 + $0xda0] sm:$0xff]
    %v530 = vld [vmem:[#allocation5 + $0xda8] sm:$0xff]
    %v531 = vld [vmem:[#allocation5 + $0xdb0] sm:$0xff]
    %v532 = vld [vmem:[#allocation5 + $0xdb8] sm:$0xff]
    %v533 = vld [vmem:[#allocation5 + $0xdc0] sm:$0xff]
    %v534 = vld [vmem:[#allocation5 + $0xdc8] sm:$0xff]
    %v535 = vld [vmem:[#allocation5 + $0xdd0] sm:$0xff]
    %v536 = vld [vmem:[#allocation5 + $0xdd8] sm:$0xff]
    %v537 = vld [vmem:[#allocation5 + $0xde0] sm:$0xff]
    %v538 = vld [vmem:[#allocation5 + $0xde8] sm:$0xff]
    %v539 = vld [vmem:[#allocation5 + $0xdf0] sm:$0xff]
    %v540 = vld [vmem:[#allocation5 + $0xdf8] sm:$0xff]
    %v541 = vld [vmem:[#allocation5 + $0xe00] sm:$0xff]
    %v542 = vld [vmem:[#allocation5 + $0xe08] sm:$0xff]
    %v543 = vld [vmem:[#allocation5 + $0xe10] sm:$0xff]
    %v544 = vld [vmem:[#allocation5 + $0xe18] sm:$0xff]
    %v545 = vld [vmem:[#allocation5 + $0xe20] sm:$0xff]
    %v546 = vld [vmem:[#allocation5 + $0xe28] sm:$0xff]
    %v547 = vld [vmem:[#allocation5 + $0xe30] sm:$0xff]
    %v548 = vld [vmem:[#allocation5 + $0xe38] sm:$0xff]
    %v549 = vld [vmem:[#allocation5 + $0xe40] sm:$0xff]
    %v550 = vld [vmem:[#allocation5 + $0xe48] sm:$0xff]
    %v551 = vld [vmem:[#allocation5 + $0xe50] sm:$0xff]
    %v552 = vld [vmem:[#allocation5 + $0xe58] sm:$0xff]
    %v553 = vld [vmem:[#allocation5 + $0xe60] sm:$0xff]
    %v554 = vld [vmem:[#allocation5 + $0xe68] sm:$0xff]
    %v555 = vld [vmem:[#allocation5 + $0xe70] sm:$0xff]
    %v556 = vld [vmem:[#allocation5 + $0xe78] sm:$0xff]
    %v557 = vld [vmem:[#allocation5 + $0xe80] sm:$0xff]
    %v558 = vld [vmem:[#allocation5 + $0xe88] sm:$0xff]
    %v559 = vld [vmem:[#allocation5 + $0xe90] sm:$0xff]
    %v560 = vld [vmem:[#allocation5 + $0xe98] sm:$0xff]
    %v561 = vld [vmem:[#allocation5 + $0xea0] sm:$0xff]
    %v562 = vld [vmem:[#allocation5 + $0xea8] sm:$0xff]
    %v563 = vld [vmem:[#allocation5 + $0xeb0] sm:$0xff]
    %v564 = vld [vmem:[#allocation5 + $0xeb8] sm:$0xff]
    %v565 = vld [vmem:[#allocation5 + $0xec0] sm:$0xff]
    %v566 = vld [vmem:[#allocation5 + $0xec8] sm:$0xff]
    %v567 = vld [vmem:[#allocation5 + $0xed0] sm:$0xff]
    %v568 = vld [vmem:[#allocation5 + $0xed8] sm:$0xff]
    %v569 = vld [vmem:[#allocation5 + $0xee0] sm:$0xff]
    %v570 = vld [vmem:[#allocation5 + $0xee8] sm:$0xff]
    %v571 = vld [vmem:[#allocation5 + $0xef0] sm:$0xff]
    %v572 = vld [vmem:[#allocation5 + $0xef8] sm:$0xff]
    %v573 = vld [vmem:[#allocation5 + $0xf00] sm:$0xff]
    %v574 = vld [vmem:[#allocation5 + $0xf08] sm:$0xff]
    %v575 = vld [vmem:[#allocation5 + $0xf10] sm:$0xff]
    %v576 = vld [vmem:[#allocation5 + $0xf18] sm:$0xff]
    %v577 = vld [vmem:[#allocation5 + $0xf20] sm:$0xff]
    %v578 = vld [vmem:[#allocation5 + $0xf28] sm:$0xff]
    %v579 = vld [vmem:[#allocation5 + $0xf30] sm:$0xff]
    %v580 = vld [vmem:[#allocation5 + $0xf38] sm:$0xff]
    %v581 = vld [vmem:[#allocation5 + $0xf40] sm:$0xff]
    %v582 = vld [vmem:[#allocation5 + $0xf48] sm:$0xff]
    %v583 = vld [vmem:[#allocation5 + $0xf50] sm:$0xff]
    %v584 = vld [vmem:[#allocation5 + $0xf58] sm:$0xff]
    %v585 = vld [vmem:[#allocation5 + $0xf60] sm:$0xff]
    %v586 = vld [vmem:[#allocation5 + $0xf68] sm:$0xff]
    %v587 = vld [vmem:[#allocation5 + $0xf70] sm:$0xff]
    %v588 = vld [vmem:[#allocation5 + $0xf78] sm:$0xff]
    %v589 = vld [vmem:[#allocation5 + $0xf80] sm:$0xff]
    %v590 = vld [vmem:[#allocation5 + $0xf88] sm:$0xff]
    %v591 = vld [vmem:[#allocation5 + $0xf90] sm:$0xff]
    %v592 = vld [vmem:[#allocation5 + $0xf98] sm:$0xff]
    %v593 = vld [vmem:[#allocation5 + $0xfa0] sm:$0xff]
    %v594 = vld [vmem:[#allocation5 + $0xfa8] sm:$0xff]
    %v595 = vld [vmem:[#allocation5 + $0xfb0] sm:$0xff]
    %v596 = vld [vmem:[#allocation5 + $0xfb8] sm:$0xff]
    %v597 = vld [vmem:[#allocation5 + $0xfc0] sm:$0xff]
    %v598 = vld [vmem:[#allocation5 + $0xfc8] sm:$0xff]
    %v599 = vld [vmem:[#allocation5 + $0xfd0] sm:$0xff]
    %v600 = vld [vmem:[#allocation5 + $0xfd8] sm:$0xff]
    %v601 = vld [vmem:[#allocation5 + $0xfe0] sm:$0xff]
    %v602 = vld [vmem:[#allocation5 + $0xfe8] sm:$0xff]
    %v603 = vld [vmem:[#allocation5 + $0xff0] sm:$0xff]
    %v604 = vld [vmem:[#allocation5 + $0xff8] sm:$0xff]
    %v605 = vld [vmem:[#allocation5 + $0x1000] sm:$0xff]
    %v606 = vld [vmem:[#allocation5 + $0x1008] sm:$0xff]
    %v607 = vld [vmem:[#allocation5 + $0x1010] sm:$0xff]
    %v608 = vld [vmem:[#allocation5 + $0x1018] sm:$0xff]
    %v609 = vld [vmem:[#allocation5 + $0x1020] sm:$0xff]
    %v610 = vld [vmem:[#allocation5 + $0x1028] sm:$0xff]
    %v611 = vld [vmem:[#allocation5 + $0x1030] sm:$0xff]
    %v612 = vld [vmem:[#allocation5 + $0x1038] sm:$0xff]
    %v613 = vld [vmem:[#allocation5 + $0x1040] sm:$0xff]
    %v614 = vld [vmem:[#allocation5 + $0x1048] sm:$0xff]
    %v615 = vld [vmem:[#allocation5 + $0x1050] sm:$0xff]
    %v616 = vld [vmem:[#allocation5 + $0x1058] sm:$0xff]
    %v617 = vld [vmem:[#allocation5 + $0x1060] sm:$0xff]
    %v618 = vld [vmem:[#allocation5 + $0x1068] sm:$0xff]
    %v619 = vld [vmem:[#allocation5 + $0x1070] sm:$0xff]
    %v620 = vld [vmem:[#allocation5 + $0x1078] sm:$0xff]
    %v621 = vld [vmem:[#allocation5 + $0x1080] sm:$0xff]
    %v622 = vld [vmem:[#allocation5 + $0x1088] sm:$0xff]
    %v623 = vld [vmem:[#allocation5 + $0x1090] sm:$0xff]
    %v624 = vld [vmem:[#allocation5 + $0x1098] sm:$0xff]
    %v625 = vld [vmem:[#allocation5 + $0x10a0] sm:$0xff]
    %v626 = vld [vmem:[#allocation5 + $0x10a8] sm:$0xff]
    %v627 = vld [vmem:[#allocation5 + $0x10b0] sm:$0xff]
    %v628 = vld [vmem:[#allocation5 + $0x10b8] sm:$0xff]
    %v629 = vld [vmem:[#allocation5 + $0x10c0] sm:$0xff]
    %v630 = vld [vmem:[#allocation5 + $0x10c8] sm:$0xff]
    %v631 = vld [vmem:[#allocation5 + $0x10d0] sm:$0xff]
    %v632 = vld [vmem:[#allocation5 + $0x10d8] sm:$0xff]
    %v633 = vld [vmem:[#allocation5 + $0x10e0] sm:$0xff]
    %v634 = vld [vmem:[#allocation5 + $0x10e8] sm:$0xff]
    %v635 = vld [vmem:[#allocation5 + $0x10f0] sm:$0xff]
    %v636 = vld [vmem:[#allocation5 + $0x10f8] sm:$0xff]
    %v637 = vld [vmem:[#allocation5 + $0x1100] sm:$0xff]
    %v638 = vld [vmem:[#allocation5 + $0x1108] sm:$0xff]
    %v639 = vld [vmem:[#allocation5 + $0x1110] sm:$0xff]
    %v640 = vld [vmem:[#allocation5 + $0x1118] sm:$0xff]
    %v641 = vld [vmem:[#allocation5 + $0x1120] sm:$0xff]
    %v642 = vld [vmem:[#allocation5 + $0x1128] sm:$0xff]
    %v643 = vld [vmem:[#allocation5 + $0x1130] sm:$0xff]
    %v644 = vld [vmem:[#allocation5 + $0x1138] sm:$0xff]
    %v645 = vld [vmem:[#allocation5 + $0x1140] sm:$0xff]
    %v646 = vld [vmem:[#allocation5 + $0x1148] sm:$0xff]
    %v647 = vld [vmem:[#allocation5 + $0x1150] sm:$0xff]
    %v648 = vld [vmem:[#allocation5 + $0x1158] sm:$0xff]
    %v649 = vld [vmem:[#allocation5 + $0x1160] sm:$0xff]
    %v650 = vld [vmem:[#allocation5 + $0x1168] sm:$0xff]
    %v651 = vld [vmem:[#allocation5 + $0x1170] sm:$0xff]
    %v652 = vld [vmem:[#allocation5 + $0x1178] sm:$0xff]
    %v653 = vld [vmem:[#allocation5 + $0x1180] sm:$0xff]
    %v654 = vld [vmem:[#allocation5 + $0x1188] sm:$0xff]
    %v655 = vld [vmem:[#allocation5 + $0x1190] sm:$0xff]
    %v656 = vld [vmem:[#allocation5 + $0x1198] sm:$0xff]
    %v657 = vld [vmem:[#allocation5 + $0x11a0] sm:$0xff]
    %v658 = vld [vmem:[#allocation5 + $0x11a8] sm:$0xff]
    %v659 = vld [vmem:[#allocation5 + $0x11b0] sm:$0xff]
    %v660 = vld [vmem:[#allocation5 + $0x11b8] sm:$0xff]
    %v661 = vld [vmem:[#allocation5 + $0x11c0] sm:$0xff]
    %v662 = vld [vmem:[#allocation5 + $0x11c8] sm:$0xff]
    %v663 = vld [vmem:[#allocation5 + $0x11d0] sm:$0xff]
    %v664 = vld [vmem:[#allocation5 + $0x11d8] sm:$0xff]
    %v665 = vld [vmem:[#allocation5 + $0x11e0] sm:$0xff]
    %v666 = vld [vmem:[#allocation5 + $0x11e8] sm:$0xff]
    %v667 = vld [vmem:[#allocation5 + $0x11f0] sm:$0xff]
    %v668 = vld [vmem:[#allocation5 + $0x11f8] sm:$0xff]
    %v669 = vld [vmem:[#allocation5 + $0x1200] sm:$0xff]
    %v670 = vld [vmem:[#allocation5 + $0x1208] sm:$0xff]
    %v671 = vld [vmem:[#allocation5 + $0x1210] sm:$0xff]
    %v672 = vld [vmem:[#allocation5 + $0x1218] sm:$0xff]
    %v673 = vld [vmem:[#allocation5 + $0x1220] sm:$0xff]
    %v674 = vld [vmem:[#allocation5 + $0x1228] sm:$0xff]
    %v675 = vld [vmem:[#allocation5 + $0x1230] sm:$0xff]
    %v676 = vld [vmem:[#allocation5 + $0x1238] sm:$0xff]
    %v677 = vld [vmem:[#allocation5 + $0x1240] sm:$0xff]
    %v678 = vld [vmem:[#allocation5 + $0x1248] sm:$0xff]
    %v679 = vld [vmem:[#allocation5 + $0x1250] sm:$0xff]
    %v680 = vld [vmem:[#allocation5 + $0x1258] sm:$0xff]
    %v681 = vld [vmem:[#allocation5 + $0x1260] sm:$0xff]
    %v682 = vld [vmem:[#allocation5 + $0x1268] sm:$0xff]
    %v683 = vld [vmem:[#allocation5 + $0x1270] sm:$0xff]
    %v684 = vld [vmem:[#allocation5 + $0x1278] sm:$0xff]
    %v685 = vld [vmem:[#allocation5 + $0x1280] sm:$0xff]
    %v686 = vld [vmem:[#allocation5 + $0x1288] sm:$0xff]
    %v687 = vld [vmem:[#allocation5 + $0x1290] sm:$0xff]
    %v688 = vld [vmem:[#allocation5 + $0x1298] sm:$0xff]
    %v689 = vld [vmem:[#allocation5 + $0x12a0] sm:$0xff]
    %v690 = vld [vmem:[#allocation5 + $0x12a8] sm:$0xff]
    %v691 = vld [vmem:[#allocation5 + $0x12b0] sm:$0xff]
    %v692 = vld [vmem:[#allocation5 + $0x12b8] sm:$0xff]
    %v693 = vld [vmem:[#allocation5 + $0x12c0] sm:$0xff]
    %v694 = vld [vmem:[#allocation5 + $0x12c8] sm:$0xff]
    %v695 = vld [vmem:[#allocation5 + $0x12d0] sm:$0xff]
    %v696 = vld [vmem:[#allocation5 + $0x12d8] sm:$0xff]
    %v697 = vld [vmem:[#allocation5 + $0x12e0] sm:$0xff]
    %v698 = vld [vmem:[#allocation5 + $0x12e8] sm:$0xff]
    %v699 = vld [vmem:[#allocation5 + $0x12f0] sm:$0xff]
    %v700 = vld [vmem:[#allocation5 + $0x12f8] sm:$0xff]
    %v701 = vld [vmem:[#allocation5 + $0x1300] sm:$0xff]
    %v702 = vld [vmem:[#allocation5 + $0x1308] sm:$0xff]
    %v703 = vld [vmem:[#allocation5 + $0x1310] sm:$0xff]
    %v704 = vld [vmem:[#allocation5 + $0x1318] sm:$0xff]
    %v705 = vld [vmem:[#allocation5 + $0x1320] sm:$0xff]
    %v706 = vld [vmem:[#allocation5 + $0x1328] sm:$0xff]
    %v707 = vld [vmem:[#allocation5 + $0x1330] sm:$0xff]
    %v708 = vld [vmem:[#allocation5 + $0x1338] sm:$0xff]
    %v709 = vld [vmem:[#allocation5 + $0x1340] sm:$0xff]
    %v710 = vld [vmem:[#allocation5 + $0x1348] sm:$0xff]
    %v711 = vld [vmem:[#allocation5 + $0x1350] sm:$0xff]
    %v712 = vld [vmem:[#allocation5 + $0x1358] sm:$0xff]
    %v713 = vld [vmem:[#allocation5 + $0x1360] sm:$0xff]
    %v714 = vld [vmem:[#allocation5 + $0x1368] sm:$0xff]
    %v715 = vld [vmem:[#allocation5 + $0x1370] sm:$0xff]
    %v716 = vld [vmem:[#allocation5 + $0x1378] sm:$0xff]
    %v717 = vld [vmem:[#allocation5 + $0x1380] sm:$0xff]
    %v718 = vld [vmem:[#allocation5 + $0x1388] sm:$0xff]
    %v719 = vld [vmem:[#allocation5 + $0x1390] sm:$0xff]
    %v720 = vld [vmem:[#allocation5 + $0x1398] sm:$0xff]
    %v721 = vld [vmem:[#allocation5 + $0x13a0] sm:$0xff]
    %v722 = vld [vmem:[#allocation5 + $0x13a8] sm:$0xff]
    %v723 = vld [vmem:[#allocation5 + $0x13b0] sm:$0xff]
    %v724 = vld [vmem:[#allocation5 + $0x13b8] sm:$0xff]
    %v725 = vld [vmem:[#allocation5 + $0x13c0] sm:$0xff]
    %v726 = vld [vmem:[#allocation5 + $0x13c8] sm:$0xff]
    %v727 = vld [vmem:[#allocation5 + $0x13d0] sm:$0xff]
    %v728 = vld [vmem:[#allocation5 + $0x13d8] sm:$0xff]
    %v729 = vld [vmem:[#allocation5 + $0x13e0] sm:$0xff]
    %v730 = vld [vmem:[#allocation5 + $0x13e8] sm:$0xff]
    %v731 = vld [vmem:[#allocation5 + $0x13f0] sm:$0xff]
    %v732 = vld [vmem:[#allocation5 + $0x13f8] sm:$0xff]
    %v733 = vld [vmem:[#allocation5 + $0x1400] sm:$0xff]
    %v734 = vld [vmem:[#allocation5 + $0x1408] sm:$0xff]
    %v735 = vld [vmem:[#allocation5 + $0x1410] sm:$0xff]
    %v736 = vld [vmem:[#allocation5 + $0x1418] sm:$0xff]
    %v737 = vld [vmem:[#allocation5 + $0x1420] sm:$0xff]
    %v738 = vld [vmem:[#allocation5 + $0x1428] sm:$0xff]
    %v739 = vld [vmem:[#allocation5 + $0x1430] sm:$0xff]
    %v740 = vld [vmem:[#allocation5 + $0x1438] sm:$0xff]
    %v741 = vld [vmem:[#allocation5 + $0x1440] sm:$0xff]
    %v742 = vld [vmem:[#allocation5 + $0x1448] sm:$0xff]
    %v743 = vld [vmem:[#allocation5 + $0x1450] sm:$0xff]
    %v744 = vld [vmem:[#allocation5 + $0x1458] sm:$0xff]
    %v745 = vld [vmem:[#allocation5 + $0x1460] sm:$0xff]
    %v746 = vld [vmem:[#allocation5 + $0x1468] sm:$0xff]
    %v747 = vld [vmem:[#allocation5 + $0x1470] sm:$0xff]
    %v748 = vld [vmem:[#allocation5 + $0x1478] sm:$0xff]
    %v749 = vld [vmem:[#allocation5 + $0x1480] sm:$0xff]
    %v750 = vld [vmem:[#allocation5 + $0x1488] sm:$0xff]
    %v751 = vld [vmem:[#allocation5 + $0x1490] sm:$0xff]
    %v752 = vld [vmem:[#allocation5 + $0x1498] sm:$0xff]
    %v753 = vld [vmem:[#allocation5 + $0x14a0] sm:$0xff]
    %v754 = vld [vmem:[#allocation5 + $0x14a8] sm:$0xff]
    %v755 = vld [vmem:[#allocation5 + $0x14b0] sm:$0xff]
    %v756 = vld [vmem:[#allocation5 + $0x14b8] sm:$0xff]
    %v757 = vld [vmem:[#allocation5 + $0x14c0] sm:$0xff]
    %v758 = vld [vmem:[#allocation5 + $0x14c8] sm:$0xff]
    %v759 = vld [vmem:[#allocation5 + $0x14d0] sm:$0xff]
    %v760 = vld [vmem:[#allocation5 + $0x14d8] sm:$0xff]
    %v761 = vld [vmem:[#allocation5 + $0x14e0] sm:$0xff]
    %v762 = vld [vmem:[#allocation5 + $0x14e8] sm:$0xff]
    %v763 = vld [vmem:[#allocation5 + $0x14f0] sm:$0xff]
    %v764 = vld [vmem:[#allocation5 + $0x14f8] sm:$0xff]
    %v765 = vld [vmem:[#allocation5 + $0x1500] sm:$0xff]
    %v766 = vld [vmem:[#allocation5 + $0x1508] sm:$0xff]
    %v767 = vld [vmem:[#allocation5 + $0x1510] sm:$0xff]
    %v768 = vld [vmem:[#allocation5 + $0x1518] sm:$0xff]
    %v769 = vld [vmem:[#allocation5 + $0x1520] sm:$0xff]
    %v770 = vld [vmem:[#allocation5 + $0x1528] sm:$0xff]
    %v771 = vld [vmem:[#allocation5 + $0x1530] sm:$0xff]
    %v772 = vld [vmem:[#allocation5 + $0x1538] sm:$0xff]
    %v773 = vld [vmem:[#allocation5 + $0x1540] sm:$0xff]
    %v774 = vld [vmem:[#allocation5 + $0x1548] sm:$0xff]
    %v775 = vld [vmem:[#allocation5 + $0x1550] sm:$0xff]
    %v776 = vld [vmem:[#allocation5 + $0x1558] sm:$0xff]
    %v777 = vld [vmem:[#allocation5 + $0x1560] sm:$0xff]
    %v778 = vld [vmem:[#allocation5 + $0x1568] sm:$0xff]
    %v779 = vld [vmem:[#allocation5 + $0x1570] sm:$0xff]
    %v780 = vld [vmem:[#allocation5 + $0x1578] sm:$0xff]
    %v781 = vld [vmem:[#allocation5 + $0x1580] sm:$0xff]
    %v782 = vld [vmem:[#allocation5 + $0x1588] sm:$0xff]
    %v783 = vld [vmem:[#allocation5 + $0x1590] sm:$0xff]
    %v784 = vld [vmem:[#allocation5 + $0x1598] sm:$0xff]
    %v785 = vld [vmem:[#allocation5 + $0x15a0] sm:$0xff]
    %v786 = vld [vmem:[#allocation5 + $0x15a8] sm:$0xff]
    %v787 = vld [vmem:[#allocation5 + $0x15b0] sm:$0xff]
    %v788 = vld [vmem:[#allocation5 + $0x15b8] sm:$0xff]
    %v789 = vld [vmem:[#allocation5 + $0x15c0] sm:$0xff]
    %v790 = vld [vmem:[#allocation5 + $0x15c8] sm:$0xff]
    %v791 = vld [vmem:[#allocation5 + $0x15d0] sm:$0xff]
    %v792 = vld [vmem:[#allocation5 + $0x15d8] sm:$0xff]
    %v793 = vld [vmem:[#allocation5 + $0x15e0] sm:$0xff]
    %v794 = vld [vmem:[#allocation5 + $0x15e8] sm:$0xff]
    %v795 = vld [vmem:[#allocation5 + $0x15f0] sm:$0xff]
    %v796 = vld [vmem:[#allocation5 + $0x15f8] sm:$0xff]
    %v797 = vld [vmem:[#allocation5 + $0x1600] sm:$0xff]
    %v798 = vld [vmem:[#allocation5 + $0x1608] sm:$0xff]
    %v799 = vld [vmem:[#allocation5 + $0x1610] sm:$0xff]
    %v800 = vld [vmem:[#allocation5 + $0x1618] sm:$0xff]
    %v801 = vld [vmem:[#allocation5 + $0x1620] sm:$0xff]
    %v802 = vld [vmem:[#allocation5 + $0x1628] sm:$0xff]
    %v803 = vld [vmem:[#allocation5 + $0x1630] sm:$0xff]
    %v804 = vld [vmem:[#allocation5 + $0x1638] sm:$0xff]
    %v805 = vld [vmem:[#allocation5 + $0x1640] sm:$0xff]
    %v806 = vld [vmem:[#allocation5 + $0x1648] sm:$0xff]
    %v807 = vld [vmem:[#allocation5 + $0x1650] sm:$0xff]
    %v808 = vld [vmem:[#allocation5 + $0x1658] sm:$0xff]
    %v809 = vld [vmem:[#allocation5 + $0x1660] sm:$0xff]
    %v810 = vld [vmem:[#allocation5 + $0x1668] sm:$0xff]
    %v811 = vld [vmem:[#allocation5 + $0x1670] sm:$0xff]
    %v812 = vld [vmem:[#allocation5 + $0x1678] sm:$0xff]
    %v813 = vld [vmem:[#allocation5 + $0x1680] sm:$0xff]
    %v814 = vld [vmem:[#allocation5 + $0x1688] sm:$0xff]
    %v815 = vld [vmem:[#allocation5 + $0x1690] sm:$0xff]
    %v816 = vld [vmem:[#allocation5 + $0x1698] sm:$0xff]
    %v817 = vld [vmem:[#allocation5 + $0x16a0] sm:$0xff]
    %v818 = vld [vmem:[#allocation5 + $0x16a8] sm:$0xff]
    %v819 = vld [vmem:[#allocation5 + $0x16b0] sm:$0xff]
    %v820 = vld [vmem:[#allocation5 + $0x16b8] sm:$0xff]
    %v821 = vld [vmem:[#allocation5 + $0x16c0] sm:$0xff]
    %v822 = vld [vmem:[#allocation5 + $0x16c8] sm:$0xff]
    %v823 = vld [vmem:[#allocation5 + $0x16d0] sm:$0xff]
    %v824 = vld [vmem:[#allocation5 + $0x16d8] sm:$0xff]
    %v825 = vld [vmem:[#allocation5 + $0x16e0] sm:$0xff]
    %v826 = vld [vmem:[#allocation5 + $0x16e8] sm:$0xff]
    %v827 = vld [vmem:[#allocation5 + $0x16f0] sm:$0xff]
    %v828 = vld [vmem:[#allocation5 + $0x16f8] sm:$0xff]
    %v829 = vld [vmem:[#allocation5 + $0x1700] sm:$0xff]
    %v830 = vld [vmem:[#allocation5 + $0x1708] sm:$0xff]
    %v831 = vld [vmem:[#allocation5 + $0x1710] sm:$0xff]
    %v832 = vld [vmem:[#allocation5 + $0x1718] sm:$0xff]
    %v833 = vld [vmem:[#allocation5 + $0x1720] sm:$0xff]
    %v834 = vld [vmem:[#allocation5 + $0x1728] sm:$0xff]
    %v835 = vld [vmem:[#allocation5 + $0x1730] sm:$0xff]
    %v836 = vld [vmem:[#allocation5 + $0x1738] sm:$0xff]
    %v837 = vld [vmem:[#allocation5 + $0x1740] sm:$0xff]
    %v838 = vld [vmem:[#allocation5 + $0x1748] sm:$0xff]
    %v839 = vld [vmem:[#allocation5 + $0x1750] sm:$0xff]
    %v840 = vld [vmem:[#allocation5 + $0x1758] sm:$0xff]
    %v841 = vld [vmem:[#allocation5 + $0x1760] sm:$0xff]
    %v842 = vld [vmem:[#allocation5 + $0x1768] sm:$0xff]
    %v843 = vld [vmem:[#allocation5 + $0x1770] sm:$0xff]
    %v844 = vld [vmem:[#allocation5 + $0x1778] sm:$0xff]
    %v845 = vld [vmem:[#allocation5 + $0x1780] sm:$0xff]
    %v846 = vld [vmem:[#allocation5 + $0x1788] sm:$0xff]
    %v847 = vld [vmem:[#allocation5 + $0x1790] sm:$0xff]
    %v848 = vld [vmem:[#allocation5 + $0x1798] sm:$0xff]
    %v849 = vld [vmem:[#allocation5 + $0x17a0] sm:$0xff]
    %v850 = vld [vmem:[#allocation5 + $0x17a8] sm:$0xff]
    %v851 = vld [vmem:[#allocation5 + $0x17b0] sm:$0xff]
    %v852 = vld [vmem:[#allocation5 + $0x17b8] sm:$0xff]
    %v853 = vld [vmem:[#allocation5 + $0x17c0] sm:$0xff]
    %v854 = vld [vmem:[#allocation5 + $0x17c8] sm:$0xff]
    %v855 = vld [vmem:[#allocation5 + $0x17d0] sm:$0xff]
    %v856 = vld [vmem:[#allocation5 + $0x17d8] sm:$0xff]
    %v857 = vld [vmem:[#allocation5 + $0x17e0] sm:$0xff]
    %v858 = vld [vmem:[#allocation5 + $0x17e8] sm:$0xff]
    %v859 = vld [vmem:[#allocation5 + $0x17f0] sm:$0xff]
    %v860 = vld [vmem:[#allocation5 + $0x17f8] sm:$0xff]
    %v861 = vld [vmem:[#allocation5 + $0x1800] sm:$0xff]
    %v862 = vld [vmem:[#allocation5 + $0x1808] sm:$0xff]
    %v863 = vld [vmem:[#allocation5 + $0x1810] sm:$0xff]
    %v864 = vld [vmem:[#allocation5 + $0x1818] sm:$0xff]
    %v865 = vld [vmem:[#allocation5 + $0x1820] sm:$0xff]
    %v866 = vld [vmem:[#allocation5 + $0x1828] sm:$0xff]
    %v867 = vld [vmem:[#allocation5 + $0x1830] sm:$0xff]
    %v868 = vld [vmem:[#allocation5 + $0x1838] sm:$0xff]
    %v869 = vld [vmem:[#allocation5 + $0x1840] sm:$0xff]
    %v870 = vld [vmem:[#allocation5 + $0x1848] sm:$0xff]
    %v871 = vld [vmem:[#allocation5 + $0x1850] sm:$0xff]
    %v872 = vld [vmem:[#allocation5 + $0x1858] sm:$0xff]
    %v873 = vld [vmem:[#allocation5 + $0x1860] sm:$0xff]
    %v874 = vld [vmem:[#allocation5 + $0x1868] sm:$0xff]
    %v875 = vld [vmem:[#allocation5 + $0x1870] sm:$0xff]
    %v876 = vld [vmem:[#allocation5 + $0x1878] sm:$0xff]
    %v877 = vld [vmem:[#allocation5 + $0x1880] sm:$0xff]
    %v878 = vld [vmem:[#allocation5 + $0x1888] sm:$0xff]
    %v879 = vld [vmem:[#allocation5 + $0x1890] sm:$0xff]
    %v880 = vld [vmem:[#allocation5 + $0x1898] sm:$0xff]
    %v881 = vld [vmem:[#allocation5 + $0x18a0] sm:$0xff]
    %v882 = vld [vmem:[#allocation5 + $0x18a8] sm:$0xff]
    %v883 = vld [vmem:[#allocation5 + $0x18b0] sm:$0xff]
    %v884 = vld [vmem:[#allocation5 + $0x18b8] sm:$0xff]
    %v885 = vld [vmem:[#allocation5 + $0x18c0] sm:$0xff]
    %v886 = vld [vmem:[#allocation5 + $0x18c8] sm:$0xff]
    %v887 = vld [vmem:[#allocation5 + $0x18d0] sm:$0xff]
    %v888 = vld [vmem:[#allocation5 + $0x18d8] sm:$0xff]
    %v889 = vld [vmem:[#allocation5 + $0x18e0] sm:$0xff]
    %v890 = vld [vmem:[#allocation5 + $0x18e8] sm:$0xff]
    %v891 = vld [vmem:[#allocation5 + $0x18f0] sm:$0xff]
    %v892 = vld [vmem:[#allocation5 + $0x18f8] sm:$0xff]
    %v893 = vld [vmem:[#allocation5 + $0x1900] sm:$0xff]
    %v894 = vld [vmem:[#allocation5 + $0x1908] sm:$0xff]
    %v895 = vld [vmem:[#allocation5 + $0x1910] sm:$0xff]
    %v896 = vld [vmem:[#allocation5 + $0x1918] sm:$0xff]
    %v897 = vld [vmem:[#allocation5 + $0x1920] sm:$0xff]
    %v898 = vld [vmem:[#allocation5 + $0x1928] sm:$0xff]
    %v899 = vld [vmem:[#allocation5 + $0x1930] sm:$0xff]
    %v900 = vld [vmem:[#allocation5 + $0x1938] sm:$0xff]
    %v901 = vld [vmem:[#allocation5 + $0x1940] sm:$0xff]
    %v902 = vld [vmem:[#allocation5 + $0x1948] sm:$0xff]
    %v903 = vld [vmem:[#allocation5 + $0x1950] sm:$0xff]
    %v904 = vld [vmem:[#allocation5 + $0x1958] sm:$0xff]
    %v905 = vld [vmem:[#allocation5 + $0x1960] sm:$0xff]
    %v906 = vld [vmem:[#allocation5 + $0x1968] sm:$0xff]
    %v907 = vld [vmem:[#allocation5 + $0x1970] sm:$0xff]
    %v908 = vld [vmem:[#allocation5 + $0x1978] sm:$0xff]
    %v909 = vld [vmem:[#allocation5 + $0x1980] sm:$0xff]
    %v910 = vld [vmem:[#allocation5 + $0x1988] sm:$0xff]
    %v911 = vld [vmem:[#allocation5 + $0x1990] sm:$0xff]
    %v912 = vld [vmem:[#allocation5 + $0x1998] sm:$0xff]
    %v913 = vld [vmem:[#allocation5 + $0x19a0] sm:$0xff]
    %v914 = vld [vmem:[#allocation5 + $0x19a8] sm:$0xff]
    %v915 = vld [vmem:[#allocation5 + $0x19b0] sm:$0xff]
    %v916 = vld [vmem:[#allocation5 + $0x19b8] sm:$0xff]
    %v917 = vld [vmem:[#allocation5 + $0x19c0] sm:$0xff]
    %v918 = vld [vmem:[#allocation5 + $0x19c8] sm:$0xff]
    %v919 = vld [vmem:[#allocation5 + $0x19d0] sm:$0xff]
    %v920 = vld [vmem:[#allocation5 + $0x19d8] sm:$0xff]
    %v921 = vld [vmem:[#allocation5 + $0x19e0] sm:$0xff]
    %v922 = vld [vmem:[#allocation5 + $0x19e8] sm:$0xff]
    %v923 = vld [vmem:[#allocation5 + $0x19f0] sm:$0xff]
    %v924 = vld [vmem:[#allocation5 + $0x19f8] sm:$0xff]
    %v925 = vld [vmem:[#allocation5 + $0x1a00] sm:$0xff]
    %v926 = vld [vmem:[#allocation5 + $0x1a08] sm:$0xff]
    %v927 = vld [vmem:[#allocation5 + $0x1a10] sm:$0xff]
    %v928 = vld [vmem:[#allocation5 + $0x1a18] sm:$0xff]
    %v929 = vld [vmem:[#allocation5 + $0x1a20] sm:$0xff]
    %v930 = vld [vmem:[#allocation5 + $0x1a28] sm:$0xff]
    %v931 = vld [vmem:[#allocation5 + $0x1a30] sm:$0xff]
    %v932 = vld [vmem:[#allocation5 + $0x1a38] sm:$0xff]
    %v933 = vld [vmem:[#allocation5 + $0x1a40] sm:$0xff]
    %v934 = vld [vmem:[#allocation5 + $0x1a48] sm:$0xff]
    %v935 = vld [vmem:[#allocation5 + $0x1a50] sm:$0xff]
    %v936 = vld [vmem:[#allocation5 + $0x1a58] sm:$0xff]
    %v937 = vld [vmem:[#allocation5 + $0x1a60] sm:$0xff]
    %v938 = vld [vmem:[#allocation5 + $0x1a68] sm:$0xff]
    %v939 = vld [vmem:[#allocation5 + $0x1a70] sm:$0xff]
    %v940 = vld [vmem:[#allocation5 + $0x1a78] sm:$0xff]
    %v941 = vld [vmem:[#allocation5 + $0x1a80] sm:$0xff]
    %v942 = vld [vmem:[#allocation5 + $0x1a88] sm:$0xff]
    %v943 = vld [vmem:[#allocation5 + $0x1a90] sm:$0xff]
    %v944 = vld [vmem:[#allocation5 + $0x1a98] sm:$0xff]
    %v945 = vld [vmem:[#allocation5 + $0x1aa0] sm:$0xff]
    %v946 = vld [vmem:[#allocation5 + $0x1aa8] sm:$0xff]
    %v947 = vld [vmem:[#allocation5 + $0x1ab0] sm:$0xff]
    %v948 = vld [vmem:[#allocation5 + $0x1ab8] sm:$0xff]
    %v949 = vld [vmem:[#allocation5 + $0x1ac0] sm:$0xff]
    %v950 = vld [vmem:[#allocation5 + $0x1ac8] sm:$0xff]
    %v951 = vld [vmem:[#allocation5 + $0x1ad0] sm:$0xff]
    %v952 = vld [vmem:[#allocation5 + $0x1ad8] sm:$0xff]
    %v953 = vld [vmem:[#allocation5 + $0x1ae0] sm:$0xff]
    %v954 = vld [vmem:[#allocation5 + $0x1ae8] sm:$0xff]
    %v955 = vld [vmem:[#allocation5 + $0x1af0] sm:$0xff]
    %v956 = vld [vmem:[#allocation5 + $0x1af8] sm:$0xff]
    %v957 = vld [vmem:[#allocation5 + $0x1b00] sm:$0xff]
    %v958 = vld [vmem:[#allocation5 + $0x1b08] sm:$0xff]
    %v959 = vld [vmem:[#allocation5 + $0x1b10] sm:$0xff]
    %v960 = vld [vmem:[#allocation5 + $0x1b18] sm:$0xff]
    %v961 = vld [vmem:[#allocation5 + $0x1b20] sm:$0xff]
    %v962 = vld [vmem:[#allocation5 + $0x1b28] sm:$0xff]
    %v963 = vld [vmem:[#allocation5 + $0x1b30] sm:$0xff]
    %v964 = vld [vmem:[#allocation5 + $0x1b38] sm:$0xff]
    %v965 = vld [vmem:[#allocation5 + $0x1b40] sm:$0xff]
    %v966 = vld [vmem:[#allocation5 + $0x1b48] sm:$0xff]
    %v967 = vld [vmem:[#allocation5 + $0x1b50] sm:$0xff]
    %v968 = vld [vmem:[#allocation5 + $0x1b58] sm:$0xff]
    %v969 = vld [vmem:[#allocation5 + $0x1b60] sm:$0xff]
    %v970 = vld [vmem:[#allocation5 + $0x1b68] sm:$0xff]
    %v971 = vld [vmem:[#allocation5 + $0x1b70] sm:$0xff]
    %v972 = vld [vmem:[#allocation5 + $0x1b78] sm:$0xff]
    %v973 = vld [vmem:[#allocation5 + $0x1b80] sm:$0xff]
    %v974 = vld [vmem:[#allocation5 + $0x1b88] sm:$0xff]
    %v975 = vld [vmem:[#allocation5 + $0x1b90] sm:$0xff]
    %v976 = vld [vmem:[#allocation5 + $0x1b98] sm:$0xff]
    %v977 = vld [vmem:[#allocation5 + $0x1ba0] sm:$0xff]
    %v978 = vld [vmem:[#allocation5 + $0x1ba8] sm:$0xff]
    %v979 = vld [vmem:[#allocation5 + $0x1bb0] sm:$0xff]
    %v980 = vld [vmem:[#allocation5 + $0x1bb8] sm:$0xff]
    %v981 = vld [vmem:[#allocation5 + $0x1bc0] sm:$0xff]
    %v982 = vld [vmem:[#allocation5 + $0x1bc8] sm:$0xff]
    %v983 = vld [vmem:[#allocation5 + $0x1bd0] sm:$0xff]
    %v984 = vld [vmem:[#allocation5 + $0x1bd8] sm:$0xff]
    %v985 = vld [vmem:[#allocation5 + $0x1be0] sm:$0xff]
    %v986 = vld [vmem:[#allocation5 + $0x1be8] sm:$0xff]
    %v987 = vld [vmem:[#allocation5 + $0x1bf0] sm:$0xff]
    %v988 = vld [vmem:[#allocation5 + $0x1bf8] sm:$0xff]
    %v989 = vld [vmem:[#allocation5 + $0x1c00] sm:$0xff]
    %v990 = vld [vmem:[#allocation5 + $0x1c08] sm:$0xff]
    %v991 = vld [vmem:[#allocation5 + $0x1c10] sm:$0xff]
    %v992 = vld [vmem:[#allocation5 + $0x1c18] sm:$0xff]
    %v993 = vld [vmem:[#allocation5 + $0x1c20] sm:$0xff]
    %v994 = vld [vmem:[#allocation5 + $0x1c28] sm:$0xff]
    %v995 = vld [vmem:[#allocation5 + $0x1c30] sm:$0xff]
    %v996 = vld [vmem:[#allocation5 + $0x1c38] sm:$0xff]
    %v997 = vld [vmem:[#allocation5 + $0x1c40] sm:$0xff]
    %v998 = vld [vmem:[#allocation5 + $0x1c48] sm:$0xff]
    %v999 = vld [vmem:[#allocation5 + $0x1c50] sm:$0xff]
    %v1000 = vld [vmem:[#allocation5 + $0x1c58] sm:$0xff]
    %v1001 = vld [vmem:[#allocation5 + $0x1c60] sm:$0xff]
    %v1002 = vld [vmem:[#allocation5 + $0x1c68] sm:$0xff]
    %v1003 = vld [vmem:[#allocation5 + $0x1c70] sm:$0xff]
    %v1004 = vld [vmem:[#allocation5 + $0x1c78] sm:$0xff]
    %v1005 = vld [vmem:[#allocation5 + $0x1c80] sm:$0xff]
    %v1006 = vld [vmem:[#allocation5 + $0x1c88] sm:$0xff]
    %v1007 = vld [vmem:[#allocation5 + $0x1c90] sm:$0xff]
    %v1008 = vld [vmem:[#allocation5 + $0x1c98] sm:$0xff]
    %v1009 = vld [vmem:[#allocation5 + $0x1ca0] sm:$0xff]
    %v1010 = vld [vmem:[#allocation5 + $0x1ca8] sm:$0xff]
    %v1011 = vld [vmem:[#allocation5 + $0x1cb0] sm:$0xff]
    %v1012 = vld [vmem:[#allocation5 + $0x1cb8] sm:$0xff]
    %v1013 = vld [vmem:[#allocation5 + $0x1cc0] sm:$0xff]
    %v1014 = vld [vmem:[#allocation5 + $0x1cc8] sm:$0xff]
    %v1015 = vld [vmem:[#allocation5 + $0x1cd0] sm:$0xff]
    %v1016 = vld [vmem:[#allocation5 + $0x1cd8] sm:$0xff]
    %v1017 = vld [vmem:[#allocation5 + $0x1ce0] sm:$0xff]
    %v1018 = vld [vmem:[#allocation5 + $0x1ce8] sm:$0xff]
    %v1019 = vld [vmem:[#allocation5 + $0x1cf0] sm:$0xff]
    %v1020 = vld [vmem:[#allocation5 + $0x1cf8] sm:$0xff]
    %v1021 = vld [vmem:[#allocation5 + $0x1d00] sm:$0xff]
    %v1022 = vld [vmem:[#allocation5 + $0x1d08] sm:$0xff]
    %v1023 = vld [vmem:[#allocation5 + $0x1d10] sm:$0xff]
    %v1024 = vld [vmem:[#allocation5 + $0x1d18] sm:$0xff]
    %v1025 = vld [vmem:[#allocation5 + $0x1d20] sm:$0xff]
    %v1026 = vld [vmem:[#allocation5 + $0x1d28] sm:$0xff]
    %v1027 = vld [vmem:[#allocation5 + $0x1d30] sm:$0xff]
    %v1028 = vld [vmem:[#allocation5 + $0x1d38] sm:$0xff]
    %v1029 = vld [vmem:[#allocation5 + $0x1d40] sm:$0xff]
    %v1030 = vld [vmem:[#allocation5 + $0x1d48] sm:$0xff]
    %v1031 = vld [vmem:[#allocation5 + $0x1d50] sm:$0xff]
    %v1032 = vld [vmem:[#allocation5 + $0x1d58] sm:$0xff]
    %v1033 = vld [vmem:[#allocation5 + $0x1d60] sm:$0xff]
    %v1034 = vld [vmem:[#allocation5 + $0x1d68] sm:$0xff]
    %v1035 = vld [vmem:[#allocation5 + $0x1d70] sm:$0xff]
    %v1036 = vld [vmem:[#allocation5 + $0x1d78] sm:$0xff]
    %v1037 = vld [vmem:[#allocation5 + $0x1d80] sm:$0xff]
    %v1038 = vld [vmem:[#allocation5 + $0x1d88] sm:$0xff]
    %v1039 = vld [vmem:[#allocation5 + $0x1d90] sm:$0xff]
    %v1040 = vld [vmem:[#allocation5 + $0x1d98] sm:$0xff]
    %v1041 = vld [vmem:[#allocation5 + $0x1da0] sm:$0xff]
    %v1042 = vld [vmem:[#allocation5 + $0x1da8] sm:$0xff]
    %v1043 = vld [vmem:[#allocation5 + $0x1db0] sm:$0xff]
    %v1044 = vld [vmem:[#allocation5 + $0x1db8] sm:$0xff]
    %v1045 = vld [vmem:[#allocation5 + $0x1dc0] sm:$0xff]
    %v1046 = vld [vmem:[#allocation5 + $0x1dc8] sm:$0xff]
    %v1047 = vld [vmem:[#allocation5 + $0x1dd0] sm:$0xff]
    %v1048 = vld [vmem:[#allocation5 + $0x1dd8] sm:$0xff]
    %v1049 = vld [vmem:[#allocation5 + $0x1de0] sm:$0xff]
    %v1050 = vld [vmem:[#allocation5 + $0x1de8] sm:$0xff]
    %v1051 = vld [vmem:[#allocation5 + $0x1df0] sm:$0xff]
    %v1052 = vld [vmem:[#allocation5 + $0x1df8] sm:$0xff]
    %v1053 = vld [vmem:[#allocation5 + $0x1e00] sm:$0xff]
    %v1054 = vld [vmem:[#allocation5 + $0x1e08] sm:$0xff]
    %v1055 = vld [vmem:[#allocation5 + $0x1e10] sm:$0xff]
    %v1056 = vld [vmem:[#allocation5 + $0x1e18] sm:$0xff]
    %v1057 = vld [vmem:[#allocation5 + $0x1e20] sm:$0xff]
    %v1058 = vld [vmem:[#allocation5 + $0x1e28] sm:$0xff]
    %v1059 = vld [vmem:[#allocation5 + $0x1e30] sm:$0xff]
    %v1060 = vld [vmem:[#allocation5 + $0x1e38] sm:$0xff]
    %v1061 = vld [vmem:[#allocation5 + $0x1e40] sm:$0xff]
    %v1062 = vld [vmem:[#allocation5 + $0x1e48] sm:$0xff]
    %v1063 = vld [vmem:[#allocation5 + $0x1e50] sm:$0xff]
    %v1064 = vld [vmem:[#allocation5 + $0x1e58] sm:$0xff]
    %v1065 = vld [vmem:[#allocation5 + $0x1e60] sm:$0xff]
    %v1066 = vld [vmem:[#allocation5 + $0x1e68] sm:$0xff]
    %v1067 = vld [vmem:[#allocation5 + $0x1e70] sm:$0xff]
    %v1068 = vld [vmem:[#allocation5 + $0x1e78] sm:$0xff]
    %v1069 = vld [vmem:[#allocation5 + $0x1e80] sm:$0xff]
    %v1070 = vld [vmem:[#allocation5 + $0x1e88] sm:$0xff]
    %v1071 = vld [vmem:[#allocation5 + $0x1e90] sm:$0xff]
    %v1072 = vld [vmem:[#allocation5 + $0x1e98] sm:$0xff]
    %v1073 = vld [vmem:[#allocation5 + $0x1ea0] sm:$0xff]
    %v1074 = vld [vmem:[#allocation5 + $0x1ea8] sm:$0xff]
    %v1075 = vld [vmem:[#allocation5 + $0x1eb0] sm:$0xff]
    %v1076 = vld [vmem:[#allocation5 + $0x1eb8] sm:$0xff]
    %v1077 = vld [vmem:[#allocation5 + $0x1ec0] sm:$0xff]
    %v1078 = vld [vmem:[#allocation5 + $0x1ec8] sm:$0xff]
    %v1079 = vld [vmem:[#allocation5 + $0x1ed0] sm:$0xff]
    %v1080 = vld [vmem:[#allocation5 + $0x1ed8] sm:$0xff]
    %v1081 = vld [vmem:[#allocation5 + $0x1ee0] sm:$0xff]
    %v1082 = vld [vmem:[#allocation5 + $0x1ee8] sm:$0xff]
    %v1083 = vld [vmem:[#allocation5 + $0x1ef0] sm:$0xff]
    %v1084 = vld [vmem:[#allocation5 + $0x1ef8] sm:$0xff]
    %v1085 = vld [vmem:[#allocation5 + $0x1f00] sm:$0xff]
    %v1086 = vld [vmem:[#allocation5 + $0x1f08] sm:$0xff]
    %v1087 = vld [vmem:[#allocation5 + $0x1f10] sm:$0xff]
    %v1088 = vld [vmem:[#allocation5 + $0x1f18] sm:$0xff]
    %v1089 = vld [vmem:[#allocation5 + $0x1f20] sm:$0xff]
    %v1090 = vld [vmem:[#allocation5 + $0x1f28] sm:$0xff]
    %v1091 = vld [vmem:[#allocation5 + $0x1f30] sm:$0xff]
    %v1092 = vld [vmem:[#allocation5 + $0x1f38] sm:$0xff]
    %v1093 = vld [vmem:[#allocation5 + $0x1f40] sm:$0xff]
    %v1094 = vld [vmem:[#allocation5 + $0x1f48] sm:$0xff]
    %v1095 = vld [vmem:[#allocation5 + $0x1f50] sm:$0xff]
    %v1096 = vld [vmem:[#allocation5 + $0x1f58] sm:$0xff]
    %v1097 = vld [vmem:[#allocation5 + $0x1f60] sm:$0xff]
    %v1098 = vld [vmem:[#allocation5 + $0x1f68] sm:$0xff]
    %v1099 = vld [vmem:[#allocation5 + $0x1f70] sm:$0xff]
    %v1100 = vld [vmem:[#allocation5 + $0x1f78] sm:$0xff]
    %v1101 = vld [vmem:[#allocation5 + $0x1f80] sm:$0xff]
    %v1102 = vld [vmem:[#allocation5 + $0x1f88] sm:$0xff]
    %v1103 = vld [vmem:[#allocation5 + $0x1f90] sm:$0xff]
    %v1104 = vld [vmem:[#allocation5 + $0x1f98] sm:$0xff]
    %v1105 = vld [vmem:[#allocation5 + $0x1fa0] sm:$0xff]
    %v1106 = vld [vmem:[#allocation5 + $0x1fa8] sm:$0xff]
    %v1107 = vld [vmem:[#allocation5 + $0x1fb0] sm:$0xff]
    %v1108 = vld [vmem:[#allocation5 + $0x1fb8] sm:$0xff]
    %v1109 = vld [vmem:[#allocation5 + $0x1fc0] sm:$0xff]
    %v1110 = vld [vmem:[#allocation5 + $0x1fc8] sm:$0xff]
    %v1111 = vld [vmem:[#allocation5 + $0x1fd0] sm:$0xff]
    %v1112 = vld [vmem:[#allocation5 + $0x1fd8] sm:$0xff]
    %v1113 = vld [vmem:[#allocation5 + $0x1fe0] sm:$0xff]
    %v1114 = vld [vmem:[#allocation5 + $0x1fe8] sm:$0xff]
    %v1115 = vld [vmem:[#allocation5 + $0x1ff0] sm:$0xff]
    %v1116 = vld [vmem:[#allocation5 + $0x1ff8] sm:$0xff]
    %v1117 = vld [vmem:[#allocation7] sm:$0xff]
    %v1118 = vld [vmem:[#allocation7 + $0x8] sm:$0xff]
    %v1121 = vlaneseq
    %v1122 = vshrl.u32 %v1121, 7
    %v1123 = vsub.s32 0, %v1122
    %v1124 = vrot.slane %v1117, %v1123
    %v1125 = vlaneseq
    %v1126 = vshrl.u32 %v1125, 7
    %v1127 = vsub.s32 1, %v1126
    %v1128 = vrot.slane %v1117, %v1127
    %v1129 = vlaneseq
    %v1130 = vshrl.u32 %v1129, 7
    %v1131 = vsub.s32 2, %v1130
    %v1132 = vrot.slane %v1117, %v1131
    %v1133 = vlaneseq
    %v1134 = vshrl.u32 %v1133, 7
    %v1135 = vsub.s32 3, %v1134
    %v1136 = vrot.slane %v1117, %v1135
    %v1137 = vlaneseq
    %v1138 = vshrl.u32 %v1137, 7
    %v1139 = vsub.s32 4, %v1138
    %v1140 = vrot.slane %v1117, %v1139
    %v1141 = vlaneseq
    %v1142 = vshrl.u32 %v1141, 7
    %v1143 = vsub.s32 5, %v1142
    %v1144 = vrot.slane %v1117, %v1143
    %v1145 = vlaneseq
    %v1146 = vshrl.u32 %v1145, 7
    %v1147 = vsub.s32 6, %v1146
    %v1148 = vrot.slane %v1117, %v1147
    %v1149 = vlaneseq
    %v1150 = vshrl.u32 %v1149, 7
    %v1151 = vsub.s32 7, %v1150
    %v1152 = vrot.slane %v1117, %v1151
    %v1153 = vlaneseq
    %v1154 = vshrl.u32 %v1153, 7
    %v1155 = vsub.s32 0, %v1154
    %v1156 = vrot.slane %v1118, %v1155
    %v1157 = vlaneseq
    %v1158 = vshrl.u32 %v1157, 7
    %v1159 = vsub.s32 1, %v1158
    %v1160 = vrot.slane %v1118, %v1159
    %v1161 = vlaneseq
    %v1162 = vshrl.u32 %v1161, 7
    %v1163 = vsub.s32 2, %v1162
    %v1164 = vrot.slane %v1118, %v1163
    %v1165 = vlaneseq
    %v1166 = vshrl.u32 %v1165, 7
    %v1167 = vsub.s32 3, %v1166
    %v1168 = vrot.slane %v1118, %v1167
    %v1169 = vlaneseq
    %v1170 = vshrl.u32 %v1169, 7
    %v1171 = vsub.s32 4, %v1170
    %v1172 = vrot.slane %v1118, %v1171
    %v1173 = vlaneseq
    %v1174 = vshrl.u32 %v1173, 7
    %v1175 = vsub.s32 5, %v1174
    %v1176 = vrot.slane %v1118, %v1175
    %v1177 = vlaneseq
    %v1178 = vshrl.u32 %v1177, 7
    %v1179 = vsub.s32 6, %v1178
    %v1180 = vrot.slane %v1118, %v1179
    %v1181 = vlaneseq
    %v1182 = vshrl.u32 %v1181, 7
    %v1183 = vsub.s32 7, %v1182
    %v1184 = vrot.slane %v1118, %v1183
    %1201 = vmatprep.subr.mxu0 %v334
    %1202 = vmatpush1.msra.mxu0 %v333
    %1203 = vmatprep.subr.mxu0 %v318
    %1204 = vmatpush1.msra.mxu0 %v317
    %1205 = vmatprep.subr.mxu0 %v302
    %1206 = vmatpush1.msra.mxu0 %v301
    %1207 = vmatprep.subr.mxu0 %v286
    %1208 = vmatpush1.msra.mxu0 %v285
    %1209 = vmatprep.subr.mxu0 %v270
    %1210 = vmatpush1.msra.mxu0 %v269
    %1211 = vmatprep.subr.mxu0 %v254
    %1212 = vmatpush1.msra.mxu0 %v253
    %1213 = vmatprep.subr.mxu0 %v238
    %1214 = vmatpush1.msra.mxu0 %v237
    %1215 = vmatprep.subr.mxu0 %v222
    %1216 = vmatpush1.msra.mxu0 %v221
    %1217 = vmatprep.subr.mxu0 %v206
    %1218 = vmatpush1.msra.mxu0 %v205
    %1219 = vmatprep.subr.mxu0 %v190
    %1220 = vmatpush1.msra.mxu0 %v189
    %1221 = vmatprep.subr.mxu0 %v174
    %1222 = vmatpush1.msra.mxu0 %v173
    %1223 = vmatprep.subr.mxu0 %v158
    %1224 = vmatpush1.msra.mxu0 %v157
    %1225 = vmatprep.subr.mxu0 %v142
    %1226 = vmatpush1.msra.mxu0 %v141
    %1227 = vmatprep.subr.mxu0 %v126
    %1228 = vmatpush1.msra.mxu0 %v125
    %1229 = vmatprep.subr.mxu0 %v110
    %1230 = vmatpush1.msra.mxu0 %v109
    %1231 = vmatprep.subr.mxu0 %v94
    %1232 = vmatpush1.msra.mxu0 %v93
    %1233 = vmatprep.subr.mxu0 %v590
    %1234 = vmatpush2.msra.mxu0 %v589
    %1235 = vmatprep.subr.mxu0 %v574
    %1236 = vmatpush2.msra.mxu0 %v573
    %1237 = vmatprep.subr.mxu0 %v558
    %1238 = vmatpush2.msra.mxu0 %v557
    %1239 = vmatprep.subr.mxu0 %v542
    %1240 = vmatpush2.msra.mxu0 %v541
    %1241 = vmatprep.subr.mxu0 %v526
    %1242 = vmatpush2.msra.mxu0 %v525
    %1243 = vmatprep.subr.mxu0 %v510
    %1244 = vmatpush2.msra.mxu0 %v509
    %1245 = vmatprep.subr.mxu0 %v494
    %1246 = vmatpush2.msra.mxu0 %v493
    %1247 = vmatprep.subr.mxu0 %v478
    %1248 = vmatpush2.msra.mxu0 %v477
    %1249 = vmatprep.subr.mxu0 %v462
    %1250 = vmatpush2.msra.mxu0 %v461
    %1251 = vmatprep.subr.mxu0 %v446
    %1252 = vmatpush2.msra.mxu0 %v445
    %1253 = vmatprep.subr.mxu0 %v430
    %1254 = vmatpush2.msra.mxu0 %v429
    %1255 = vmatprep.subr.mxu0 %v414
    %1256 = vmatpush2.msra.mxu0 %v413
    %1257 = vmatprep.subr.mxu0 %v398
    %1258 = vmatpush2.msra.mxu0 %v397
    %1259 = vmatprep.subr.mxu0 %v382
    %1260 = vmatpush2.msra.mxu0 %v381
    %1261 = vmatprep.subr.mxu0 %v366
    %1262 = vmatpush2.msra.mxu0 %v365
    %1263 = vmatprep.subr.mxu0 %v350
    %1264 = vmatpush2.msra.mxu0 %v349
    %1265 = vmatprep.mubr.f32.mxu0 %v86
    %1266 = vmatmul.mubr.f32.gmra.mxu0 %v85
    %v1267 = vpop.f32.mrf.mxu0
    %v1268 = vadd.f32 %v1124, %v1267
    %v1269 = vpop.f32.mrf.mxu0
    %v1270 = vadd.f32 %v1128, %v1269
    %1271 = vmatprep.mubr.f32.mxu0 %v90
    %1272 = vmatmul.mubr.f32.gmra.mxu0 %v89
    %v1273 = vpop.f32.mrf.mxu0
    %v1274 = vadd.f32 %v1124, %v1273
    %v1275 = vpop.f32.mrf.mxu0
    %v1276 = vadd.f32 %v1128, %v1275
    %1277 = vdwg.mxu0
    %1278 = vmatprep.subr.mxu0 %v846
    %1279 = vmatpush1.msra.mxu0 %v845
    %1280 = vmatprep.subr.mxu0 %v830
    %1281 = vmatpush1.msra.mxu0 %v829
    %1282 = vmatprep.subr.mxu0 %v814
    %1283 = vmatpush1.msra.mxu0 %v813
    %1284 = vmatprep.subr.mxu0 %v798
    %1285 = vmatpush1.msra.mxu0 %v797
    %1286 = vmatprep.subr.mxu0 %v782
    %1287 = vmatpush1.msra.mxu0 %v781
    %1288 = vmatprep.subr.mxu0 %v766
    %1289 = vmatpush1.msra.mxu0 %v765
    %1290 = vmatprep.subr.mxu0 %v750
    %1291 = vmatpush1.msra.mxu0 %v749
    %1292 = vmatprep.subr.mxu0 %v734
    %1293 = vmatpush1.msra.mxu0 %v733
    %1294 = vmatprep.subr.mxu0 %v718
    %1295 = vmatpush1.msra.mxu0 %v717
    %1296 = vmatprep.subr.mxu0 %v702
    %1297 = vmatpush1.msra.mxu0 %v701
    %1298 = vmatprep.subr.mxu0 %v686
    %1299 = vmatpush1.msra.mxu0 %v685
    %1300 = vmatprep.subr.mxu0 %v670
    %1301 = vmatpush1.msra.mxu0 %v669
    %1302 = vmatprep.subr.mxu0 %v654
    %1303 = vmatpush1.msra.mxu0 %v653
    %1304 = vmatprep.subr.mxu0 %v638
    %1305 = vmatpush1.msra.mxu0 %v637
    %1306 = vmatprep.subr.mxu0 %v622
    %1307 = vmatpush1.msra.mxu0 %v621
    %1308 = vmatprep.subr.mxu0 %v606
    %1309 = vmatpush1.msra.mxu0 %v605
    %1310 = vmatprep.subr.mxu0 %v1102
    %1311 = vmatpush2.msra.mxu0 %v1101
    %1312 = vmatprep.subr.mxu0 %v1086
    %1313 = vmatpush2.msra.mxu0 %v1085
    %1314 = vmatprep.subr.mxu0 %v1070
    %1315 = vmatpush2.msra.mxu0 %v1069
    %1316 = vmatprep.subr.mxu0 %v1054
    %1317 = vmatpush2.msra.mxu0 %v1053
    %1318 = vmatprep.subr.mxu0 %v1038
    %1319 = vmatpush2.msra.mxu0 %v1037
    %1320 = vmatprep.subr.mxu0 %v1022
    %1321 = vmatpush2.msra.mxu0 %v1021
    %1322 = vmatprep.subr.mxu0 %v1006
    %1323 = vmatpush2.msra.mxu0 %v1005
    %1324 = vmatprep.subr.mxu0 %v990
    %1325 = vmatpush2.msra.mxu0 %v989
    %1326 = vmatprep.subr.mxu0 %v974
    %1327 = vmatpush2.msra.mxu0 %v973
    %1328 = vmatprep.subr.mxu0 %v958
    %1329 = vmatpush2.msra.mxu0 %v957
    %1330 = vmatprep.subr.mxu0 %v942
    %1331 = vmatpush2.msra.mxu0 %v941
    %1332 = vmatprep.subr.mxu0 %v926
    %1333 = vmatpush2.msra.mxu0 %v925
    %1334 = vmatprep.subr.mxu0 %v910
    %1335 = vmatpush2.msra.mxu0 %v909
    %1336 = vmatprep.subr.mxu0 %v894
    %1337 = vmatpush2.msra.mxu0 %v893
    %1338 = vmatprep.subr.mxu0 %v878
    %1339 = vmatpush2.msra.mxu0 %v877
    %1340 = vmatprep.subr.mxu0 %v862
    %1341 = vmatpush2.msra.mxu0 %v861
    %1342 = vmatprep.mubr.f32.mxu0 %v88
    %1343 = vmatmul.mubr.f32.gmra.mxu0 %v87
    %v1344 = vpop.f32.mrf.mxu0
    %v1345 = vadd.f32 %v1268, %v1344
    %v1346 = vpop.f32.mrf.mxu0
    %v1347 = vadd.f32 %v1270, %v1346
    %1348 = vmatprep.mubr.f32.mxu0 %v92
    %1349 = vmatmul.mubr.f32.gmra.mxu0 %v91
    %v1350 = vpop.f32.mrf.mxu0
    %v1351 = vadd.f32 %v1274, %v1350
    %v1352 = vpop.f32.mrf.mxu0
    %v1353 = vadd.f32 %v1276, %v1352
    %1354 = vdwg.mxu0
    %1355 = vmatprep.subr.mxu0 %v336
    %1356 = vmatpush1.msra.mxu0 %v335
    %1357 = vmatprep.subr.mxu0 %v320
    %1358 = vmatpush1.msra.mxu0 %v319
    %1359 = vmatprep.subr.mxu0 %v304
    %1360 = vmatpush1.msra.mxu0 %v303
    %1361 = vmatprep.subr.mxu0 %v288
    %1362 = vmatpush1.msra.mxu0 %v287
    %1363 = vmatprep.subr.mxu0 %v272
    %1364 = vmatpush1.msra.mxu0 %v271
    %1365 = vmatprep.subr.mxu0 %v256
    %1366 = vmatpush1.msra.mxu0 %v255
    %1367 = vmatprep.subr.mxu0 %v240
    %1368 = vmatpush1.msra.mxu0 %v239
    %1369 = vmatprep.subr.mxu0 %v224
    %1370 = vmatpush1.msra.mxu0 %v223
    %1371 = vmatprep.subr.mxu0 %v208
    %1372 = vmatpush1.msra.mxu0 %v207
    %1373 = vmatprep.subr.mxu0 %v192
    %1374 = vmatpush1.msra.mxu0 %v191
    %1375 = vmatprep.subr.mxu0 %v176
    %1376 = vmatpush1.msra.mxu0 %v175
    %1377 = vmatprep.subr.mxu0 %v160
    %1378 = vmatpush1.msra.mxu0 %v159
    %1379 = vmatprep.subr.mxu0 %v144
    %1380 = vmatpush1.msra.mxu0 %v143
    %1381 = vmatprep.subr.mxu0 %v128
    %1382 = vmatpush1.msra.mxu0 %v127
    %1383 = vmatprep.subr.mxu0 %v112
    %1384 = vmatpush1.msra.mxu0 %v111
    %1385 = vmatprep.subr.mxu0 %v96
    %1386 = vmatpush1.msra.mxu0 %v95
    %1387 = vmatprep.subr.mxu0 %v592
    %1388 = vmatpush2.msra.mxu0 %v591
    %1389 = vmatprep.subr.mxu0 %v576
    %1390 = vmatpush2.msra.mxu0 %v575
    %1391 = vmatprep.subr.mxu0 %v560
    %1392 = vmatpush2.msra.mxu0 %v559
    %1393 = vmatprep.subr.mxu0 %v544
    %1394 = vmatpush2.msra.mxu0 %v543
    %1395 = vmatprep.subr.mxu0 %v528
    %1396 = vmatpush2.msra.mxu0 %v527
    %1397 = vmatprep.subr.mxu0 %v512
    %1398 = vmatpush2.msra.mxu0 %v511
    %1399 = vmatprep.subr.mxu0 %v496
    %1400 = vmatpush2.msra.mxu0 %v495
    %1401 = vmatprep.subr.mxu0 %v480
    %1402 = vmatpush2.msra.mxu0 %v479
    %1403 = vmatprep.subr.mxu0 %v464
    %1404 = vmatpush2.msra.mxu0 %v463
    %1405 = vmatprep.subr.mxu0 %v448
    %1406 = vmatpush2.msra.mxu0 %v447
    %1407 = vmatprep.subr.mxu0 %v432
    %1408 = vmatpush2.msra.mxu0 %v431
    %1409 = vmatprep.subr.mxu0 %v416
    %1410 = vmatpush2.msra.mxu0 %v415
    %1411 = vmatprep.subr.mxu0 %v400
    %1412 = vmatpush2.msra.mxu0 %v399
    %1413 = vmatprep.subr.mxu0 %v384
    %1414 = vmatpush2.msra.mxu0 %v383
    %1415 = vmatprep.subr.mxu0 %v368
    %1416 = vmatpush2.msra.mxu0 %v367
    %1417 = vmatprep.subr.mxu0 %v352
    %1418 = vmatpush2.msra.mxu0 %v351
    %1419 = vmatprep.mubr.f32.mxu0 %v86
    %1420 = vmatmul.mubr.f32.gmra.mxu0 %v85
    %v1421 = vpop.f32.mrf.mxu0
    %v1422 = vadd.f32 %v1132, %v1421
    %v1423 = vpop.f32.mrf.mxu0
    %v1424 = vadd.f32 %v1136, %v1423
    %1425 = vmatprep.mubr.f32.mxu0 %v90
    %1426 = vmatmul.mubr.f32.gmra.mxu0 %v89
    %v1427 = vpop.f32.mrf.mxu0
    %v1428 = vadd.f32 %v1132, %v1427
    %v1429 = vpop.f32.mrf.mxu0
    %v1430 = vadd.f32 %v1136, %v1429
    %1431 = vdwg.mxu0
    %1432 = vmatprep.subr.mxu0 %v848
    %1433 = vmatpush1.msra.mxu0 %v847
    %1434 = vmatprep.subr.mxu0 %v832
    %1435 = vmatpush1.msra.mxu0 %v831
    %1436 = vmatprep.subr.mxu0 %v816
    %1437 = vmatpush1.msra.mxu0 %v815
    %1438 = vmatprep.subr.mxu0 %v800
    %1439 = vmatpush1.msra.mxu0 %v799
    %1440 = vmatprep.subr.mxu0 %v784
    %1441 = vmatpush1.msra.mxu0 %v783
    %1442 = vmatprep.subr.mxu0 %v768
    %1443 = vmatpush1.msra.mxu0 %v767
    %1444 = vmatprep.subr.mxu0 %v752
    %1445 = vmatpush1.msra.mxu0 %v751
    %1446 = vmatprep.subr.mxu0 %v736
    %1447 = vmatpush1.msra.mxu0 %v735
    %1448 = vmatprep.subr.mxu0 %v720
    %1449 = vmatpush1.msra.mxu0 %v719
    %1450 = vmatprep.subr.mxu0 %v704
    %1451 = vmatpush1.msra.mxu0 %v703
    %1452 = vmatprep.subr.mxu0 %v688
    %1453 = vmatpush1.msra.mxu0 %v687
    %1454 = vmatprep.subr.mxu0 %v672
    %1455 = vmatpush1.msra.mxu0 %v671
    %1456 = vmatprep.subr.mxu0 %v656
    %1457 = vmatpush1.msra.mxu0 %v655
    %1458 = vmatprep.subr.mxu0 %v640
    %1459 = vmatpush1.msra.mxu0 %v639
    %1460 = vmatprep.subr.mxu0 %v624
    %1461 = vmatpush1.msra.mxu0 %v623
    %1462 = vmatprep.subr.mxu0 %v608
    %1463 = vmatpush1.msra.mxu0 %v607
    %1464 = vmatprep.subr.mxu0 %v1104
    %1465 = vmatpush2.msra.mxu0 %v1103
    %1466 = vmatprep.subr.mxu0 %v1088
    %1467 = vmatpush2.msra.mxu0 %v1087
    %1468 = vmatprep.subr.mxu0 %v1072
    %1469 = vmatpush2.msra.mxu0 %v1071
    %1470 = vmatprep.subr.mxu0 %v1056
    %1471 = vmatpush2.msra.mxu0 %v1055
    %1472 = vmatprep.subr.mxu0 %v1040
    %1473 = vmatpush2.msra.mxu0 %v1039
    %1474 = vmatprep.subr.mxu0 %v1024
    %1475 = vmatpush2.msra.mxu0 %v1023
    %1476 = vmatprep.subr.mxu0 %v1008
    %1477 = vmatpush2.msra.mxu0 %v1007
    %1478 = vmatprep.subr.mxu0 %v992
    %1479 = vmatpush2.msra.mxu0 %v991
    %1480 = vmatprep.subr.mxu0 %v976
    %1481 = vmatpush2.msra.mxu0 %v975
    %1482 = vmatprep.subr.mxu0 %v960
    %1483 = vmatpush2.msra.mxu0 %v959
    %1484 = vmatprep.subr.mxu0 %v944
    %1485 = vmatpush2.msra.mxu0 %v943
    %1486 = vmatprep.subr.mxu0 %v928
    %1487 = vmatpush2.msra.mxu0 %v927
    %1488 = vmatprep.subr.mxu0 %v912
    %1489 = vmatpush2.msra.mxu0 %v911
    %1490 = vmatprep.subr.mxu0 %v896
    %1491 = vmatpush2.msra.mxu0 %v895
    %1492 = vmatprep.subr.mxu0 %v880
    %1493 = vmatpush2.msra.mxu0 %v879
    %1494 = vmatprep.subr.mxu0 %v864
    %1495 = vmatpush2.msra.mxu0 %v863
    %1496 = vmatprep.mubr.f32.mxu0 %v88
    %1497 = vmatmul.mubr.f32.gmra.mxu0 %v87
    %v1498 = vpop.f32.mrf.mxu0
    %v1499 = vadd.f32 %v1422, %v1498
    %v1500 = vpop.f32.mrf.mxu0
    %v1501 = vadd.f32 %v1424, %v1500
    %1502 = vmatprep.mubr.f32.mxu0 %v92
    %1503 = vmatmul.mubr.f32.gmra.mxu0 %v91
    %v1504 = vpop.f32.mrf.mxu0
    %v1505 = vadd.f32 %v1428, %v1504
    %v1506 = vpop.f32.mrf.mxu0
    %v1507 = vadd.f32 %v1430, %v1506
    %1508 = vdwg.mxu0
    %1509 = vmatprep.subr.mxu0 %v338
    %1510 = vmatpush1.msra.mxu0 %v337
    %1511 = vmatprep.subr.mxu0 %v322
    %1512 = vmatpush1.msra.mxu0 %v321
    %1513 = vmatprep.subr.mxu0 %v306
    %1514 = vmatpush1.msra.mxu0 %v305
    %1515 = vmatprep.subr.mxu0 %v290
    %1516 = vmatpush1.msra.mxu0 %v289
    %1517 = vmatprep.subr.mxu0 %v274
    %1518 = vmatpush1.msra.mxu0 %v273
    %1519 = vmatprep.subr.mxu0 %v258
    %1520 = vmatpush1.msra.mxu0 %v257
    %1521 = vmatprep.subr.mxu0 %v242
    %1522 = vmatpush1.msra.mxu0 %v241
    %1523 = vmatprep.subr.mxu0 %v226
    %1524 = vmatpush1.msra.mxu0 %v225
    %1525 = vmatprep.subr.mxu0 %v210
    %1526 = vmatpush1.msra.mxu0 %v209
    %1527 = vmatprep.subr.mxu0 %v194
    %1528 = vmatpush1.msra.mxu0 %v193
    %1529 = vmatprep.subr.mxu0 %v178
    %1530 = vmatpush1.msra.mxu0 %v177
    %1531 = vmatprep.subr.mxu0 %v162
    %1532 = vmatpush1.msra.mxu0 %v161
    %1533 = vmatprep.subr.mxu0 %v146
    %1534 = vmatpush1.msra.mxu0 %v145
    %1535 = vmatprep.subr.mxu0 %v130
    %1536 = vmatpush1.msra.mxu0 %v129
    %1537 = vmatprep.subr.mxu0 %v114
    %1538 = vmatpush1.msra.mxu0 %v113
    %1539 = vmatprep.subr.mxu0 %v98
    %1540 = vmatpush1.msra.mxu0 %v97
    %1541 = vmatprep.subr.mxu0 %v594
    %1542 = vmatpush2.msra.mxu0 %v593
    %1543 = vmatprep.subr.mxu0 %v578
    %1544 = vmatpush2.msra.mxu0 %v577
    %1545 = vmatprep.subr.mxu0 %v562
    %1546 = vmatpush2.msra.mxu0 %v561
    %1547 = vmatprep.subr.mxu0 %v546
    %1548 = vmatpush2.msra.mxu0 %v545
    %1549 = vmatprep.subr.mxu0 %v530
    %1550 = vmatpush2.msra.mxu0 %v529
    %1551 = vmatprep.subr.mxu0 %v514
    %1552 = vmatpush2.msra.mxu0 %v513
    %1553 = vmatprep.subr.mxu0 %v498
    %1554 = vmatpush2.msra.mxu0 %v497
    %1555 = vmatprep.subr.mxu0 %v482
    %1556 = vmatpush2.msra.mxu0 %v481
    %1557 = vmatprep.subr.mxu0 %v466
    %1558 = vmatpush2.msra.mxu0 %v465
    %1559 = vmatprep.subr.mxu0 %v450
    %1560 = vmatpush2.msra.mxu0 %v449
    %1561 = vmatprep.subr.mxu0 %v434
    %1562 = vmatpush2.msra.mxu0 %v433
    %1563 = vmatprep.subr.mxu0 %v418
    %1564 = vmatpush2.msra.mxu0 %v417
    %1565 = vmatprep.subr.mxu0 %v402
    %1566 = vmatpush2.msra.mxu0 %v401
    %1567 = vmatprep.subr.mxu0 %v386
    %1568 = vmatpush2.msra.mxu0 %v385
    %1569 = vmatprep.subr.mxu0 %v370
    %1570 = vmatpush2.msra.mxu0 %v369
    %1571 = vmatprep.subr.mxu0 %v354
    %1572 = vmatpush2.msra.mxu0 %v353
    %1573 = vmatprep.mubr.f32.mxu0 %v86
    %1574 = vmatmul.mubr.f32.gmra.mxu0 %v85
    %v1575 = vpop.f32.mrf.mxu0
    %v1576 = vadd.f32 %v1140, %v1575
    %v1577 = vpop.f32.mrf.mxu0
    %v1578 = vadd.f32 %v1144, %v1577
    %1579 = vmatprep.mubr.f32.mxu0 %v90
    %1580 = vmatmul.mubr.f32.gmra.mxu0 %v89
    %v1581 = vpop.f32.mrf.mxu0
    %v1582 = vadd.f32 %v1140, %v1581
    %v1583 = vpop.f32.mrf.mxu0
    %v1584 = vadd.f32 %v1144, %v1583
    %1585 = vdwg.mxu0
    %1586 = vmatprep.subr.mxu0 %v850
    %1587 = vmatpush1.msra.mxu0 %v849
    %1588 = vmatprep.subr.mxu0 %v834
    %1589 = vmatpush1.msra.mxu0 %v833
    %1590 = vmatprep.subr.mxu0 %v818
    %1591 = vmatpush1.msra.mxu0 %v817
    %1592 = vmatprep.subr.mxu0 %v802
    %1593 = vmatpush1.msra.mxu0 %v801
    %1594 = vmatprep.subr.mxu0 %v786
    %1595 = vmatpush1.msra.mxu0 %v785
    %1596 = vmatprep.subr.mxu0 %v770
    %1597 = vmatpush1.msra.mxu0 %v769
    %1598 = vmatprep.subr.mxu0 %v754
    %1599 = vmatpush1.msra.mxu0 %v753
    %1600 = vmatprep.subr.mxu0 %v738
    %1601 = vmatpush1.msra.mxu0 %v737
    %1602 = vmatprep.subr.mxu0 %v722
    %1603 = vmatpush1.msra.mxu0 %v721
    %1604 = vmatprep.subr.mxu0 %v706
    %1605 = vmatpush1.msra.mxu0 %v705
    %1606 = vmatprep.subr.mxu0 %v690
    %1607 = vmatpush1.msra.mxu0 %v689
    %1608 = vmatprep.subr.mxu0 %v674
    %1609 = vmatpush1.msra.mxu0 %v673
    %1610 = vmatprep.subr.mxu0 %v658
    %1611 = vmatpush1.msra.mxu0 %v657
    %1612 = vmatprep.subr.mxu0 %v642
    %1613 = vmatpush1.msra.mxu0 %v641
    %1614 = vmatprep.subr.mxu0 %v626
    %1615 = vmatpush1.msra.mxu0 %v625
    %1616 = vmatprep.subr.mxu0 %v610
    %1617 = vmatpush1.msra.mxu0 %v609
    %1618 = vmatprep.subr.mxu0 %v1106
    %1619 = vmatpush2.msra.mxu0 %v1105
    %1620 = vmatprep.subr.mxu0 %v1090
    %1621 = vmatpush2.msra.mxu0 %v1089
    %1622 = vmatprep.subr.mxu0 %v1074
    %1623 = vmatpush2.msra.mxu0 %v1073
    %1624 = vmatprep.subr.mxu0 %v1058
    %1625 = vmatpush2.msra.mxu0 %v1057
    %1626 = vmatprep.subr.mxu0 %v1042
    %1627 = vmatpush2.msra.mxu0 %v1041
    %1628 = vmatprep.subr.mxu0 %v1026
    %1629 = vmatpush2.msra.mxu0 %v1025
    %1630 = vmatprep.subr.mxu0 %v1010
    %1631 = vmatpush2.msra.mxu0 %v1009
    %1632 = vmatprep.subr.mxu0 %v994
    %1633 = vmatpush2.msra.mxu0 %v993
    %1634 = vmatprep.subr.mxu0 %v978
    %1635 = vmatpush2.msra.mxu0 %v977
    %1636 = vmatprep.subr.mxu0 %v962
    %1637 = vmatpush2.msra.mxu0 %v961
    %1638 = vmatprep.subr.mxu0 %v946
    %1639 = vmatpush2.msra.mxu0 %v945
    %1640 = vmatprep.subr.mxu0 %v930
    %1641 = vmatpush2.msra.mxu0 %v929
    %1642 = vmatprep.subr.mxu0 %v914
    %1643 = vmatpush2.msra.mxu0 %v913
    %1644 = vmatprep.subr.mxu0 %v898
    %1645 = vmatpush2.msra.mxu0 %v897
    %1646 = vmatprep.subr.mxu0 %v882
    %1647 = vmatpush2.msra.mxu0 %v881
    %1648 = vmatprep.subr.mxu0 %v866
    %1649 = vmatpush2.msra.mxu0 %v865
    %1650 = vmatprep.mubr.f32.mxu0 %v88
    %1651 = vmatmul.mubr.f32.gmra.mxu0 %v87
    %v1652 = vpop.f32.mrf.mxu0
    %v1653 = vadd.f32 %v1576, %v1652
    %v1654 = vpop.f32.mrf.mxu0
    %v1655 = vadd.f32 %v1578, %v1654
    %1656 = vmatprep.mubr.f32.mxu0 %v92
    %1657 = vmatmul.mubr.f32.gmra.mxu0 %v91
    %v1658 = vpop.f32.mrf.mxu0
    %v1659 = vadd.f32 %v1582, %v1658
    %v1660 = vpop.f32.mrf.mxu0
    %v1661 = vadd.f32 %v1584, %v1660
    %1662 = vdwg.mxu0
    %1663 = vmatprep.subr.mxu0 %v340
    %1664 = vmatpush1.msra.mxu0 %v339
    %1665 = vmatprep.subr.mxu0 %v324
    %1666 = vmatpush1.msra.mxu0 %v323
    %1667 = vmatprep.subr.mxu0 %v308
    %1668 = vmatpush1.msra.mxu0 %v307
    %1669 = vmatprep.subr.mxu0 %v292
    %1670 = vmatpush1.msra.mxu0 %v291
    %1671 = vmatprep.subr.mxu0 %v276
    %1672 = vmatpush1.msra.mxu0 %v275
    %1673 = vmatprep.subr.mxu0 %v260
    %1674 = vmatpush1.msra.mxu0 %v259
    %1675 = vmatprep.subr.mxu0 %v244
    %1676 = vmatpush1.msra.mxu0 %v243
    %1677 = vmatprep.subr.mxu0 %v228
    %1678 = vmatpush1.msra.mxu0 %v227
    %1679 = vmatprep.subr.mxu0 %v212
    %1680 = vmatpush1.msra.mxu0 %v211
    %1681 = vmatprep.subr.mxu0 %v196
    %1682 = vmatpush1.msra.mxu0 %v195
    %1683 = vmatprep.subr.mxu0 %v180
    %1684 = vmatpush1.msra.mxu0 %v179
    %1685 = vmatprep.subr.mxu0 %v164
    %1686 = vmatpush1.msra.mxu0 %v163
    %1687 = vmatprep.subr.mxu0 %v148
    %1688 = vmatpush1.msra.mxu0 %v147
    %1689 = vmatprep.subr.mxu0 %v132
    %1690 = vmatpush1.msra.mxu0 %v131
    %1691 = vmatprep.subr.mxu0 %v116
    %1692 = vmatpush1.msra.mxu0 %v115
    %1693 = vmatprep.subr.mxu0 %v100
    %1694 = vmatpush1.msra.mxu0 %v99
    %1695 = vmatprep.subr.mxu0 %v596
    %1696 = vmatpush2.msra.mxu0 %v595
    %1697 = vmatprep.subr.mxu0 %v580
    %1698 = vmatpush2.msra.mxu0 %v579
    %1699 = vmatprep.subr.mxu0 %v564
    %1700 = vmatpush2.msra.mxu0 %v563
    %1701 = vmatprep.subr.mxu0 %v548
    %1702 = vmatpush2.msra.mxu0 %v547
    %1703 = vmatprep.subr.mxu0 %v532
    %1704 = vmatpush2.msra.mxu0 %v531
    %1705 = vmatprep.subr.mxu0 %v516
    %1706 = vmatpush2.msra.mxu0 %v515
    %1707 = vmatprep.subr.mxu0 %v500
    %1708 = vmatpush2.msra.mxu0 %v499
    %1709 = vmatprep.subr.mxu0 %v484
    %1710 = vmatpush2.msra.mxu0 %v483
    %1711 = vmatprep.subr.mxu0 %v468
    %1712 = vmatpush2.msra.mxu0 %v467
    %1713 = vmatprep.subr.mxu0 %v452
    %1714 = vmatpush2.msra.mxu0 %v451
    %1715 = vmatprep.subr.mxu0 %v436
    %1716 = vmatpush2.msra.mxu0 %v435
    %1717 = vmatprep.subr.mxu0 %v420
    %1718 = vmatpush2.msra.mxu0 %v419
    %1719 = vmatprep.subr.mxu0 %v404
    %1720 = vmatpush2.msra.mxu0 %v403
    %1721 = vmatprep.subr.mxu0 %v388
    %1722 = vmatpush2.msra.mxu0 %v387
    %1723 = vmatprep.subr.mxu0 %v372
    %1724 = vmatpush2.msra.mxu0 %v371
    %1725 = vmatprep.subr.mxu0 %v356
    %1726 = vmatpush2.msra.mxu0 %v355
    %1727 = vmatprep.mubr.f32.mxu0 %v86
    %1728 = vmatmul.mubr.f32.gmra.mxu0 %v85
    %v1729 = vpop.f32.mrf.mxu0
    %v1730 = vadd.f32 %v1148, %v1729
    %v1731 = vpop.f32.mrf.mxu0
    %v1732 = vadd.f32 %v1152, %v1731
    %1733 = vmatprep.mubr.f32.mxu0 %v90
    %1734 = vmatmul.mubr.f32.gmra.mxu0 %v89
    %v1735 = vpop.f32.mrf.mxu0
    %v1736 = vadd.f32 %v1148, %v1735
    %v1737 = vpop.f32.mrf.mxu0
    %v1738 = vadd.f32 %v1152, %v1737
    %1739 = vdwg.mxu0
    %1740 = vmatprep.subr.mxu0 %v852
    %1741 = vmatpush1.msra.mxu0 %v851
    %1742 = vmatprep.subr.mxu0 %v836
    %1743 = vmatpush1.msra.mxu0 %v835
    %1744 = vmatprep.subr.mxu0 %v820
    %1745 = vmatpush1.msra.mxu0 %v819
    %1746 = vmatprep.subr.mxu0 %v804
    %1747 = vmatpush1.msra.mxu0 %v803
    %1748 = vmatprep.subr.mxu0 %v788
    %1749 = vmatpush1.msra.mxu0 %v787
    %1750 = vmatprep.subr.mxu0 %v772
    %1751 = vmatpush1.msra.mxu0 %v771
    %1752 = vmatprep.subr.mxu0 %v756
    %1753 = vmatpush1.msra.mxu0 %v755
    %1754 = vmatprep.subr.mxu0 %v740
    %1755 = vmatpush1.msra.mxu0 %v739
    %1756 = vmatprep.subr.mxu0 %v724
    %1757 = vmatpush1.msra.mxu0 %v723
    %1758 = vmatprep.subr.mxu0 %v708
    %1759 = vmatpush1.msra.mxu0 %v707
    %1760 = vmatprep.subr.mxu0 %v692
    %1761 = vmatpush1.msra.mxu0 %v691
    %1762 = vmatprep.subr.mxu0 %v676
    %1763 = vmatpush1.msra.mxu0 %v675
    %1764 = vmatprep.subr.mxu0 %v660
    %1765 = vmatpush1.msra.mxu0 %v659
    %1766 = vmatprep.subr.mxu0 %v644
    %1767 = vmatpush1.msra.mxu0 %v643
    %1768 = vmatprep.subr.mxu0 %v628
    %1769 = vmatpush1.msra.mxu0 %v627
    %1770 = vmatprep.subr.mxu0 %v612
    %1771 = vmatpush1.msra.mxu0 %v611
    %1772 = vmatprep.subr.mxu0 %v1108
    %1773 = vmatpush2.msra.mxu0 %v1107
    %1774 = vmatprep.subr.mxu0 %v1092
    %1775 = vmatpush2.msra.mxu0 %v1091
    %1776 = vmatprep.subr.mxu0 %v1076
    %1777 = vmatpush2.msra.mxu0 %v1075
    %1778 = vmatprep.subr.mxu0 %v1060
    %1779 = vmatpush2.msra.mxu0 %v1059
    %1780 = vmatprep.subr.mxu0 %v1044
    %1781 = vmatpush2.msra.mxu0 %v1043
    %1782 = vmatprep.subr.mxu0 %v1028
    %1783 = vmatpush2.msra.mxu0 %v1027
    %1784 = vmatprep.subr.mxu0 %v1012
    %1785 = vmatpush2.msra.mxu0 %v1011
    %1786 = vmatprep.subr.mxu0 %v996
    %1787 = vmatpush2.msra.mxu0 %v995
    %1788 = vmatprep.subr.mxu0 %v980
    %1789 = vmatpush2.msra.mxu0 %v979
    %1790 = vmatprep.subr.mxu0 %v964
    %1791 = vmatpush2.msra.mxu0 %v963
    %1792 = vmatprep.subr.mxu0 %v948
    %1793 = vmatpush2.msra.mxu0 %v947
    %1794 = vmatprep.subr.mxu0 %v932
    %1795 = vmatpush2.msra.mxu0 %v931
    %1796 = vmatprep.subr.mxu0 %v916
    %1797 = vmatpush2.msra.mxu0 %v915
    %1798 = vmatprep.subr.mxu0 %v900
    %1799 = vmatpush2.msra.mxu0 %v899
    %1800 = vmatprep.subr.mxu0 %v884
    %1801 = vmatpush2.msra.mxu0 %v883
    %1802 = vmatprep.subr.mxu0 %v868
    %1803 = vmatpush2.msra.mxu0 %v867
    %1804 = vmatprep.mubr.f32.mxu0 %v88
    %1805 = vmatmul.mubr.f32.gmra.mxu0 %v87
    %v1806 = vpop.f32.mrf.mxu0
    %v1807 = vadd.f32 %v1730, %v1806
    %v1808 = vpop.f32.mrf.mxu0
    %v1809 = vadd.f32 %v1732, %v1808
    %1810 = vmatprep.mubr.f32.mxu0 %v92
    %1811 = vmatmul.mubr.f32.gmra.mxu0 %v91
    %v1812 = vpop.f32.mrf.mxu0
    %v1813 = vadd.f32 %v1736, %v1812
    %v1814 = vpop.f32.mrf.mxu0
    %v1815 = vadd.f32 %v1738, %v1814
    %1816 = vdwg.mxu0
    %1817 = vmatprep.subr.mxu0 %v342
    %1818 = vmatpush1.msra.mxu0 %v341
    %1819 = vmatprep.subr.mxu0 %v326
    %1820 = vmatpush1.msra.mxu0 %v325
    %1821 = vmatprep.subr.mxu0 %v310
    %1822 = vmatpush1.msra.mxu0 %v309
    %1823 = vmatprep.subr.mxu0 %v294
    %1824 = vmatpush1.msra.mxu0 %v293
    %1825 = vmatprep.subr.mxu0 %v278
    %1826 = vmatpush1.msra.mxu0 %v277
    %1827 = vmatprep.subr.mxu0 %v262
    %1828 = vmatpush1.msra.mxu0 %v261
    %1829 = vmatprep.subr.mxu0 %v246
    %1830 = vmatpush1.msra.mxu0 %v245
    %1831 = vmatprep.subr.mxu0 %v230
    %1832 = vmatpush1.msra.mxu0 %v229
    %1833 = vmatprep.subr.mxu0 %v214
    %1834 = vmatpush1.msra.mxu0 %v213
    %1835 = vmatprep.subr.mxu0 %v198
    %1836 = vmatpush1.msra.mxu0 %v197
    %1837 = vmatprep.subr.mxu0 %v182
    %1838 = vmatpush1.msra.mxu0 %v181
    %1839 = vmatprep.subr.mxu0 %v166
    %1840 = vmatpush1.msra.mxu0 %v165
    %1841 = vmatprep.subr.mxu0 %v150
    %1842 = vmatpush1.msra.mxu0 %v149
    %1843 = vmatprep.subr.mxu0 %v134
    %1844 = vmatpush1.msra.mxu0 %v133
    %1845 = vmatprep.subr.mxu0 %v118
    %1846 = vmatpush1.msra.mxu0 %v117
    %1847 = vmatprep.subr.mxu0 %v102
    %1848 = vmatpush1.msra.mxu0 %v101
    %1849 = vmatprep.subr.mxu0 %v598
    %1850 = vmatpush2.msra.mxu0 %v597
    %1851 = vmatprep.subr.mxu0 %v582
    %1852 = vmatpush2.msra.mxu0 %v581
    %1853 = vmatprep.subr.mxu0 %v566
    %1854 = vmatpush2.msra.mxu0 %v565
    %1855 = vmatprep.subr.mxu0 %v550
    %1856 = vmatpush2.msra.mxu0 %v549
    %1857 = vmatprep.subr.mxu0 %v534
    %1858 = vmatpush2.msra.mxu0 %v533
    %1859 = vmatprep.subr.mxu0 %v518
    %1860 = vmatpush2.msra.mxu0 %v517
    %1861 = vmatprep.subr.mxu0 %v502
    %1862 = vmatpush2.msra.mxu0 %v501
    %1863 = vmatprep.subr.mxu0 %v486
    %1864 = vmatpush2.msra.mxu0 %v485
    %1865 = vmatprep.subr.mxu0 %v470
    %1866 = vmatpush2.msra.mxu0 %v469
    %1867 = vmatprep.subr.mxu0 %v454
    %1868 = vmatpush2.msra.mxu0 %v453
    %1869 = vmatprep.subr.mxu0 %v438
    %1870 = vmatpush2.msra.mxu0 %v437
    %1871 = vmatprep.subr.mxu0 %v422
    %1872 = vmatpush2.msra.mxu0 %v421
    %1873 = vmatprep.subr.mxu0 %v406
    %1874 = vmatpush2.msra.mxu0 %v405
    %1875 = vmatprep.subr.mxu0 %v390
    %1876 = vmatpush2.msra.mxu0 %v389
    %1877 = vmatprep.subr.mxu0 %v374
    %1878 = vmatpush2.msra.mxu0 %v373
    %1879 = vmatprep.subr.mxu0 %v358
    %1880 = vmatpush2.msra.mxu0 %v357
    %1881 = vmatprep.mubr.f32.mxu0 %v86
    %1882 = vmatmul.mubr.f32.gmra.mxu0 %v85
    %v1883 = vpop.f32.mrf.mxu0
    %v1884 = vadd.f32 %v1156, %v1883
    %v1885 = vpop.f32.mrf.mxu0
    %v1886 = vadd.f32 %v1160, %v1885
    %1887 = vmatprep.mubr.f32.mxu0 %v90
    %1888 = vmatmul.mubr.f32.gmra.mxu0 %v89
    %v1889 = vpop.f32.mrf.mxu0
    %v1890 = vadd.f32 %v1156, %v1889
    %v1891 = vpop.f32.mrf.mxu0
    %v1892 = vadd.f32 %v1160, %v1891
    %1893 = vdwg.mxu0
    %1894 = vmatprep.subr.mxu0 %v854
    %1895 = vmatpush1.msra.mxu0 %v853
    %1896 = vmatprep.subr.mxu0 %v838
    %1897 = vmatpush1.msra.mxu0 %v837
    %1898 = vmatprep.subr.mxu0 %v822
    %1899 = vmatpush1.msra.mxu0 %v821
    %1900 = vmatprep.subr.mxu0 %v806
    %1901 = vmatpush1.msra.mxu0 %v805
    %1902 = vmatprep.subr.mxu0 %v790
    %1903 = vmatpush1.msra.mxu0 %v789
    %1904 = vmatprep.subr.mxu0 %v774
    %1905 = vmatpush1.msra.mxu0 %v773
    %1906 = vmatprep.subr.mxu0 %v758
    %1907 = vmatpush1.msra.mxu0 %v757
    %1908 = vmatprep.subr.mxu0 %v742
    %1909 = vmatpush1.msra.mxu0 %v741
    %1910 = vmatprep.subr.mxu0 %v726
    %1911 = vmatpush1.msra.mxu0 %v725
    %1912 = vmatprep.subr.mxu0 %v710
    %1913 = vmatpush1.msra.mxu0 %v709
    %1914 = vmatprep.subr.mxu0 %v694
    %1915 = vmatpush1.msra.mxu0 %v693
    %1916 = vmatprep.subr.mxu0 %v678
    %1917 = vmatpush1.msra.mxu0 %v677
    %1918 = vmatprep.subr.mxu0 %v662
    %1919 = vmatpush1.msra.mxu0 %v661
    %1920 = vmatprep.subr.mxu0 %v646
    %1921 = vmatpush1.msra.mxu0 %v645
    %1922 = vmatprep.subr.mxu0 %v630
    %1923 = vmatpush1.msra.mxu0 %v629
    %1924 = vmatprep.subr.mxu0 %v614
    %1925 = vmatpush1.msra.mxu0 %v613
    %1926 = vmatprep.subr.mxu0 %v1110
    %1927 = vmatpush2.msra.mxu0 %v1109
    %1928 = vmatprep.subr.mxu0 %v1094
    %1929 = vmatpush2.msra.mxu0 %v1093
    %1930 = vmatprep.subr.mxu0 %v1078
    %1931 = vmatpush2.msra.mxu0 %v1077
    %1932 = vmatprep.subr.mxu0 %v1062
    %1933 = vmatpush2.msra.mxu0 %v1061
    %1934 = vmatprep.subr.mxu0 %v1046
    %1935 = vmatpush2.msra.mxu0 %v1045
    %1936 = vmatprep.subr.mxu0 %v1030
    %1937 = vmatpush2.msra.mxu0 %v1029
    %1938 = vmatprep.subr.mxu0 %v1014
    %1939 = vmatpush2.msra.mxu0 %v1013
    %1940 = vmatprep.subr.mxu0 %v998
    %1941 = vmatpush2.msra.mxu0 %v997
    %1942 = vmatprep.subr.mxu0 %v982
    %1943 = vmatpush2.msra.mxu0 %v981
    %1944 = vmatprep.subr.mxu0 %v966
    %1945 = vmatpush2.msra.mxu0 %v965
    %1946 = vmatprep.subr.mxu0 %v950
    %1947 = vmatpush2.msra.mxu0 %v949
    %1948 = vmatprep.subr.mxu0 %v934
    %1949 = vmatpush2.msra.mxu0 %v933
    %1950 = vmatprep.subr.mxu0 %v918
    %1951 = vmatpush2.msra.mxu0 %v917
    %1952 = vmatprep.subr.mxu0 %v902
    %1953 = vmatpush2.msra.mxu0 %v901
    %1954 = vmatprep.subr.mxu0 %v886
    %1955 = vmatpush2.msra.mxu0 %v885
    %1956 = vmatprep.subr.mxu0 %v870
    %1957 = vmatpush2.msra.mxu0 %v869
    %1958 = vmatprep.mubr.f32.mxu0 %v88
    %1959 = vmatmul.mubr.f32.gmra.mxu0 %v87
    %v1960 = vpop.f32.mrf.mxu0
    %v1961 = vadd.f32 %v1884, %v1960
    %v1962 = vpop.f32.mrf.mxu0
    %v1963 = vadd.f32 %v1886, %v1962
    %1964 = vmatprep.mubr.f32.mxu0 %v92
    %1965 = vmatmul.mubr.f32.gmra.mxu0 %v91
    %v1966 = vpop.f32.mrf.mxu0
    %v1967 = vadd.f32 %v1890, %v1966
    %v1968 = vpop.f32.mrf.mxu0
    %v1969 = vadd.f32 %v1892, %v1968
    %1970 = vdwg.mxu0
    %1971 = vmatprep.subr.mxu0 %v344
    %1972 = vmatpush1.msra.mxu0 %v343
    %1973 = vmatprep.subr.mxu0 %v328
    %1974 = vmatpush1.msra.mxu0 %v327
    %1975 = vmatprep.subr.mxu0 %v312
    %1976 = vmatpush1.msra.mxu0 %v311
    %1977 = vmatprep.subr.mxu0 %v296
    %1978 = vmatpush1.msra.mxu0 %v295
    %1979 = vmatprep.subr.mxu0 %v280
    %1980 = vmatpush1.msra.mxu0 %v279
    %1981 = vmatprep.subr.mxu0 %v264
    %1982 = vmatpush1.msra.mxu0 %v263
    %1983 = vmatprep.subr.mxu0 %v248
    %1984 = vmatpush1.msra.mxu0 %v247
    %1985 = vmatprep.subr.mxu0 %v232
    %1986 = vmatpush1.msra.mxu0 %v231
    %1987 = vmatprep.subr.mxu0 %v216
    %1988 = vmatpush1.msra.mxu0 %v215
    %1989 = vmatprep.subr.mxu0 %v200
    %1990 = vmatpush1.msra.mxu0 %v199
    %1991 = vmatprep.subr.mxu0 %v184
    %1992 = vmatpush1.msra.mxu0 %v183
    %1993 = vmatprep.subr.mxu0 %v168
    %1994 = vmatpush1.msra.mxu0 %v167
    %1995 = vmatprep.subr.mxu0 %v152
    %1996 = vmatpush1.msra.mxu0 %v151
    %1997 = vmatprep.subr.mxu0 %v136
    %1998 = vmatpush1.msra.mxu0 %v135
    %1999 = vmatprep.subr.mxu0 %v120
    %2000 = vmatpush1.msra.mxu0 %v119
    %2001 = vmatprep.subr.mxu0 %v104
    %2002 = vmatpush1.msra.mxu0 %v103
    %2003 = vmatprep.subr.mxu0 %v600
    %2004 = vmatpush2.msra.mxu0 %v599
    %2005 = vmatprep.subr.mxu0 %v584
    %2006 = vmatpush2.msra.mxu0 %v583
    %2007 = vmatprep.subr.mxu0 %v568
    %2008 = vmatpush2.msra.mxu0 %v567
    %2009 = vmatprep.subr.mxu0 %v552
    %2010 = vmatpush2.msra.mxu0 %v551
    %2011 = vmatprep.subr.mxu0 %v536
    %2012 = vmatpush2.msra.mxu0 %v535
    %2013 = vmatprep.subr.mxu0 %v520
    %2014 = vmatpush2.msra.mxu0 %v519
    %2015 = vmatprep.subr.mxu0 %v504
    %2016 = vmatpush2.msra.mxu0 %v503
    %2017 = vmatprep.subr.mxu0 %v488
    %2018 = vmatpush2.msra.mxu0 %v487
    %2019 = vmatprep.subr.mxu0 %v472
    %2020 = vmatpush2.msra.mxu0 %v471
    %2021 = vmatprep.subr.mxu0 %v456
    %2022 = vmatpush2.msra.mxu0 %v455
    %2023 = vmatprep.subr.mxu0 %v440
    %2024 = vmatpush2.msra.mxu0 %v439
    %2025 = vmatprep.subr.mxu0 %v424
    %2026 = vmatpush2.msra.mxu0 %v423
    %2027 = vmatprep.subr.mxu0 %v408
    %2028 = vmatpush2.msra.mxu0 %v407
    %2029 = vmatprep.subr.mxu0 %v392
    %2030 = vmatpush2.msra.mxu0 %v391
    %2031 = vmatprep.subr.mxu0 %v376
    %2032 = vmatpush2.msra.mxu0 %v375
    %2033 = vmatprep.subr.mxu0 %v360
    %2034 = vmatpush2.msra.mxu0 %v359
    %2035 = vmatprep.mubr.f32.mxu0 %v86
    %2036 = vmatmul.mubr.f32.gmra.mxu0 %v85
    %v2037 = vpop.f32.mrf.mxu0
    %v2038 = vadd.f32 %v1164, %v2037
    %v2039 = vpop.f32.mrf.mxu0
    %v2040 = vadd.f32 %v1168, %v2039
    %2041 = vmatprep.mubr.f32.mxu0 %v90
    %2042 = vmatmul.mubr.f32.gmra.mxu0 %v89
    %v2043 = vpop.f32.mrf.mxu0
    %v2044 = vadd.f32 %v1164, %v2043
    %v2045 = vpop.f32.mrf.mxu0
    %v2046 = vadd.f32 %v1168, %v2045
    %2047 = vdwg.mxu0
    %2048 = vmatprep.subr.mxu0 %v856
    %2049 = vmatpush1.msra.mxu0 %v855
    %2050 = vmatprep.subr.mxu0 %v840
    %2051 = vmatpush1.msra.mxu0 %v839
    %2052 = vmatprep.subr.mxu0 %v824
    %2053 = vmatpush1.msra.mxu0 %v823
    %2054 = vmatprep.subr.mxu0 %v808
    %2055 = vmatpush1.msra.mxu0 %v807
    %2056 = vmatprep.subr.mxu0 %v792
    %2057 = vmatpush1.msra.mxu0 %v791
    %2058 = vmatprep.subr.mxu0 %v776
    %2059 = vmatpush1.msra.mxu0 %v775
    %2060 = vmatprep.subr.mxu0 %v760
    %2061 = vmatpush1.msra.mxu0 %v759
    %2062 = vmatprep.subr.mxu0 %v744
    %2063 = vmatpush1.msra.mxu0 %v743
    %2064 = vmatprep.subr.mxu0 %v728
    %2065 = vmatpush1.msra.mxu0 %v727
    %2066 = vmatprep.subr.mxu0 %v712
    %2067 = vmatpush1.msra.mxu0 %v711
    %2068 = vmatprep.subr.mxu0 %v696
    %2069 = vmatpush1.msra.mxu0 %v695
    %2070 = vmatprep.subr.mxu0 %v680
    %2071 = vmatpush1.msra.mxu0 %v679
    %2072 = vmatprep.subr.mxu0 %v664
    %2073 = vmatpush1.msra.mxu0 %v663
    %2074 = vmatprep.subr.mxu0 %v648
    %2075 = vmatpush1.msra.mxu0 %v647
    %2076 = vmatprep.subr.mxu0 %v632
    %2077 = vmatpush1.msra.mxu0 %v631
    %2078 = vmatprep.subr.mxu0 %v616
    %2079 = vmatpush1.msra.mxu0 %v615
    %2080 = vmatprep.subr.mxu0 %v1112
    %2081 = vmatpush2.msra.mxu0 %v1111
    %2082 = vmatprep.subr.mxu0 %v1096
    %2083 = vmatpush2.msra.mxu0 %v1095
    %2084 = vmatprep.subr.mxu0 %v1080
    %2085 = vmatpush2.msra.mxu0 %v1079
    %2086 = vmatprep.subr.mxu0 %v1064
    %2087 = vmatpush2.msra.mxu0 %v1063
    %2088 = vmatprep.subr.mxu0 %v1048
    %2089 = vmatpush2.msra.mxu0 %v1047
    %2090 = vmatprep.subr.mxu0 %v1032
    %2091 = vmatpush2.msra.mxu0 %v1031
    %2092 = vmatprep.subr.mxu0 %v1016
    %2093 = vmatpush2.msra.mxu0 %v1015
    %2094 = vmatprep.subr.mxu0 %v1000
    %2095 = vmatpush2.msra.mxu0 %v999
    %2096 = vmatprep.subr.mxu0 %v984
    %2097 = vmatpush2.msra.mxu0 %v983
    %2098 = vmatprep.subr.mxu0 %v968
    %2099 = vmatpush2.msra.mxu0 %v967
    %2100 = vmatprep.subr.mxu0 %v952
    %2101 = vmatpush2.msra.mxu0 %v951
    %2102 = vmatprep.subr.mxu0 %v936
    %2103 = vmatpush2.msra.mxu0 %v935
    %2104 = vmatprep.subr.mxu0 %v920
    %2105 = vmatpush2.msra.mxu0 %v919
    %2106 = vmatprep.subr.mxu0 %v904
    %2107 = vmatpush2.msra.mxu0 %v903
    %2108 = vmatprep.subr.mxu0 %v888
    %2109 = vmatpush2.msra.mxu0 %v887
    %2110 = vmatprep.subr.mxu0 %v872
    %2111 = vmatpush2.msra.mxu0 %v871
    %2112 = vmatprep.mubr.f32.mxu0 %v88
    %2113 = vmatmul.mubr.f32.gmra.mxu0 %v87
    %v2114 = vpop.f32.mrf.mxu0
    %v2115 = vadd.f32 %v2038, %v2114
    %v2116 = vpop.f32.mrf.mxu0
    %v2117 = vadd.f32 %v2040, %v2116
    %2118 = vmatprep.mubr.f32.mxu0 %v92
    %2119 = vmatmul.mubr.f32.gmra.mxu0 %v91
    %v2120 = vpop.f32.mrf.mxu0
    %v2121 = vadd.f32 %v2044, %v2120
    %v2122 = vpop.f32.mrf.mxu0
    %v2123 = vadd.f32 %v2046, %v2122
    %2124 = vdwg.mxu0
    %2125 = vmatprep.subr.mxu0 %v346
    %2126 = vmatpush1.msra.mxu0 %v345
    %2127 = vmatprep.subr.mxu0 %v330
    %2128 = vmatpush1.msra.mxu0 %v329
    %2129 = vmatprep.subr.mxu0 %v314
    %2130 = vmatpush1.msra.mxu0 %v313
    %2131 = vmatprep.subr.mxu0 %v298
    %2132 = vmatpush1.msra.mxu0 %v297
    %2133 = vmatprep.subr.mxu0 %v282
    %2134 = vmatpush1.msra.mxu0 %v281
    %2135 = vmatprep.subr.mxu0 %v266
    %2136 = vmatpush1.msra.mxu0 %v265
    %2137 = vmatprep.subr.mxu0 %v250
    %2138 = vmatpush1.msra.mxu0 %v249
    %2139 = vmatprep.subr.mxu0 %v234
    %2140 = vmatpush1.msra.mxu0 %v233
    %2141 = vmatprep.subr.mxu0 %v218
    %2142 = vmatpush1.msra.mxu0 %v217
    %2143 = vmatprep.subr.mxu0 %v202
    %2144 = vmatpush1.msra.mxu0 %v201
    %2145 = vmatprep.subr.mxu0 %v186
    %2146 = vmatpush1.msra.mxu0 %v185
    %2147 = vmatprep.subr.mxu0 %v170
    %2148 = vmatpush1.msra.mxu0 %v169
    %2149 = vmatprep.subr.mxu0 %v154
    %2150 = vmatpush1.msra.mxu0 %v153
    %2151 = vmatprep.subr.mxu0 %v138
    %2152 = vmatpush1.msra.mxu0 %v137
    %2153 = vmatprep.subr.mxu0 %v122
    %2154 = vmatpush1.msra.mxu0 %v121
    %2155 = vmatprep.subr.mxu0 %v106
    %2156 = vmatpush1.msra.mxu0 %v105
    %2157 = vmatprep.subr.mxu0 %v602
    %2158 = vmatpush2.msra.mxu0 %v601
    %2159 = vmatprep.subr.mxu0 %v586
    %2160 = vmatpush2.msra.mxu0 %v585
    %2161 = vmatprep.subr.mxu0 %v570
    %2162 = vmatpush2.msra.mxu0 %v569
    %2163 = vmatprep.subr.mxu0 %v554
    %2164 = vmatpush2.msra.mxu0 %v553
    %2165 = vmatprep.subr.mxu0 %v538
    %2166 = vmatpush2.msra.mxu0 %v537
    %2167 = vmatprep.subr.mxu0 %v522
    %2168 = vmatpush2.msra.mxu0 %v521
    %2169 = vmatprep.subr.mxu0 %v506
    %2170 = vmatpush2.msra.mxu0 %v505
    %2171 = vmatprep.subr.mxu0 %v490
    %2172 = vmatpush2.msra.mxu0 %v489
    %2173 = vmatprep.subr.mxu0 %v474
    %2174 = vmatpush2.msra.mxu0 %v473
    %2175 = vmatprep.subr.mxu0 %v458
    %2176 = vmatpush2.msra.mxu0 %v457
    %2177 = vmatprep.subr.mxu0 %v442
    %2178 = vmatpush2.msra.mxu0 %v441
    %2179 = vmatprep.subr.mxu0 %v426
    %2180 = vmatpush2.msra.mxu0 %v425
    %2181 = vmatprep.subr.mxu0 %v410
    %2182 = vmatpush2.msra.mxu0 %v409
    %2183 = vmatprep.subr.mxu0 %v394
    %2184 = vmatpush2.msra.mxu0 %v393
    %2185 = vmatprep.subr.mxu0 %v378
    %2186 = vmatpush2.msra.mxu0 %v377
    %2187 = vmatprep.subr.mxu0 %v362
    %2188 = vmatpush2.msra.mxu0 %v361
    %2189 = vmatprep.mubr.f32.mxu0 %v86
    %2190 = vmatmul.mubr.f32.gmra.mxu0 %v85
    %v2191 = vpop.f32.mrf.mxu0
    %v2192 = vadd.f32 %v1172, %v2191
    %v2193 = vpop.f32.mrf.mxu0
    %v2194 = vadd.f32 %v1176, %v2193
    %2195 = vmatprep.mubr.f32.mxu0 %v90
    %2196 = vmatmul.mubr.f32.gmra.mxu0 %v89
    %v2197 = vpop.f32.mrf.mxu0
    %v2198 = vadd.f32 %v1172, %v2197
    %v2199 = vpop.f32.mrf.mxu0
    %v2200 = vadd.f32 %v1176, %v2199
    %2201 = vdwg.mxu0
    %2202 = vmatprep.subr.mxu0 %v858
    %2203 = vmatpush1.msra.mxu0 %v857
    %2204 = vmatprep.subr.mxu0 %v842
    %2205 = vmatpush1.msra.mxu0 %v841
    %2206 = vmatprep.subr.mxu0 %v826
    %2207 = vmatpush1.msra.mxu0 %v825
    %2208 = vmatprep.subr.mxu0 %v810
    %2209 = vmatpush1.msra.mxu0 %v809
    %2210 = vmatprep.subr.mxu0 %v794
    %2211 = vmatpush1.msra.mxu0 %v793
    %2212 = vmatprep.subr.mxu0 %v778
    %2213 = vmatpush1.msra.mxu0 %v777
    %2214 = vmatprep.subr.mxu0 %v762
    %2215 = vmatpush1.msra.mxu0 %v761
    %2216 = vmatprep.subr.mxu0 %v746
    %2217 = vmatpush1.msra.mxu0 %v745
    %2218 = vmatprep.subr.mxu0 %v730
    %2219 = vmatpush1.msra.mxu0 %v729
    %2220 = vmatprep.subr.mxu0 %v714
    %2221 = vmatpush1.msra.mxu0 %v713
    %2222 = vmatprep.subr.mxu0 %v698
    %2223 = vmatpush1.msra.mxu0 %v697
    %2224 = vmatprep.subr.mxu0 %v682
    %2225 = vmatpush1.msra.mxu0 %v681
    %2226 = vmatprep.subr.mxu0 %v666
    %2227 = vmatpush1.msra.mxu0 %v665
    %2228 = vmatprep.subr.mxu0 %v650
    %2229 = vmatpush1.msra.mxu0 %v649
    %2230 = vmatprep.subr.mxu0 %v634
    %2231 = vmatpush1.msra.mxu0 %v633
    %2232 = vmatprep.subr.mxu0 %v618
    %2233 = vmatpush1.msra.mxu0 %v617
    %2234 = vmatprep.subr.mxu0 %v1114
    %2235 = vmatpush2.msra.mxu0 %v1113
    %2236 = vmatprep.subr.mxu0 %v1098
    %2237 = vmatpush2.msra.mxu0 %v1097
    %2238 = vmatprep.subr.mxu0 %v1082
    %2239 = vmatpush2.msra.mxu0 %v1081
    %2240 = vmatprep.subr.mxu0 %v1066
    %2241 = vmatpush2.msra.mxu0 %v1065
    %2242 = vmatprep.subr.mxu0 %v1050
    %2243 = vmatpush2.msra.mxu0 %v1049
    %2244 = vmatprep.subr.mxu0 %v1034
    %2245 = vmatpush2.msra.mxu0 %v1033
    %2246 = vmatprep.subr.mxu0 %v1018
    %2247 = vmatpush2.msra.mxu0 %v1017
    %2248 = vmatprep.subr.mxu0 %v1002
    %2249 = vmatpush2.msra.mxu0 %v1001
    %2250 = vmatprep.subr.mxu0 %v986
    %2251 = vmatpush2.msra.mxu0 %v985
    %2252 = vmatprep.subr.mxu0 %v970
    %2253 = vmatpush2.msra.mxu0 %v969
    %2254 = vmatprep.subr.mxu0 %v954
    %2255 = vmatpush2.msra.mxu0 %v953
    %2256 = vmatprep.subr.mxu0 %v938
    %2257 = vmatpush2.msra.mxu0 %v937
    %2258 = vmatprep.subr.mxu0 %v922
    %2259 = vmatpush2.msra.mxu0 %v921
    %2260 = vmatprep.subr.mxu0 %v906
    %2261 = vmatpush2.msra.mxu0 %v905
    %2262 = vmatprep.subr.mxu0 %v890
    %2263 = vmatpush2.msra.mxu0 %v889
    %2264 = vmatprep.subr.mxu0 %v874
    %2265 = vmatpush2.msra.mxu0 %v873
    %2266 = vmatprep.mubr.f32.mxu0 %v88
    %2267 = vmatmul.mubr.f32.gmra.mxu0 %v87
    %v2268 = vpop.f32.mrf.mxu0
    %v2269 = vadd.f32 %v2192, %v2268
    %v2270 = vpop.f32.mrf.mxu0
    %v2271 = vadd.f32 %v2194, %v2270
    %2272 = vmatprep.mubr.f32.mxu0 %v92
    %2273 = vmatmul.mubr.f32.gmra.mxu0 %v91
    %v2274 = vpop.f32.mrf.mxu0
    %v2275 = vadd.f32 %v2198, %v2274
    %v2276 = vpop.f32.mrf.mxu0
    %v2277 = vadd.f32 %v2200, %v2276
    %2278 = vdwg.mxu0
    %2279 = vmatprep.subr.mxu0 %v348
    %2280 = vmatpush1.msra.mxu0 %v347
    %2281 = vmatprep.subr.mxu0 %v332
    %2282 = vmatpush1.msra.mxu0 %v331
    %2283 = vmatprep.subr.mxu0 %v316
    %2284 = vmatpush1.msra.mxu0 %v315
    %2285 = vmatprep.subr.mxu0 %v300
    %2286 = vmatpush1.msra.mxu0 %v299
    %2287 = vmatprep.subr.mxu0 %v284
    %2288 = vmatpush1.msra.mxu0 %v283
    %2289 = vmatprep.subr.mxu0 %v268
    %2290 = vmatpush1.msra.mxu0 %v267
    %2291 = vmatprep.subr.mxu0 %v252
    %2292 = vmatpush1.msra.mxu0 %v251
    %2293 = vmatprep.subr.mxu0 %v236
    %2294 = vmatpush1.msra.mxu0 %v235
    %2295 = vmatprep.subr.mxu0 %v220
    %2296 = vmatpush1.msra.mxu0 %v219
    %2297 = vmatprep.subr.mxu0 %v204
    %2298 = vmatpush1.msra.mxu0 %v203
    %2299 = vmatprep.subr.mxu0 %v188
    %2300 = vmatpush1.msra.mxu0 %v187
    %2301 = vmatprep.subr.mxu0 %v172
    %2302 = vmatpush1.msra.mxu0 %v171
    %2303 = vmatprep.subr.mxu0 %v156
    %2304 = vmatpush1.msra.mxu0 %v155
    %2305 = vmatprep.subr.mxu0 %v140
    %2306 = vmatpush1.msra.mxu0 %v139
    %2307 = vmatprep.subr.mxu0 %v124
    %2308 = vmatpush1.msra.mxu0 %v123
    %2309 = vmatprep.subr.mxu0 %v108
    %2310 = vmatpush1.msra.mxu0 %v107
    %2311 = vmatprep.subr.mxu0 %v604
    %2312 = vmatpush2.msra.mxu0 %v603
    %2313 = vmatprep.subr.mxu0 %v588
    %2314 = vmatpush2.msra.mxu0 %v587
    %2315 = vmatprep.subr.mxu0 %v572
    %2316 = vmatpush2.msra.mxu0 %v571
    %2317 = vmatprep.subr.mxu0 %v556
    %2318 = vmatpush2.msra.mxu0 %v555
    %2319 = vmatprep.subr.mxu0 %v540
    %2320 = vmatpush2.msra.mxu0 %v539
    %2321 = vmatprep.subr.mxu0 %v524
    %2322 = vmatpush2.msra.mxu0 %v523
    %2323 = vmatprep.subr.mxu0 %v508
    %2324 = vmatpush2.msra.mxu0 %v507
    %2325 = vmatprep.subr.mxu0 %v492
    %2326 = vmatpush2.msra.mxu0 %v491
    %2327 = vmatprep.subr.mxu0 %v476
    %2328 = vmatpush2.msra.mxu0 %v475
    %2329 = vmatprep.subr.mxu0 %v460
    %2330 = vmatpush2.msra.mxu0 %v459
    %2331 = vmatprep.subr.mxu0 %v444
    %2332 = vmatpush2.msra.mxu0 %v443
    %2333 = vmatprep.subr.mxu0 %v428
    %2334 = vmatpush2.msra.mxu0 %v427
    %2335 = vmatprep.subr.mxu0 %v412
    %2336 = vmatpush2.msra.mxu0 %v411
    %2337 = vmatprep.subr.mxu0 %v396
    %2338 = vmatpush2.msra.mxu0 %v395
    %2339 = vmatprep.subr.mxu0 %v380
    %2340 = vmatpush2.msra.mxu0 %v379
    %2341 = vmatprep.subr.mxu0 %v364
    %2342 = vmatpush2.msra.mxu0 %v363
    %2343 = vmatprep.mubr.f32.mxu0 %v86
    %2344 = vmatmul.mubr.f32.gmra.mxu0 %v85
    %v2345 = vpop.f32.mrf.mxu0
    %v2346 = vadd.f32 %v1180, %v2345
    %v2347 = vpop.f32.mrf.mxu0
    %v2348 = vadd.f32 %v1184, %v2347
    %2349 = vmatprep.mubr.f32.mxu0 %v90
    %2350 = vmatmul.mubr.f32.gmra.mxu0 %v89
    %v2351 = vpop.f32.mrf.mxu0
    %v2352 = vadd.f32 %v1180, %v2351
    %v2353 = vpop.f32.mrf.mxu0
    %v2354 = vadd.f32 %v1184, %v2353
    %2355 = vdwg.mxu0
    %2356 = vmatprep.subr.mxu0 %v860
    %2357 = vmatpush1.msra.mxu0 %v859
    %2358 = vmatprep.subr.mxu0 %v844
    %2359 = vmatpush1.msra.mxu0 %v843
    %2360 = vmatprep.subr.mxu0 %v828
    %2361 = vmatpush1.msra.mxu0 %v827
    %2362 = vmatprep.subr.mxu0 %v812
    %2363 = vmatpush1.msra.mxu0 %v811
    %2364 = vmatprep.subr.mxu0 %v796
    %2365 = vmatpush1.msra.mxu0 %v795
    %2366 = vmatprep.subr.mxu0 %v780
    %2367 = vmatpush1.msra.mxu0 %v779
    %2368 = vmatprep.subr.mxu0 %v764
    %2369 = vmatpush1.msra.mxu0 %v763
    %2370 = vmatprep.subr.mxu0 %v748
    %2371 = vmatpush1.msra.mxu0 %v747
    %2372 = vmatprep.subr.mxu0 %v732
    %2373 = vmatpush1.msra.mxu0 %v731
    %2374 = vmatprep.subr.mxu0 %v716
    %2375 = vmatpush1.msra.mxu0 %v715
    %2376 = vmatprep.subr.mxu0 %v700
    %2377 = vmatpush1.msra.mxu0 %v699
    %2378 = vmatprep.subr.mxu0 %v684
    %2379 = vmatpush1.msra.mxu0 %v683
    %2380 = vmatprep.subr.mxu0 %v668
    %2381 = vmatpush1.msra.mxu0 %v667
    %2382 = vmatprep.subr.mxu0 %v652
    %2383 = vmatpush1.msra.mxu0 %v651
    %2384 = vmatprep.subr.mxu0 %v636
    %2385 = vmatpush1.msra.mxu0 %v635
    %2386 = vmatprep.subr.mxu0 %v620
    %2387 = vmatpush1.msra.mxu0 %v619
    %2388 = vmatprep.subr.mxu0 %v1116
    %2389 = vmatpush2.msra.mxu0 %v1115
    %2390 = vmatprep.subr.mxu0 %v1100
    %2391 = vmatpush2.msra.mxu0 %v1099
    %2392 = vmatprep.subr.mxu0 %v1084
    %2393 = vmatpush2.msra.mxu0 %v1083
    %2394 = vmatprep.subr.mxu0 %v1068
    %2395 = vmatpush2.msra.mxu0 %v1067
    %2396 = vmatprep.subr.mxu0 %v1052
    %2397 = vmatpush2.msra.mxu0 %v1051
    %2398 = vmatprep.subr.mxu0 %v1036
    %2399 = vmatpush2.msra.mxu0 %v1035
    %2400 = vmatprep.subr.mxu0 %v1020
    %2401 = vmatpush2.msra.mxu0 %v1019
    %2402 = vmatprep.subr.mxu0 %v1004
    %2403 = vmatpush2.msra.mxu0 %v1003
    %2404 = vmatprep.subr.mxu0 %v988
    %2405 = vmatpush2.msra.mxu0 %v987
    %2406 = vmatprep.subr.mxu0 %v972
    %2407 = vmatpush2.msra.mxu0 %v971
    %2408 = vmatprep.subr.mxu0 %v956
    %2409 = vmatpush2.msra.mxu0 %v955
    %2410 = vmatprep.subr.mxu0 %v940
    %2411 = vmatpush2.msra.mxu0 %v939
    %2412 = vmatprep.subr.mxu0 %v924
    %2413 = vmatpush2.msra.mxu0 %v923
    %2414 = vmatprep.subr.mxu0 %v908
    %2415 = vmatpush2.msra.mxu0 %v907
    %2416 = vmatprep.subr.mxu0 %v892
    %2417 = vmatpush2.msra.mxu0 %v891
    %2418 = vmatprep.subr.mxu0 %v876
    %2419 = vmatpush2.msra.mxu0 %v875
    %2420 = vmatprep.mubr.f32.mxu0 %v88
    %2421 = vmatmul.mubr.f32.gmra.mxu0 %v87
    %v2422 = vpop.f32.mrf.mxu0
    %v2423 = vadd.f32 %v2346, %v2422
    %v2424 = vpop.f32.mrf.mxu0
    %v2425 = vadd.f32 %v2348, %v2424
    %2426 = vmatprep.mubr.f32.mxu0 %v92
    %2427 = vmatmul.mubr.f32.gmra.mxu0 %v91
    %v2428 = vpop.f32.mrf.mxu0
    %v2429 = vadd.f32 %v2352, %v2428
    %v2430 = vpop.f32.mrf.mxu0
    %v2431 = vadd.f32 %v2354, %v2430
    %2432 = vdwg.mxu0
    %v2433 = vmax.f32 %v1345, 0.0
    %v2434 = vmax.f32 %v1347, 0.0
    %v2435 = vmax.f32 %v1499, 0.0
    %v2436 = vmax.f32 %v1501, 0.0
    %v2437 = vmax.f32 %v1653, 0.0
    %v2438 = vmax.f32 %v1655, 0.0
    %v2439 = vmax.f32 %v1807, 0.0
    %v2440 = vmax.f32 %v1809, 0.0
    %v2441 = vmax.f32 %v1961, 0.0
    %v2442 = vmax.f32 %v1963, 0.0
    %v2443 = vmax.f32 %v2115, 0.0
    %v2444 = vmax.f32 %v2117, 0.0
    %v2445 = vmax.f32 %v2269, 0.0
    %v2446 = vmax.f32 %v2271, 0.0
    %v2447 = vmax.f32 %v2423, 0.0
    %v2448 = vmax.f32 %v2425, 0.0
    %v2449 = vmax.f32 %v1351, 0.0
    %v2450 = vmax.f32 %v1353, 0.0
    %v2451 = vmax.f32 %v1505, 0.0
    %v2452 = vmax.f32 %v1507, 0.0
    %v2453 = vmax.f32 %v1659, 0.0
    %v2454 = vmax.f32 %v1661, 0.0
    %v2455 = vmax.f32 %v1813, 0.0
    %v2456 = vmax.f32 %v1815, 0.0
    %v2457 = vmax.f32 %v1967, 0.0
    %v2458 = vmax.f32 %v1969, 0.0
    %v2459 = vmax.f32 %v2121, 0.0
    %v2460 = vmax.f32 %v2123, 0.0
    %v2461 = vmax.f32 %v2275, 0.0
    %v2462 = vmax.f32 %v2277, 0.0
    %v2463 = vmax.f32 %v2429, 0.0
    %v2464 = vmax.f32 %v2431, 0.0
    %v2465 = vld [vmem:[#allocation8] sm:$0xff]
    %v2466 = vld [vmem:[#allocation8 + $0x8] sm:$0xff]
    %v2467 = vld [vmem:[#allocation8 + $0x10] sm:$0xff]
    %v2468 = vld [vmem:[#allocation8 + $0x18] sm:$0xff]
    %v2469 = vld [vmem:[#allocation8 + $0x20] sm:$0xff]
    %v2470 = vld [vmem:[#allocation8 + $0x28] sm:$0xff]
    %v2471 = vld [vmem:[#allocation8 + $0x30] sm:$0xff]
    %v2472 = vld [vmem:[#allocation8 + $0x38] sm:$0xff]
    %v2473 = vld [vmem:[#allocation8 + $0x40] sm:$0xff]
    %v2474 = vld [vmem:[#allocation8 + $0x48] sm:$0xff]
    %v2475 = vld [vmem:[#allocation8 + $0x50] sm:$0xff]
    %v2476 = vld [vmem:[#allocation8 + $0x58] sm:$0xff]
    %v2477 = vld [vmem:[#allocation8 + $0x60] sm:$0xff]
    %v2478 = vld [vmem:[#allocation8 + $0x68] sm:$0xff]
    %v2479 = vld [vmem:[#allocation8 + $0x70] sm:$0xff]
    %v2480 = vld [vmem:[#allocation8 + $0x78] sm:$0xff]
    %v2481 = vld [vmem:[#allocation8 + $0x80] sm:$0xff]
    %v2482 = vld [vmem:[#allocation8 + $0x88] sm:$0xff]
    %v2483 = vld [vmem:[#allocation8 + $0x90] sm:$0xff]
    %v2484 = vld [vmem:[#allocation8 + $0x98] sm:$0xff]
    %v2485 = vld [vmem:[#allocation8 + $0xa0] sm:$0xff]
    %v2486 = vld [vmem:[#allocation8 + $0xa8] sm:$0xff]
    %v2487 = vld [vmem:[#allocation8 + $0xb0] sm:$0xff]
    %v2488 = vld [vmem:[#allocation8 + $0xb8] sm:$0xff]
    %v2489 = vld [vmem:[#allocation8 + $0xc0] sm:$0xff]
    %v2490 = vld [vmem:[#allocation8 + $0xc8] sm:$0xff]
    %v2491 = vld [vmem:[#allocation8 + $0xd0] sm:$0xff]
    %v2492 = vld [vmem:[#allocation8 + $0xd8] sm:$0xff]
    %v2493 = vld [vmem:[#allocation8 + $0xe0] sm:$0xff]
    %v2494 = vld [vmem:[#allocation8 + $0xe8] sm:$0xff]
    %v2495 = vld [vmem:[#allocation8 + $0xf0] sm:$0xff]
    %v2496 = vld [vmem:[#allocation8 + $0xf8] sm:$0xff]
    %v2497 = vld [vmem:[#allocation8 + $0x100] sm:$0xff]
    %v2498 = vld [vmem:[#allocation8 + $0x108] sm:$0xff]
    %v2499 = vld [vmem:[#allocation8 + $0x110] sm:$0xff]
    %v2500 = vld [vmem:[#allocation8 + $0x118] sm:$0xff]
    %v2501 = vld [vmem:[#allocation8 + $0x120] sm:$0xff]
    %v2502 = vld [vmem:[#allocation8 + $0x128] sm:$0xff]
    %v2503 = vld [vmem:[#allocation8 + $0x130] sm:$0xff]
    %v2504 = vld [vmem:[#allocation8 + $0x138] sm:$0xff]
    %v2505 = vld [vmem:[#allocation8 + $0x140] sm:$0xff]
    %v2506 = vld [vmem:[#allocation8 + $0x148] sm:$0xff]
    %v2507 = vld [vmem:[#allocation8 + $0x150] sm:$0xff]
    %v2508 = vld [vmem:[#allocation8 + $0x158] sm:$0xff]
    %v2509 = vld [vmem:[#allocation8 + $0x160] sm:$0xff]
    %v2510 = vld [vmem:[#allocation8 + $0x168] sm:$0xff]
    %v2511 = vld [vmem:[#allocation8 + $0x170] sm:$0xff]
    %v2512 = vld [vmem:[#allocation8 + $0x178] sm:$0xff]
    %v2513 = vld [vmem:[#allocation8 + $0x180] sm:$0xff]
    %v2514 = vld [vmem:[#allocation8 + $0x188] sm:$0xff]
    %v2515 = vld [vmem:[#allocation8 + $0x190] sm:$0xff]
    %v2516 = vld [vmem:[#allocation8 + $0x198] sm:$0xff]
    %v2517 = vld [vmem:[#allocation8 + $0x1a0] sm:$0xff]
    %v2518 = vld [vmem:[#allocation8 + $0x1a8] sm:$0xff]
    %v2519 = vld [vmem:[#allocation8 + $0x1b0] sm:$0xff]
    %v2520 = vld [vmem:[#allocation8 + $0x1b8] sm:$0xff]
    %v2521 = vld [vmem:[#allocation8 + $0x1c0] sm:$0xff]
    %v2522 = vld [vmem:[#allocation8 + $0x1c8] sm:$0xff]
    %v2523 = vld [vmem:[#allocation8 + $0x1d0] sm:$0xff]
    %v2524 = vld [vmem:[#allocation8 + $0x1d8] sm:$0xff]
    %v2525 = vld [vmem:[#allocation8 + $0x1e0] sm:$0xff]
    %v2526 = vld [vmem:[#allocation8 + $0x1e8] sm:$0xff]
    %v2527 = vld [vmem:[#allocation8 + $0x1f0] sm:$0xff]
    %v2528 = vld [vmem:[#allocation8 + $0x1f8] sm:$0xff]
    %v2529 = vld [vmem:[#allocation8 + $0x200] sm:$0xff]
    %v2530 = vld [vmem:[#allocation8 + $0x208] sm:$0xff]
    %v2531 = vld [vmem:[#allocation8 + $0x210] sm:$0xff]
    %v2532 = vld [vmem:[#allocation8 + $0x218] sm:$0xff]
    %v2533 = vld [vmem:[#allocation8 + $0x220] sm:$0xff]
    %v2534 = vld [vmem:[#allocation8 + $0x228] sm:$0xff]
    %v2535 = vld [vmem:[#allocation8 + $0x230] sm:$0xff]
    %v2536 = vld [vmem:[#allocation8 + $0x238] sm:$0xff]
    %v2537 = vld [vmem:[#allocation8 + $0x240] sm:$0xff]
    %v2538 = vld [vmem:[#allocation8 + $0x248] sm:$0xff]
    %v2539 = vld [vmem:[#allocation8 + $0x250] sm:$0xff]
    %v2540 = vld [vmem:[#allocation8 + $0x258] sm:$0xff]
    %v2541 = vld [vmem:[#allocation8 + $0x260] sm:$0xff]
    %v2542 = vld [vmem:[#allocation8 + $0x268] sm:$0xff]
    %v2543 = vld [vmem:[#allocation8 + $0x270] sm:$0xff]
    %v2544 = vld [vmem:[#allocation8 + $0x278] sm:$0xff]
    %v2545 = vld [vmem:[#allocation8 + $0x280] sm:$0xff]
    %v2546 = vld [vmem:[#allocation8 + $0x288] sm:$0xff]
    %v2547 = vld [vmem:[#allocation8 + $0x290] sm:$0xff]
    %v2548 = vld [vmem:[#allocation8 + $0x298] sm:$0xff]
    %v2549 = vld [vmem:[#allocation8 + $0x2a0] sm:$0xff]
    %v2550 = vld [vmem:[#allocation8 + $0x2a8] sm:$0xff]
    %v2551 = vld [vmem:[#allocation8 + $0x2b0] sm:$0xff]
    %v2552 = vld [vmem:[#allocation8 + $0x2b8] sm:$0xff]
    %v2553 = vld [vmem:[#allocation8 + $0x2c0] sm:$0xff]
    %v2554 = vld [vmem:[#allocation8 + $0x2c8] sm:$0xff]
    %v2555 = vld [vmem:[#allocation8 + $0x2d0] sm:$0xff]
    %v2556 = vld [vmem:[#allocation8 + $0x2d8] sm:$0xff]
    %v2557 = vld [vmem:[#allocation8 + $0x2e0] sm:$0xff]
    %v2558 = vld [vmem:[#allocation8 + $0x2e8] sm:$0xff]
    %v2559 = vld [vmem:[#allocation8 + $0x2f0] sm:$0xff]
    %v2560 = vld [vmem:[#allocation8 + $0x2f8] sm:$0xff]
    %v2561 = vld [vmem:[#allocation8 + $0x300] sm:$0xff]
    %v2562 = vld [vmem:[#allocation8 + $0x308] sm:$0xff]
    %v2563 = vld [vmem:[#allocation8 + $0x310] sm:$0xff]
    %v2564 = vld [vmem:[#allocation8 + $0x318] sm:$0xff]
    %v2565 = vld [vmem:[#allocation8 + $0x320] sm:$0xff]
    %v2566 = vld [vmem:[#allocation8 + $0x328] sm:$0xff]
    %v2567 = vld [vmem:[#allocation8 + $0x330] sm:$0xff]
    %v2568 = vld [vmem:[#allocation8 + $0x338] sm:$0xff]
    %v2569 = vld [vmem:[#allocation8 + $0x340] sm:$0xff]
    %v2570 = vld [vmem:[#allocation8 + $0x348] sm:$0xff]
    %v2571 = vld [vmem:[#allocation8 + $0x350] sm:$0xff]
    %v2572 = vld [vmem:[#allocation8 + $0x358] sm:$0xff]
    %v2573 = vld [vmem:[#allocation8 + $0x360] sm:$0xff]
    %v2574 = vld [vmem:[#allocation8 + $0x368] sm:$0xff]
    %v2575 = vld [vmem:[#allocation8 + $0x370] sm:$0xff]
    %v2576 = vld [vmem:[#allocation8 + $0x378] sm:$0xff]
    %v2577 = vld [vmem:[#allocation8 + $0x380] sm:$0xff]
    %v2578 = vld [vmem:[#allocation8 + $0x388] sm:$0xff]
    %v2579 = vld [vmem:[#allocation8 + $0x390] sm:$0xff]
    %v2580 = vld [vmem:[#allocation8 + $0x398] sm:$0xff]
    %v2581 = vld [vmem:[#allocation8 + $0x3a0] sm:$0xff]
    %v2582 = vld [vmem:[#allocation8 + $0x3a8] sm:$0xff]
    %v2583 = vld [vmem:[#allocation8 + $0x3b0] sm:$0xff]
    %v2584 = vld [vmem:[#allocation8 + $0x3b8] sm:$0xff]
    %v2585 = vld [vmem:[#allocation8 + $0x3c0] sm:$0xff]
    %v2586 = vld [vmem:[#allocation8 + $0x3c8] sm:$0xff]
    %v2587 = vld [vmem:[#allocation8 + $0x3d0] sm:$0xff]
    %v2588 = vld [vmem:[#allocation8 + $0x3d8] sm:$0xff]
    %v2589 = vld [vmem:[#allocation8 + $0x3e0] sm:$0xff]
    %v2590 = vld [vmem:[#allocation8 + $0x3e8] sm:$0xff]
    %v2591 = vld [vmem:[#allocation8 + $0x3f0] sm:$0xff]
    %v2592 = vld [vmem:[#allocation8 + $0x3f8] sm:$0xff]
    %v2593 = vld [vmem:[#allocation8 + $0x400] sm:$0xff]
    %v2594 = vld [vmem:[#allocation8 + $0x408] sm:$0xff]
    %v2595 = vld [vmem:[#allocation8 + $0x410] sm:$0xff]
    %v2596 = vld [vmem:[#allocation8 + $0x418] sm:$0xff]
    %v2597 = vld [vmem:[#allocation8 + $0x420] sm:$0xff]
    %v2598 = vld [vmem:[#allocation8 + $0x428] sm:$0xff]
    %v2599 = vld [vmem:[#allocation8 + $0x430] sm:$0xff]
    %v2600 = vld [vmem:[#allocation8 + $0x438] sm:$0xff]
    %v2601 = vld [vmem:[#allocation8 + $0x440] sm:$0xff]
    %v2602 = vld [vmem:[#allocation8 + $0x448] sm:$0xff]
    %v2603 = vld [vmem:[#allocation8 + $0x450] sm:$0xff]
    %v2604 = vld [vmem:[#allocation8 + $0x458] sm:$0xff]
    %v2605 = vld [vmem:[#allocation8 + $0x460] sm:$0xff]
    %v2606 = vld [vmem:[#allocation8 + $0x468] sm:$0xff]
    %v2607 = vld [vmem:[#allocation8 + $0x470] sm:$0xff]
    %v2608 = vld [vmem:[#allocation8 + $0x478] sm:$0xff]
    %v2609 = vld [vmem:[#allocation8 + $0x480] sm:$0xff]
    %v2610 = vld [vmem:[#allocation8 + $0x488] sm:$0xff]
    %v2611 = vld [vmem:[#allocation8 + $0x490] sm:$0xff]
    %v2612 = vld [vmem:[#allocation8 + $0x498] sm:$0xff]
    %v2613 = vld [vmem:[#allocation8 + $0x4a0] sm:$0xff]
    %v2614 = vld [vmem:[#allocation8 + $0x4a8] sm:$0xff]
    %v2615 = vld [vmem:[#allocation8 + $0x4b0] sm:$0xff]
    %v2616 = vld [vmem:[#allocation8 + $0x4b8] sm:$0xff]
    %v2617 = vld [vmem:[#allocation8 + $0x4c0] sm:$0xff]
    %v2618 = vld [vmem:[#allocation8 + $0x4c8] sm:$0xff]
    %v2619 = vld [vmem:[#allocation8 + $0x4d0] sm:$0xff]
    %v2620 = vld [vmem:[#allocation8 + $0x4d8] sm:$0xff]
    %v2621 = vld [vmem:[#allocation8 + $0x4e0] sm:$0xff]
    %v2622 = vld [vmem:[#allocation8 + $0x4e8] sm:$0xff]
    %v2623 = vld [vmem:[#allocation8 + $0x4f0] sm:$0xff]
    %v2624 = vld [vmem:[#allocation8 + $0x4f8] sm:$0xff]
    %v2625 = vld [vmem:[#allocation8 + $0x500] sm:$0xff]
    %v2626 = vld [vmem:[#allocation8 + $0x508] sm:$0xff]
    %v2627 = vld [vmem:[#allocation8 + $0x510] sm:$0xff]
    %v2628 = vld [vmem:[#allocation8 + $0x518] sm:$0xff]
    %v2629 = vld [vmem:[#allocation8 + $0x520] sm:$0xff]
    %v2630 = vld [vmem:[#allocation8 + $0x528] sm:$0xff]
    %v2631 = vld [vmem:[#allocation8 + $0x530] sm:$0xff]
    %v2632 = vld [vmem:[#allocation8 + $0x538] sm:$0xff]
    %v2633 = vld [vmem:[#allocation8 + $0x540] sm:$0xff]
    %v2634 = vld [vmem:[#allocation8 + $0x548] sm:$0xff]
    %v2635 = vld [vmem:[#allocation8 + $0x550] sm:$0xff]
    %v2636 = vld [vmem:[#allocation8 + $0x558] sm:$0xff]
    %v2637 = vld [vmem:[#allocation8 + $0x560] sm:$0xff]
    %v2638 = vld [vmem:[#allocation8 + $0x568] sm:$0xff]
    %v2639 = vld [vmem:[#allocation8 + $0x570] sm:$0xff]
    %v2640 = vld [vmem:[#allocation8 + $0x578] sm:$0xff]
    %v2641 = vld [vmem:[#allocation8 + $0x580] sm:$0xff]
    %v2642 = vld [vmem:[#allocation8 + $0x588] sm:$0xff]
    %v2643 = vld [vmem:[#allocation8 + $0x590] sm:$0xff]
    %v2644 = vld [vmem:[#allocation8 + $0x598] sm:$0xff]
    %v2645 = vld [vmem:[#allocation8 + $0x5a0] sm:$0xff]
    %v2646 = vld [vmem:[#allocation8 + $0x5a8] sm:$0xff]
    %v2647 = vld [vmem:[#allocation8 + $0x5b0] sm:$0xff]
    %v2648 = vld [vmem:[#allocation8 + $0x5b8] sm:$0xff]
    %v2649 = vld [vmem:[#allocation8 + $0x5c0] sm:$0xff]
    %v2650 = vld [vmem:[#allocation8 + $0x5c8] sm:$0xff]
    %v2651 = vld [vmem:[#allocation8 + $0x5d0] sm:$0xff]
    %v2652 = vld [vmem:[#allocation8 + $0x5d8] sm:$0xff]
    %v2653 = vld [vmem:[#allocation8 + $0x5e0] sm:$0xff]
    %v2654 = vld [vmem:[#allocation8 + $0x5e8] sm:$0xff]
    %v2655 = vld [vmem:[#allocation8 + $0x5f0] sm:$0xff]
    %v2656 = vld [vmem:[#allocation8 + $0x5f8] sm:$0xff]
    %v2657 = vld [vmem:[#allocation8 + $0x600] sm:$0xff]
    %v2658 = vld [vmem:[#allocation8 + $0x608] sm:$0xff]
    %v2659 = vld [vmem:[#allocation8 + $0x610] sm:$0xff]
    %v2660 = vld [vmem:[#allocation8 + $0x618] sm:$0xff]
    %v2661 = vld [vmem:[#allocation8 + $0x620] sm:$0xff]
    %v2662 = vld [vmem:[#allocation8 + $0x628] sm:$0xff]
    %v2663 = vld [vmem:[#allocation8 + $0x630] sm:$0xff]
    %v2664 = vld [vmem:[#allocation8 + $0x638] sm:$0xff]
    %v2665 = vld [vmem:[#allocation8 + $0x640] sm:$0xff]
    %v2666 = vld [vmem:[#allocation8 + $0x648] sm:$0xff]
    %v2667 = vld [vmem:[#allocation8 + $0x650] sm:$0xff]
    %v2668 = vld [vmem:[#allocation8 + $0x658] sm:$0xff]
    %v2669 = vld [vmem:[#allocation8 + $0x660] sm:$0xff]
    %v2670 = vld [vmem:[#allocation8 + $0x668] sm:$0xff]
    %v2671 = vld [vmem:[#allocation8 + $0x670] sm:$0xff]
    %v2672 = vld [vmem:[#allocation8 + $0x678] sm:$0xff]
    %v2673 = vld [vmem:[#allocation8 + $0x680] sm:$0xff]
    %v2674 = vld [vmem:[#allocation8 + $0x688] sm:$0xff]
    %v2675 = vld [vmem:[#allocation8 + $0x690] sm:$0xff]
    %v2676 = vld [vmem:[#allocation8 + $0x698] sm:$0xff]
    %v2677 = vld [vmem:[#allocation8 + $0x6a0] sm:$0xff]
    %v2678 = vld [vmem:[#allocation8 + $0x6a8] sm:$0xff]
    %v2679 = vld [vmem:[#allocation8 + $0x6b0] sm:$0xff]
    %v2680 = vld [vmem:[#allocation8 + $0x6b8] sm:$0xff]
    %v2681 = vld [vmem:[#allocation8 + $0x6c0] sm:$0xff]
    %v2682 = vld [vmem:[#allocation8 + $0x6c8] sm:$0xff]
    %v2683 = vld [vmem:[#allocation8 + $0x6d0] sm:$0xff]
    %v2684 = vld [vmem:[#allocation8 + $0x6d8] sm:$0xff]
    %v2685 = vld [vmem:[#allocation8 + $0x6e0] sm:$0xff]
    %v2686 = vld [vmem:[#allocation8 + $0x6e8] sm:$0xff]
    %v2687 = vld [vmem:[#allocation8 + $0x6f0] sm:$0xff]
    %v2688 = vld [vmem:[#allocation8 + $0x6f8] sm:$0xff]
    %v2689 = vld [vmem:[#allocation8 + $0x700] sm:$0xff]
    %v2690 = vld [vmem:[#allocation8 + $0x708] sm:$0xff]
    %v2691 = vld [vmem:[#allocation8 + $0x710] sm:$0xff]
    %v2692 = vld [vmem:[#allocation8 + $0x718] sm:$0xff]
    %v2693 = vld [vmem:[#allocation8 + $0x720] sm:$0xff]
    %v2694 = vld [vmem:[#allocation8 + $0x728] sm:$0xff]
    %v2695 = vld [vmem:[#allocation8 + $0x730] sm:$0xff]
    %v2696 = vld [vmem:[#allocation8 + $0x738] sm:$0xff]
    %v2697 = vld [vmem:[#allocation8 + $0x740] sm:$0xff]
    %v2698 = vld [vmem:[#allocation8 + $0x748] sm:$0xff]
    %v2699 = vld [vmem:[#allocation8 + $0x750] sm:$0xff]
    %v2700 = vld [vmem:[#allocation8 + $0x758] sm:$0xff]
    %v2701 = vld [vmem:[#allocation8 + $0x760] sm:$0xff]
    %v2702 = vld [vmem:[#allocation8 + $0x768] sm:$0xff]
    %v2703 = vld [vmem:[#allocation8 + $0x770] sm:$0xff]
    %v2704 = vld [vmem:[#allocation8 + $0x778] sm:$0xff]
    %v2705 = vld [vmem:[#allocation8 + $0x780] sm:$0xff]
    %v2706 = vld [vmem:[#allocation8 + $0x788] sm:$0xff]
    %v2707 = vld [vmem:[#allocation8 + $0x790] sm:$0xff]
    %v2708 = vld [vmem:[#allocation8 + $0x798] sm:$0xff]
    %v2709 = vld [vmem:[#allocation8 + $0x7a0] sm:$0xff]
    %v2710 = vld [vmem:[#allocation8 + $0x7a8] sm:$0xff]
    %v2711 = vld [vmem:[#allocation8 + $0x7b0] sm:$0xff]
    %v2712 = vld [vmem:[#allocation8 + $0x7b8] sm:$0xff]
    %v2713 = vld [vmem:[#allocation8 + $0x7c0] sm:$0xff]
    %v2714 = vld [vmem:[#allocation8 + $0x7c8] sm:$0xff]
    %v2715 = vld [vmem:[#allocation8 + $0x7d0] sm:$0xff]
    %v2716 = vld [vmem:[#allocation8 + $0x7d8] sm:$0xff]
    %v2717 = vld [vmem:[#allocation8 + $0x7e0] sm:$0xff]
    %v2718 = vld [vmem:[#allocation8 + $0x7e8] sm:$0xff]
    %v2719 = vld [vmem:[#allocation8 + $0x7f0] sm:$0xff]
    %v2720 = vld [vmem:[#allocation8 + $0x7f8] sm:$0xff]
    %v2721 = vld [vmem:[#allocation8 + $0x800] sm:$0xff]
    %v2722 = vld [vmem:[#allocation8 + $0x808] sm:$0xff]
    %v2723 = vld [vmem:[#allocation8 + $0x810] sm:$0xff]
    %v2724 = vld [vmem:[#allocation8 + $0x818] sm:$0xff]
    %v2725 = vld [vmem:[#allocation8 + $0x820] sm:$0xff]
    %v2726 = vld [vmem:[#allocation8 + $0x828] sm:$0xff]
    %v2727 = vld [vmem:[#allocation8 + $0x830] sm:$0xff]
    %v2728 = vld [vmem:[#allocation8 + $0x838] sm:$0xff]
    %v2729 = vld [vmem:[#allocation8 + $0x840] sm:$0xff]
    %v2730 = vld [vmem:[#allocation8 + $0x848] sm:$0xff]
    %v2731 = vld [vmem:[#allocation8 + $0x850] sm:$0xff]
    %v2732 = vld [vmem:[#allocation8 + $0x858] sm:$0xff]
    %v2733 = vld [vmem:[#allocation8 + $0x860] sm:$0xff]
    %v2734 = vld [vmem:[#allocation8 + $0x868] sm:$0xff]
    %v2735 = vld [vmem:[#allocation8 + $0x870] sm:$0xff]
    %v2736 = vld [vmem:[#allocation8 + $0x878] sm:$0xff]
    %v2737 = vld [vmem:[#allocation8 + $0x880] sm:$0xff]
    %v2738 = vld [vmem:[#allocation8 + $0x888] sm:$0xff]
    %v2739 = vld [vmem:[#allocation8 + $0x890] sm:$0xff]
    %v2740 = vld [vmem:[#allocation8 + $0x898] sm:$0xff]
    %v2741 = vld [vmem:[#allocation8 + $0x8a0] sm:$0xff]
    %v2742 = vld [vmem:[#allocation8 + $0x8a8] sm:$0xff]
    %v2743 = vld [vmem:[#allocation8 + $0x8b0] sm:$0xff]
    %v2744 = vld [vmem:[#allocation8 + $0x8b8] sm:$0xff]
    %v2745 = vld [vmem:[#allocation8 + $0x8c0] sm:$0xff]
    %v2746 = vld [vmem:[#allocation8 + $0x8c8] sm:$0xff]
    %v2747 = vld [vmem:[#allocation8 + $0x8d0] sm:$0xff]
    %v2748 = vld [vmem:[#allocation8 + $0x8d8] sm:$0xff]
    %v2749 = vld [vmem:[#allocation8 + $0x8e0] sm:$0xff]
    %v2750 = vld [vmem:[#allocation8 + $0x8e8] sm:$0xff]
    %v2751 = vld [vmem:[#allocation8 + $0x8f0] sm:$0xff]
    %v2752 = vld [vmem:[#allocation8 + $0x8f8] sm:$0xff]
    %v2753 = vld [vmem:[#allocation8 + $0x900] sm:$0xff]
    %v2754 = vld [vmem:[#allocation8 + $0x908] sm:$0xff]
    %v2755 = vld [vmem:[#allocation8 + $0x910] sm:$0xff]
    %v2756 = vld [vmem:[#allocation8 + $0x918] sm:$0xff]
    %v2757 = vld [vmem:[#allocation8 + $0x920] sm:$0xff]
    %v2758 = vld [vmem:[#allocation8 + $0x928] sm:$0xff]
    %v2759 = vld [vmem:[#allocation8 + $0x930] sm:$0xff]
    %v2760 = vld [vmem:[#allocation8 + $0x938] sm:$0xff]
    %v2761 = vld [vmem:[#allocation8 + $0x940] sm:$0xff]
    %v2762 = vld [vmem:[#allocation8 + $0x948] sm:$0xff]
    %v2763 = vld [vmem:[#allocation8 + $0x950] sm:$0xff]
    %v2764 = vld [vmem:[#allocation8 + $0x958] sm:$0xff]
    %v2765 = vld [vmem:[#allocation8 + $0x960] sm:$0xff]
    %v2766 = vld [vmem:[#allocation8 + $0x968] sm:$0xff]
    %v2767 = vld [vmem:[#allocation8 + $0x970] sm:$0xff]
    %v2768 = vld [vmem:[#allocation8 + $0x978] sm:$0xff]
    %v2769 = vld [vmem:[#allocation8 + $0x980] sm:$0xff]
    %v2770 = vld [vmem:[#allocation8 + $0x988] sm:$0xff]
    %v2771 = vld [vmem:[#allocation8 + $0x990] sm:$0xff]
    %v2772 = vld [vmem:[#allocation8 + $0x998] sm:$0xff]
    %v2773 = vld [vmem:[#allocation8 + $0x9a0] sm:$0xff]
    %v2774 = vld [vmem:[#allocation8 + $0x9a8] sm:$0xff]
    %v2775 = vld [vmem:[#allocation8 + $0x9b0] sm:$0xff]
    %v2776 = vld [vmem:[#allocation8 + $0x9b8] sm:$0xff]
    %v2777 = vld [vmem:[#allocation8 + $0x9c0] sm:$0xff]
    %v2778 = vld [vmem:[#allocation8 + $0x9c8] sm:$0xff]
    %v2779 = vld [vmem:[#allocation8 + $0x9d0] sm:$0xff]
    %v2780 = vld [vmem:[#allocation8 + $0x9d8] sm:$0xff]
    %v2781 = vld [vmem:[#allocation8 + $0x9e0] sm:$0xff]
    %v2782 = vld [vmem:[#allocation8 + $0x9e8] sm:$0xff]
    %v2783 = vld [vmem:[#allocation8 + $0x9f0] sm:$0xff]
    %v2784 = vld [vmem:[#allocation8 + $0x9f8] sm:$0xff]
    %v2785 = vld [vmem:[#allocation8 + $0xa00] sm:$0xff]
    %v2786 = vld [vmem:[#allocation8 + $0xa08] sm:$0xff]
    %v2787 = vld [vmem:[#allocation8 + $0xa10] sm:$0xff]
    %v2788 = vld [vmem:[#allocation8 + $0xa18] sm:$0xff]
    %v2789 = vld [vmem:[#allocation8 + $0xa20] sm:$0xff]
    %v2790 = vld [vmem:[#allocation8 + $0xa28] sm:$0xff]
    %v2791 = vld [vmem:[#allocation8 + $0xa30] sm:$0xff]
    %v2792 = vld [vmem:[#allocation8 + $0xa38] sm:$0xff]
    %v2793 = vld [vmem:[#allocation8 + $0xa40] sm:$0xff]
    %v2794 = vld [vmem:[#allocation8 + $0xa48] sm:$0xff]
    %v2795 = vld [vmem:[#allocation8 + $0xa50] sm:$0xff]
    %v2796 = vld [vmem:[#allocation8 + $0xa58] sm:$0xff]
    %v2797 = vld [vmem:[#allocation8 + $0xa60] sm:$0xff]
    %v2798 = vld [vmem:[#allocation8 + $0xa68] sm:$0xff]
    %v2799 = vld [vmem:[#allocation8 + $0xa70] sm:$0xff]
    %v2800 = vld [vmem:[#allocation8 + $0xa78] sm:$0xff]
    %v2801 = vld [vmem:[#allocation8 + $0xa80] sm:$0xff]
    %v2802 = vld [vmem:[#allocation8 + $0xa88] sm:$0xff]
    %v2803 = vld [vmem:[#allocation8 + $0xa90] sm:$0xff]
    %v2804 = vld [vmem:[#allocation8 + $0xa98] sm:$0xff]
    %v2805 = vld [vmem:[#allocation8 + $0xaa0] sm:$0xff]
    %v2806 = vld [vmem:[#allocation8 + $0xaa8] sm:$0xff]
    %v2807 = vld [vmem:[#allocation8 + $0xab0] sm:$0xff]
    %v2808 = vld [vmem:[#allocation8 + $0xab8] sm:$0xff]
    %v2809 = vld [vmem:[#allocation8 + $0xac0] sm:$0xff]
    %v2810 = vld [vmem:[#allocation8 + $0xac8] sm:$0xff]
    %v2811 = vld [vmem:[#allocation8 + $0xad0] sm:$0xff]
    %v2812 = vld [vmem:[#allocation8 + $0xad8] sm:$0xff]
    %v2813 = vld [vmem:[#allocation8 + $0xae0] sm:$0xff]
    %v2814 = vld [vmem:[#allocation8 + $0xae8] sm:$0xff]
    %v2815 = vld [vmem:[#allocation8 + $0xaf0] sm:$0xff]
    %v2816 = vld [vmem:[#allocation8 + $0xaf8] sm:$0xff]
    %v2817 = vld [vmem:[#allocation8 + $0xb00] sm:$0xff]
    %v2818 = vld [vmem:[#allocation8 + $0xb08] sm:$0xff]
    %v2819 = vld [vmem:[#allocation8 + $0xb10] sm:$0xff]
    %v2820 = vld [vmem:[#allocation8 + $0xb18] sm:$0xff]
    %v2821 = vld [vmem:[#allocation8 + $0xb20] sm:$0xff]
    %v2822 = vld [vmem:[#allocation8 + $0xb28] sm:$0xff]
    %v2823 = vld [vmem:[#allocation8 + $0xb30] sm:$0xff]
    %v2824 = vld [vmem:[#allocation8 + $0xb38] sm:$0xff]
    %v2825 = vld [vmem:[#allocation8 + $0xb40] sm:$0xff]
    %v2826 = vld [vmem:[#allocation8 + $0xb48] sm:$0xff]
    %v2827 = vld [vmem:[#allocation8 + $0xb50] sm:$0xff]
    %v2828 = vld [vmem:[#allocation8 + $0xb58] sm:$0xff]
    %v2829 = vld [vmem:[#allocation8 + $0xb60] sm:$0xff]
    %v2830 = vld [vmem:[#allocation8 + $0xb68] sm:$0xff]
    %v2831 = vld [vmem:[#allocation8 + $0xb70] sm:$0xff]
    %v2832 = vld [vmem:[#allocation8 + $0xb78] sm:$0xff]
    %v2833 = vld [vmem:[#allocation8 + $0xb80] sm:$0xff]
    %v2834 = vld [vmem:[#allocation8 + $0xb88] sm:$0xff]
    %v2835 = vld [vmem:[#allocation8 + $0xb90] sm:$0xff]
    %v2836 = vld [vmem:[#allocation8 + $0xb98] sm:$0xff]
    %v2837 = vld [vmem:[#allocation8 + $0xba0] sm:$0xff]
    %v2838 = vld [vmem:[#allocation8 + $0xba8] sm:$0xff]
    %v2839 = vld [vmem:[#allocation8 + $0xbb0] sm:$0xff]
    %v2840 = vld [vmem:[#allocation8 + $0xbb8] sm:$0xff]
    %v2841 = vld [vmem:[#allocation8 + $0xbc0] sm:$0xff]
    %v2842 = vld [vmem:[#allocation8 + $0xbc8] sm:$0xff]
    %v2843 = vld [vmem:[#allocation8 + $0xbd0] sm:$0xff]
    %v2844 = vld [vmem:[#allocation8 + $0xbd8] sm:$0xff]
    %v2845 = vld [vmem:[#allocation8 + $0xbe0] sm:$0xff]
    %v2846 = vld [vmem:[#allocation8 + $0xbe8] sm:$0xff]
    %v2847 = vld [vmem:[#allocation8 + $0xbf0] sm:$0xff]
    %v2848 = vld [vmem:[#allocation8 + $0xbf8] sm:$0xff]
    %v2849 = vld [vmem:[#allocation8 + $0xc00] sm:$0xff]
    %v2850 = vld [vmem:[#allocation8 + $0xc08] sm:$0xff]
    %v2851 = vld [vmem:[#allocation8 + $0xc10] sm:$0xff]
    %v2852 = vld [vmem:[#allocation8 + $0xc18] sm:$0xff]
    %v2853 = vld [vmem:[#allocation8 + $0xc20] sm:$0xff]
    %v2854 = vld [vmem:[#allocation8 + $0xc28] sm:$0xff]
    %v2855 = vld [vmem:[#allocation8 + $0xc30] sm:$0xff]
    %v2856 = vld [vmem:[#allocation8 + $0xc38] sm:$0xff]
    %v2857 = vld [vmem:[#allocation8 + $0xc40] sm:$0xff]
    %v2858 = vld [vmem:[#allocation8 + $0xc48] sm:$0xff]
    %v2859 = vld [vmem:[#allocation8 + $0xc50] sm:$0xff]
    %v2860 = vld [vmem:[#allocation8 + $0xc58] sm:$0xff]
    %v2861 = vld [vmem:[#allocation8 + $0xc60] sm:$0xff]
    %v2862 = vld [vmem:[#allocation8 + $0xc68] sm:$0xff]
    %v2863 = vld [vmem:[#allocation8 + $0xc70] sm:$0xff]
    %v2864 = vld [vmem:[#allocation8 + $0xc78] sm:$0xff]
    %v2865 = vld [vmem:[#allocation8 + $0xc80] sm:$0xff]
    %v2866 = vld [vmem:[#allocation8 + $0xc88] sm:$0xff]
    %v2867 = vld [vmem:[#allocation8 + $0xc90] sm:$0xff]
    %v2868 = vld [vmem:[#allocation8 + $0xc98] sm:$0xff]
    %v2869 = vld [vmem:[#allocation8 + $0xca0] sm:$0xff]
    %v2870 = vld [vmem:[#allocation8 + $0xca8] sm:$0xff]
    %v2871 = vld [vmem:[#allocation8 + $0xcb0] sm:$0xff]
    %v2872 = vld [vmem:[#allocation8 + $0xcb8] sm:$0xff]
    %v2873 = vld [vmem:[#allocation8 + $0xcc0] sm:$0xff]
    %v2874 = vld [vmem:[#allocation8 + $0xcc8] sm:$0xff]
    %v2875 = vld [vmem:[#allocation8 + $0xcd0] sm:$0xff]
    %v2876 = vld [vmem:[#allocation8 + $0xcd8] sm:$0xff]
    %v2877 = vld [vmem:[#allocation8 + $0xce0] sm:$0xff]
    %v2878 = vld [vmem:[#allocation8 + $0xce8] sm:$0xff]
    %v2879 = vld [vmem:[#allocation8 + $0xcf0] sm:$0xff]
    %v2880 = vld [vmem:[#allocation8 + $0xcf8] sm:$0xff]
    %v2881 = vld [vmem:[#allocation8 + $0xd00] sm:$0xff]
    %v2882 = vld [vmem:[#allocation8 + $0xd08] sm:$0xff]
    %v2883 = vld [vmem:[#allocation8 + $0xd10] sm:$0xff]
    %v2884 = vld [vmem:[#allocation8 + $0xd18] sm:$0xff]
    %v2885 = vld [vmem:[#allocation8 + $0xd20] sm:$0xff]
    %v2886 = vld [vmem:[#allocation8 + $0xd28] sm:$0xff]
    %v2887 = vld [vmem:[#allocation8 + $0xd30] sm:$0xff]
    %v2888 = vld [vmem:[#allocation8 + $0xd38] sm:$0xff]
    %v2889 = vld [vmem:[#allocation8 + $0xd40] sm:$0xff]
    %v2890 = vld [vmem:[#allocation8 + $0xd48] sm:$0xff]
    %v2891 = vld [vmem:[#allocation8 + $0xd50] sm:$0xff]
    %v2892 = vld [vmem:[#allocation8 + $0xd58] sm:$0xff]
    %v2893 = vld [vmem:[#allocation8 + $0xd60] sm:$0xff]
    %v2894 = vld [vmem:[#allocation8 + $0xd68] sm:$0xff]
    %v2895 = vld [vmem:[#allocation8 + $0xd70] sm:$0xff]
    %v2896 = vld [vmem:[#allocation8 + $0xd78] sm:$0xff]
    %v2897 = vld [vmem:[#allocation8 + $0xd80] sm:$0xff]
    %v2898 = vld [vmem:[#allocation8 + $0xd88] sm:$0xff]
    %v2899 = vld [vmem:[#allocation8 + $0xd90] sm:$0xff]
    %v2900 = vld [vmem:[#allocation8 + $0xd98] sm:$0xff]
    %v2901 = vld [vmem:[#allocation8 + $0xda0] sm:$0xff]
    %v2902 = vld [vmem:[#allocation8 + $0xda8] sm:$0xff]
    %v2903 = vld [vmem:[#allocation8 + $0xdb0] sm:$0xff]
    %v2904 = vld [vmem:[#allocation8 + $0xdb8] sm:$0xff]
    %v2905 = vld [vmem:[#allocation8 + $0xdc0] sm:$0xff]
    %v2906 = vld [vmem:[#allocation8 + $0xdc8] sm:$0xff]
    %v2907 = vld [vmem:[#allocation8 + $0xdd0] sm:$0xff]
    %v2908 = vld [vmem:[#allocation8 + $0xdd8] sm:$0xff]
    %v2909 = vld [vmem:[#allocation8 + $0xde0] sm:$0xff]
    %v2910 = vld [vmem:[#allocation8 + $0xde8] sm:$0xff]
    %v2911 = vld [vmem:[#allocation8 + $0xdf0] sm:$0xff]
    %v2912 = vld [vmem:[#allocation8 + $0xdf8] sm:$0xff]
    %v2913 = vld [vmem:[#allocation8 + $0xe00] sm:$0xff]
    %v2914 = vld [vmem:[#allocation8 + $0xe08] sm:$0xff]
    %v2915 = vld [vmem:[#allocation8 + $0xe10] sm:$0xff]
    %v2916 = vld [vmem:[#allocation8 + $0xe18] sm:$0xff]
    %v2917 = vld [vmem:[#allocation8 + $0xe20] sm:$0xff]
    %v2918 = vld [vmem:[#allocation8 + $0xe28] sm:$0xff]
    %v2919 = vld [vmem:[#allocation8 + $0xe30] sm:$0xff]
    %v2920 = vld [vmem:[#allocation8 + $0xe38] sm:$0xff]
    %v2921 = vld [vmem:[#allocation8 + $0xe40] sm:$0xff]
    %v2922 = vld [vmem:[#allocation8 + $0xe48] sm:$0xff]
    %v2923 = vld [vmem:[#allocation8 + $0xe50] sm:$0xff]
    %v2924 = vld [vmem:[#allocation8 + $0xe58] sm:$0xff]
    %v2925 = vld [vmem:[#allocation8 + $0xe60] sm:$0xff]
    %v2926 = vld [vmem:[#allocation8 + $0xe68] sm:$0xff]
    %v2927 = vld [vmem:[#allocation8 + $0xe70] sm:$0xff]
    %v2928 = vld [vmem:[#allocation8 + $0xe78] sm:$0xff]
    %v2929 = vld [vmem:[#allocation8 + $0xe80] sm:$0xff]
    %v2930 = vld [vmem:[#allocation8 + $0xe88] sm:$0xff]
    %v2931 = vld [vmem:[#allocation8 + $0xe90] sm:$0xff]
    %v2932 = vld [vmem:[#allocation8 + $0xe98] sm:$0xff]
    %v2933 = vld [vmem:[#allocation8 + $0xea0] sm:$0xff]
    %v2934 = vld [vmem:[#allocation8 + $0xea8] sm:$0xff]
    %v2935 = vld [vmem:[#allocation8 + $0xeb0] sm:$0xff]
    %v2936 = vld [vmem:[#allocation8 + $0xeb8] sm:$0xff]
    %v2937 = vld [vmem:[#allocation8 + $0xec0] sm:$0xff]
    %v2938 = vld [vmem:[#allocation8 + $0xec8] sm:$0xff]
    %v2939 = vld [vmem:[#allocation8 + $0xed0] sm:$0xff]
    %v2940 = vld [vmem:[#allocation8 + $0xed8] sm:$0xff]
    %v2941 = vld [vmem:[#allocation8 + $0xee0] sm:$0xff]
    %v2942 = vld [vmem:[#allocation8 + $0xee8] sm:$0xff]
    %v2943 = vld [vmem:[#allocation8 + $0xef0] sm:$0xff]
    %v2944 = vld [vmem:[#allocation8 + $0xef8] sm:$0xff]
    %v2945 = vld [vmem:[#allocation8 + $0xf00] sm:$0xff]
    %v2946 = vld [vmem:[#allocation8 + $0xf08] sm:$0xff]
    %v2947 = vld [vmem:[#allocation8 + $0xf10] sm:$0xff]
    %v2948 = vld [vmem:[#allocation8 + $0xf18] sm:$0xff]
    %v2949 = vld [vmem:[#allocation8 + $0xf20] sm:$0xff]
    %v2950 = vld [vmem:[#allocation8 + $0xf28] sm:$0xff]
    %v2951 = vld [vmem:[#allocation8 + $0xf30] sm:$0xff]
    %v2952 = vld [vmem:[#allocation8 + $0xf38] sm:$0xff]
    %v2953 = vld [vmem:[#allocation8 + $0xf40] sm:$0xff]
    %v2954 = vld [vmem:[#allocation8 + $0xf48] sm:$0xff]
    %v2955 = vld [vmem:[#allocation8 + $0xf50] sm:$0xff]
    %v2956 = vld [vmem:[#allocation8 + $0xf58] sm:$0xff]
    %v2957 = vld [vmem:[#allocation8 + $0xf60] sm:$0xff]
    %v2958 = vld [vmem:[#allocation8 + $0xf68] sm:$0xff]
    %v2959 = vld [vmem:[#allocation8 + $0xf70] sm:$0xff]
    %v2960 = vld [vmem:[#allocation8 + $0xf78] sm:$0xff]
    %v2961 = vld [vmem:[#allocation8 + $0xf80] sm:$0xff]
    %v2962 = vld [vmem:[#allocation8 + $0xf88] sm:$0xff]
    %v2963 = vld [vmem:[#allocation8 + $0xf90] sm:$0xff]
    %v2964 = vld [vmem:[#allocation8 + $0xf98] sm:$0xff]
    %v2965 = vld [vmem:[#allocation8 + $0xfa0] sm:$0xff]
    %v2966 = vld [vmem:[#allocation8 + $0xfa8] sm:$0xff]
    %v2967 = vld [vmem:[#allocation8 + $0xfb0] sm:$0xff]
    %v2968 = vld [vmem:[#allocation8 + $0xfb8] sm:$0xff]
    %v2969 = vld [vmem:[#allocation8 + $0xfc0] sm:$0xff]
    %v2970 = vld [vmem:[#allocation8 + $0xfc8] sm:$0xff]
    %v2971 = vld [vmem:[#allocation8 + $0xfd0] sm:$0xff]
    %v2972 = vld [vmem:[#allocation8 + $0xfd8] sm:$0xff]
    %v2973 = vld [vmem:[#allocation8 + $0xfe0] sm:$0xff]
    %v2974 = vld [vmem:[#allocation8 + $0xfe8] sm:$0xff]
    %v2975 = vld [vmem:[#allocation8 + $0xff0] sm:$0xff]
    %v2976 = vld [vmem:[#allocation8 + $0xff8] sm:$0xff]
    %v2977 = vld [vmem:[#allocation8 + $0x1000] sm:$0xff]
    %v2978 = vld [vmem:[#allocation8 + $0x1008] sm:$0xff]
    %v2979 = vld [vmem:[#allocation8 + $0x1010] sm:$0xff]
    %v2980 = vld [vmem:[#allocation8 + $0x1018] sm:$0xff]
    %v2981 = vld [vmem:[#allocation8 + $0x1020] sm:$0xff]
    %v2982 = vld [vmem:[#allocation8 + $0x1028] sm:$0xff]
    %v2983 = vld [vmem:[#allocation8 + $0x1030] sm:$0xff]
    %v2984 = vld [vmem:[#allocation8 + $0x1038] sm:$0xff]
    %v2985 = vld [vmem:[#allocation8 + $0x1040] sm:$0xff]
    %v2986 = vld [vmem:[#allocation8 + $0x1048] sm:$0xff]
    %v2987 = vld [vmem:[#allocation8 + $0x1050] sm:$0xff]
    %v2988 = vld [vmem:[#allocation8 + $0x1058] sm:$0xff]
    %v2989 = vld [vmem:[#allocation8 + $0x1060] sm:$0xff]
    %v2990 = vld [vmem:[#allocation8 + $0x1068] sm:$0xff]
    %v2991 = vld [vmem:[#allocation8 + $0x1070] sm:$0xff]
    %v2992 = vld [vmem:[#allocation8 + $0x1078] sm:$0xff]
    %v2993 = vld [vmem:[#allocation8 + $0x1080] sm:$0xff]
    %v2994 = vld [vmem:[#allocation8 + $0x1088] sm:$0xff]
    %v2995 = vld [vmem:[#allocation8 + $0x1090] sm:$0xff]
    %v2996 = vld [vmem:[#allocation8 + $0x1098] sm:$0xff]
    %v2997 = vld [vmem:[#allocation8 + $0x10a0] sm:$0xff]
    %v2998 = vld [vmem:[#allocation8 + $0x10a8] sm:$0xff]
    %v2999 = vld [vmem:[#allocation8 + $0x10b0] sm:$0xff]
    %v3000 = vld [vmem:[#allocation8 + $0x10b8] sm:$0xff]
    %v3001 = vld [vmem:[#allocation8 + $0x10c0] sm:$0xff]
    %v3002 = vld [vmem:[#allocation8 + $0x10c8] sm:$0xff]
    %v3003 = vld [vmem:[#allocation8 + $0x10d0] sm:$0xff]
    %v3004 = vld [vmem:[#allocation8 + $0x10d8] sm:$0xff]
    %v3005 = vld [vmem:[#allocation8 + $0x10e0] sm:$0xff]
    %v3006 = vld [vmem:[#allocation8 + $0x10e8] sm:$0xff]
    %v3007 = vld [vmem:[#allocation8 + $0x10f0] sm:$0xff]
    %v3008 = vld [vmem:[#allocation8 + $0x10f8] sm:$0xff]
    %v3009 = vld [vmem:[#allocation8 + $0x1100] sm:$0xff]
    %v3010 = vld [vmem:[#allocation8 + $0x1108] sm:$0xff]
    %v3011 = vld [vmem:[#allocation8 + $0x1110] sm:$0xff]
    %v3012 = vld [vmem:[#allocation8 + $0x1118] sm:$0xff]
    %v3013 = vld [vmem:[#allocation8 + $0x1120] sm:$0xff]
    %v3014 = vld [vmem:[#allocation8 + $0x1128] sm:$0xff]
    %v3015 = vld [vmem:[#allocation8 + $0x1130] sm:$0xff]
    %v3016 = vld [vmem:[#allocation8 + $0x1138] sm:$0xff]
    %v3017 = vld [vmem:[#allocation8 + $0x1140] sm:$0xff]
    %v3018 = vld [vmem:[#allocation8 + $0x1148] sm:$0xff]
    %v3019 = vld [vmem:[#allocation8 + $0x1150] sm:$0xff]
    %v3020 = vld [vmem:[#allocation8 + $0x1158] sm:$0xff]
    %v3021 = vld [vmem:[#allocation8 + $0x1160] sm:$0xff]
    %v3022 = vld [vmem:[#allocation8 + $0x1168] sm:$0xff]
    %v3023 = vld [vmem:[#allocation8 + $0x1170] sm:$0xff]
    %v3024 = vld [vmem:[#allocation8 + $0x1178] sm:$0xff]
    %v3025 = vld [vmem:[#allocation8 + $0x1180] sm:$0xff]
    %v3026 = vld [vmem:[#allocation8 + $0x1188] sm:$0xff]
    %v3027 = vld [vmem:[#allocation8 + $0x1190] sm:$0xff]
    %v3028 = vld [vmem:[#allocation8 + $0x1198] sm:$0xff]
    %v3029 = vld [vmem:[#allocation8 + $0x11a0] sm:$0xff]
    %v3030 = vld [vmem:[#allocation8 + $0x11a8] sm:$0xff]
    %v3031 = vld [vmem:[#allocation8 + $0x11b0] sm:$0xff]
    %v3032 = vld [vmem:[#allocation8 + $0x11b8] sm:$0xff]
    %v3033 = vld [vmem:[#allocation8 + $0x11c0] sm:$0xff]
    %v3034 = vld [vmem:[#allocation8 + $0x11c8] sm:$0xff]
    %v3035 = vld [vmem:[#allocation8 + $0x11d0] sm:$0xff]
    %v3036 = vld [vmem:[#allocation8 + $0x11d8] sm:$0xff]
    %v3037 = vld [vmem:[#allocation8 + $0x11e0] sm:$0xff]
    %v3038 = vld [vmem:[#allocation8 + $0x11e8] sm:$0xff]
    %v3039 = vld [vmem:[#allocation8 + $0x11f0] sm:$0xff]
    %v3040 = vld [vmem:[#allocation8 + $0x11f8] sm:$0xff]
    %v3041 = vld [vmem:[#allocation8 + $0x1200] sm:$0xff]
    %v3042 = vld [vmem:[#allocation8 + $0x1208] sm:$0xff]
    %v3043 = vld [vmem:[#allocation8 + $0x1210] sm:$0xff]
    %v3044 = vld [vmem:[#allocation8 + $0x1218] sm:$0xff]
    %v3045 = vld [vmem:[#allocation8 + $0x1220] sm:$0xff]
    %v3046 = vld [vmem:[#allocation8 + $0x1228] sm:$0xff]
    %v3047 = vld [vmem:[#allocation8 + $0x1230] sm:$0xff]
    %v3048 = vld [vmem:[#allocation8 + $0x1238] sm:$0xff]
    %v3049 = vld [vmem:[#allocation8 + $0x1240] sm:$0xff]
    %v3050 = vld [vmem:[#allocation8 + $0x1248] sm:$0xff]
    %v3051 = vld [vmem:[#allocation8 + $0x1250] sm:$0xff]
    %v3052 = vld [vmem:[#allocation8 + $0x1258] sm:$0xff]
    %v3053 = vld [vmem:[#allocation8 + $0x1260] sm:$0xff]
    %v3054 = vld [vmem:[#allocation8 + $0x1268] sm:$0xff]
    %v3055 = vld [vmem:[#allocation8 + $0x1270] sm:$0xff]
    %v3056 = vld [vmem:[#allocation8 + $0x1278] sm:$0xff]
    %v3057 = vld [vmem:[#allocation8 + $0x1280] sm:$0xff]
    %v3058 = vld [vmem:[#allocation8 + $0x1288] sm:$0xff]
    %v3059 = vld [vmem:[#allocation8 + $0x1290] sm:$0xff]
    %v3060 = vld [vmem:[#allocation8 + $0x1298] sm:$0xff]
    %v3061 = vld [vmem:[#allocation8 + $0x12a0] sm:$0xff]
    %v3062 = vld [vmem:[#allocation8 + $0x12a8] sm:$0xff]
    %v3063 = vld [vmem:[#allocation8 + $0x12b0] sm:$0xff]
    %v3064 = vld [vmem:[#allocation8 + $0x12b8] sm:$0xff]
    %v3065 = vld [vmem:[#allocation8 + $0x12c0] sm:$0xff]
    %v3066 = vld [vmem:[#allocation8 + $0x12c8] sm:$0xff]
    %v3067 = vld [vmem:[#allocation8 + $0x12d0] sm:$0xff]
    %v3068 = vld [vmem:[#allocation8 + $0x12d8] sm:$0xff]
    %v3069 = vld [vmem:[#allocation8 + $0x12e0] sm:$0xff]
    %v3070 = vld [vmem:[#allocation8 + $0x12e8] sm:$0xff]
    %v3071 = vld [vmem:[#allocation8 + $0x12f0] sm:$0xff]
    %v3072 = vld [vmem:[#allocation8 + $0x12f8] sm:$0xff]
    %v3073 = vld [vmem:[#allocation8 + $0x1300] sm:$0xff]
    %v3074 = vld [vmem:[#allocation8 + $0x1308] sm:$0xff]
    %v3075 = vld [vmem:[#allocation8 + $0x1310] sm:$0xff]
    %v3076 = vld [vmem:[#allocation8 + $0x1318] sm:$0xff]
    %v3077 = vld [vmem:[#allocation8 + $0x1320] sm:$0xff]
    %v3078 = vld [vmem:[#allocation8 + $0x1328] sm:$0xff]
    %v3079 = vld [vmem:[#allocation8 + $0x1330] sm:$0xff]
    %v3080 = vld [vmem:[#allocation8 + $0x1338] sm:$0xff]
    %v3081 = vld [vmem:[#allocation8 + $0x1340] sm:$0xff]
    %v3082 = vld [vmem:[#allocation8 + $0x1348] sm:$0xff]
    %v3083 = vld [vmem:[#allocation8 + $0x1350] sm:$0xff]
    %v3084 = vld [vmem:[#allocation8 + $0x1358] sm:$0xff]
    %v3085 = vld [vmem:[#allocation8 + $0x1360] sm:$0xff]
    %v3086 = vld [vmem:[#allocation8 + $0x1368] sm:$0xff]
    %v3087 = vld [vmem:[#allocation8 + $0x1370] sm:$0xff]
    %v3088 = vld [vmem:[#allocation8 + $0x1378] sm:$0xff]
    %v3089 = vld [vmem:[#allocation8 + $0x1380] sm:$0xff]
    %v3090 = vld [vmem:[#allocation8 + $0x1388] sm:$0xff]
    %v3091 = vld [vmem:[#allocation8 + $0x1390] sm:$0xff]
    %v3092 = vld [vmem:[#allocation8 + $0x1398] sm:$0xff]
    %v3093 = vld [vmem:[#allocation8 + $0x13a0] sm:$0xff]
    %v3094 = vld [vmem:[#allocation8 + $0x13a8] sm:$0xff]
    %v3095 = vld [vmem:[#allocation8 + $0x13b0] sm:$0xff]
    %v3096 = vld [vmem:[#allocation8 + $0x13b8] sm:$0xff]
    %v3097 = vld [vmem:[#allocation8 + $0x13c0] sm:$0xff]
    %v3098 = vld [vmem:[#allocation8 + $0x13c8] sm:$0xff]
    %v3099 = vld [vmem:[#allocation8 + $0x13d0] sm:$0xff]
    %v3100 = vld [vmem:[#allocation8 + $0x13d8] sm:$0xff]
    %v3101 = vld [vmem:[#allocation8 + $0x13e0] sm:$0xff]
    %v3102 = vld [vmem:[#allocation8 + $0x13e8] sm:$0xff]
    %v3103 = vld [vmem:[#allocation8 + $0x13f0] sm:$0xff]
    %v3104 = vld [vmem:[#allocation8 + $0x13f8] sm:$0xff]
    %v3105 = vld [vmem:[#allocation8 + $0x1400] sm:$0xff]
    %v3106 = vld [vmem:[#allocation8 + $0x1408] sm:$0xff]
    %v3107 = vld [vmem:[#allocation8 + $0x1410] sm:$0xff]
    %v3108 = vld [vmem:[#allocation8 + $0x1418] sm:$0xff]
    %v3109 = vld [vmem:[#allocation8 + $0x1420] sm:$0xff]
    %v3110 = vld [vmem:[#allocation8 + $0x1428] sm:$0xff]
    %v3111 = vld [vmem:[#allocation8 + $0x1430] sm:$0xff]
    %v3112 = vld [vmem:[#allocation8 + $0x1438] sm:$0xff]
    %v3113 = vld [vmem:[#allocation8 + $0x1440] sm:$0xff]
    %v3114 = vld [vmem:[#allocation8 + $0x1448] sm:$0xff]
    %v3115 = vld [vmem:[#allocation8 + $0x1450] sm:$0xff]
    %v3116 = vld [vmem:[#allocation8 + $0x1458] sm:$0xff]
    %v3117 = vld [vmem:[#allocation8 + $0x1460] sm:$0xff]
    %v3118 = vld [vmem:[#allocation8 + $0x1468] sm:$0xff]
    %v3119 = vld [vmem:[#allocation8 + $0x1470] sm:$0xff]
    %v3120 = vld [vmem:[#allocation8 + $0x1478] sm:$0xff]
    %v3121 = vld [vmem:[#allocation8 + $0x1480] sm:$0xff]
    %v3122 = vld [vmem:[#allocation8 + $0x1488] sm:$0xff]
    %v3123 = vld [vmem:[#allocation8 + $0x1490] sm:$0xff]
    %v3124 = vld [vmem:[#allocation8 + $0x1498] sm:$0xff]
    %v3125 = vld [vmem:[#allocation8 + $0x14a0] sm:$0xff]
    %v3126 = vld [vmem:[#allocation8 + $0x14a8] sm:$0xff]
    %v3127 = vld [vmem:[#allocation8 + $0x14b0] sm:$0xff]
    %v3128 = vld [vmem:[#allocation8 + $0x14b8] sm:$0xff]
    %v3129 = vld [vmem:[#allocation8 + $0x14c0] sm:$0xff]
    %v3130 = vld [vmem:[#allocation8 + $0x14c8] sm:$0xff]
    %v3131 = vld [vmem:[#allocation8 + $0x14d0] sm:$0xff]
    %v3132 = vld [vmem:[#allocation8 + $0x14d8] sm:$0xff]
    %v3133 = vld [vmem:[#allocation8 + $0x14e0] sm:$0xff]
    %v3134 = vld [vmem:[#allocation8 + $0x14e8] sm:$0xff]
    %v3135 = vld [vmem:[#allocation8 + $0x14f0] sm:$0xff]
    %v3136 = vld [vmem:[#allocation8 + $0x14f8] sm:$0xff]
    %v3137 = vld [vmem:[#allocation8 + $0x1500] sm:$0xff]
    %v3138 = vld [vmem:[#allocation8 + $0x1508] sm:$0xff]
    %v3139 = vld [vmem:[#allocation8 + $0x1510] sm:$0xff]
    %v3140 = vld [vmem:[#allocation8 + $0x1518] sm:$0xff]
    %v3141 = vld [vmem:[#allocation8 + $0x1520] sm:$0xff]
    %v3142 = vld [vmem:[#allocation8 + $0x1528] sm:$0xff]
    %v3143 = vld [vmem:[#allocation8 + $0x1530] sm:$0xff]
    %v3144 = vld [vmem:[#allocation8 + $0x1538] sm:$0xff]
    %v3145 = vld [vmem:[#allocation8 + $0x1540] sm:$0xff]
    %v3146 = vld [vmem:[#allocation8 + $0x1548] sm:$0xff]
    %v3147 = vld [vmem:[#allocation8 + $0x1550] sm:$0xff]
    %v3148 = vld [vmem:[#allocation8 + $0x1558] sm:$0xff]
    %v3149 = vld [vmem:[#allocation8 + $0x1560] sm:$0xff]
    %v3150 = vld [vmem:[#allocation8 + $0x1568] sm:$0xff]
    %v3151 = vld [vmem:[#allocation8 + $0x1570] sm:$0xff]
    %v3152 = vld [vmem:[#allocation8 + $0x1578] sm:$0xff]
    %v3153 = vld [vmem:[#allocation8 + $0x1580] sm:$0xff]
    %v3154 = vld [vmem:[#allocation8 + $0x1588] sm:$0xff]
    %v3155 = vld [vmem:[#allocation8 + $0x1590] sm:$0xff]
    %v3156 = vld [vmem:[#allocation8 + $0x1598] sm:$0xff]
    %v3157 = vld [vmem:[#allocation8 + $0x15a0] sm:$0xff]
    %v3158 = vld [vmem:[#allocation8 + $0x15a8] sm:$0xff]
    %v3159 = vld [vmem:[#allocation8 + $0x15b0] sm:$0xff]
    %v3160 = vld [vmem:[#allocation8 + $0x15b8] sm:$0xff]
    %v3161 = vld [vmem:[#allocation8 + $0x15c0] sm:$0xff]
    %v3162 = vld [vmem:[#allocation8 + $0x15c8] sm:$0xff]
    %v3163 = vld [vmem:[#allocation8 + $0x15d0] sm:$0xff]
    %v3164 = vld [vmem:[#allocation8 + $0x15d8] sm:$0xff]
    %v3165 = vld [vmem:[#allocation8 + $0x15e0] sm:$0xff]
    %v3166 = vld [vmem:[#allocation8 + $0x15e8] sm:$0xff]
    %v3167 = vld [vmem:[#allocation8 + $0x15f0] sm:$0xff]
    %v3168 = vld [vmem:[#allocation8 + $0x15f8] sm:$0xff]
    %v3169 = vld [vmem:[#allocation8 + $0x1600] sm:$0xff]
    %v3170 = vld [vmem:[#allocation8 + $0x1608] sm:$0xff]
    %v3171 = vld [vmem:[#allocation8 + $0x1610] sm:$0xff]
    %v3172 = vld [vmem:[#allocation8 + $0x1618] sm:$0xff]
    %v3173 = vld [vmem:[#allocation8 + $0x1620] sm:$0xff]
    %v3174 = vld [vmem:[#allocation8 + $0x1628] sm:$0xff]
    %v3175 = vld [vmem:[#allocation8 + $0x1630] sm:$0xff]
    %v3176 = vld [vmem:[#allocation8 + $0x1638] sm:$0xff]
    %v3177 = vld [vmem:[#allocation8 + $0x1640] sm:$0xff]
    %v3178 = vld [vmem:[#allocation8 + $0x1648] sm:$0xff]
    %v3179 = vld [vmem:[#allocation8 + $0x1650] sm:$0xff]
    %v3180 = vld [vmem:[#allocation8 + $0x1658] sm:$0xff]
    %v3181 = vld [vmem:[#allocation8 + $0x1660] sm:$0xff]
    %v3182 = vld [vmem:[#allocation8 + $0x1668] sm:$0xff]
    %v3183 = vld [vmem:[#allocation8 + $0x1670] sm:$0xff]
    %v3184 = vld [vmem:[#allocation8 + $0x1678] sm:$0xff]
    %v3185 = vld [vmem:[#allocation8 + $0x1680] sm:$0xff]
    %v3186 = vld [vmem:[#allocation8 + $0x1688] sm:$0xff]
    %v3187 = vld [vmem:[#allocation8 + $0x1690] sm:$0xff]
    %v3188 = vld [vmem:[#allocation8 + $0x1698] sm:$0xff]
    %v3189 = vld [vmem:[#allocation8 + $0x16a0] sm:$0xff]
    %v3190 = vld [vmem:[#allocation8 + $0x16a8] sm:$0xff]
    %v3191 = vld [vmem:[#allocation8 + $0x16b0] sm:$0xff]
    %v3192 = vld [vmem:[#allocation8 + $0x16b8] sm:$0xff]
    %v3193 = vld [vmem:[#allocation8 + $0x16c0] sm:$0xff]
    %v3194 = vld [vmem:[#allocation8 + $0x16c8] sm:$0xff]
    %v3195 = vld [vmem:[#allocation8 + $0x16d0] sm:$0xff]
    %v3196 = vld [vmem:[#allocation8 + $0x16d8] sm:$0xff]
    %v3197 = vld [vmem:[#allocation8 + $0x16e0] sm:$0xff]
    %v3198 = vld [vmem:[#allocation8 + $0x16e8] sm:$0xff]
    %v3199 = vld [vmem:[#allocation8 + $0x16f0] sm:$0xff]
    %v3200 = vld [vmem:[#allocation8 + $0x16f8] sm:$0xff]
    %v3201 = vld [vmem:[#allocation8 + $0x1700] sm:$0xff]
    %v3202 = vld [vmem:[#allocation8 + $0x1708] sm:$0xff]
    %v3203 = vld [vmem:[#allocation8 + $0x1710] sm:$0xff]
    %v3204 = vld [vmem:[#allocation8 + $0x1718] sm:$0xff]
    %v3205 = vld [vmem:[#allocation8 + $0x1720] sm:$0xff]
    %v3206 = vld [vmem:[#allocation8 + $0x1728] sm:$0xff]
    %v3207 = vld [vmem:[#allocation8 + $0x1730] sm:$0xff]
    %v3208 = vld [vmem:[#allocation8 + $0x1738] sm:$0xff]
    %v3209 = vld [vmem:[#allocation8 + $0x1740] sm:$0xff]
    %v3210 = vld [vmem:[#allocation8 + $0x1748] sm:$0xff]
    %v3211 = vld [vmem:[#allocation8 + $0x1750] sm:$0xff]
    %v3212 = vld [vmem:[#allocation8 + $0x1758] sm:$0xff]
    %v3213 = vld [vmem:[#allocation8 + $0x1760] sm:$0xff]
    %v3214 = vld [vmem:[#allocation8 + $0x1768] sm:$0xff]
    %v3215 = vld [vmem:[#allocation8 + $0x1770] sm:$0xff]
    %v3216 = vld [vmem:[#allocation8 + $0x1778] sm:$0xff]
    %v3217 = vld [vmem:[#allocation8 + $0x1780] sm:$0xff]
    %v3218 = vld [vmem:[#allocation8 + $0x1788] sm:$0xff]
    %v3219 = vld [vmem:[#allocation8 + $0x1790] sm:$0xff]
    %v3220 = vld [vmem:[#allocation8 + $0x1798] sm:$0xff]
    %v3221 = vld [vmem:[#allocation8 + $0x17a0] sm:$0xff]
    %v3222 = vld [vmem:[#allocation8 + $0x17a8] sm:$0xff]
    %v3223 = vld [vmem:[#allocation8 + $0x17b0] sm:$0xff]
    %v3224 = vld [vmem:[#allocation8 + $0x17b8] sm:$0xff]
    %v3225 = vld [vmem:[#allocation8 + $0x17c0] sm:$0xff]
    %v3226 = vld [vmem:[#allocation8 + $0x17c8] sm:$0xff]
    %v3227 = vld [vmem:[#allocation8 + $0x17d0] sm:$0xff]
    %v3228 = vld [vmem:[#allocation8 + $0x17d8] sm:$0xff]
    %v3229 = vld [vmem:[#allocation8 + $0x17e0] sm:$0xff]
    %v3230 = vld [vmem:[#allocation8 + $0x17e8] sm:$0xff]
    %v3231 = vld [vmem:[#allocation8 + $0x17f0] sm:$0xff]
    %v3232 = vld [vmem:[#allocation8 + $0x17f8] sm:$0xff]
    %v3233 = vld [vmem:[#allocation8 + $0x1800] sm:$0xff]
    %v3234 = vld [vmem:[#allocation8 + $0x1808] sm:$0xff]
    %v3235 = vld [vmem:[#allocation8 + $0x1810] sm:$0xff]
    %v3236 = vld [vmem:[#allocation8 + $0x1818] sm:$0xff]
    %v3237 = vld [vmem:[#allocation8 + $0x1820] sm:$0xff]
    %v3238 = vld [vmem:[#allocation8 + $0x1828] sm:$0xff]
    %v3239 = vld [vmem:[#allocation8 + $0x1830] sm:$0xff]
    %v3240 = vld [vmem:[#allocation8 + $0x1838] sm:$0xff]
    %v3241 = vld [vmem:[#allocation8 + $0x1840] sm:$0xff]
    %v3242 = vld [vmem:[#allocation8 + $0x1848] sm:$0xff]
    %v3243 = vld [vmem:[#allocation8 + $0x1850] sm:$0xff]
    %v3244 = vld [vmem:[#allocation8 + $0x1858] sm:$0xff]
    %v3245 = vld [vmem:[#allocation8 + $0x1860] sm:$0xff]
    %v3246 = vld [vmem:[#allocation8 + $0x1868] sm:$0xff]
    %v3247 = vld [vmem:[#allocation8 + $0x1870] sm:$0xff]
    %v3248 = vld [vmem:[#allocation8 + $0x1878] sm:$0xff]
    %v3249 = vld [vmem:[#allocation8 + $0x1880] sm:$0xff]
    %v3250 = vld [vmem:[#allocation8 + $0x1888] sm:$0xff]
    %v3251 = vld [vmem:[#allocation8 + $0x1890] sm:$0xff]
    %v3252 = vld [vmem:[#allocation8 + $0x1898] sm:$0xff]
    %v3253 = vld [vmem:[#allocation8 + $0x18a0] sm:$0xff]
    %v3254 = vld [vmem:[#allocation8 + $0x18a8] sm:$0xff]
    %v3255 = vld [vmem:[#allocation8 + $0x18b0] sm:$0xff]
    %v3256 = vld [vmem:[#allocation8 + $0x18b8] sm:$0xff]
    %v3257 = vld [vmem:[#allocation8 + $0x18c0] sm:$0xff]
    %v3258 = vld [vmem:[#allocation8 + $0x18c8] sm:$0xff]
    %v3259 = vld [vmem:[#allocation8 + $0x18d0] sm:$0xff]
    %v3260 = vld [vmem:[#allocation8 + $0x18d8] sm:$0xff]
    %v3261 = vld [vmem:[#allocation8 + $0x18e0] sm:$0xff]
    %v3262 = vld [vmem:[#allocation8 + $0x18e8] sm:$0xff]
    %v3263 = vld [vmem:[#allocation8 + $0x18f0] sm:$0xff]
    %v3264 = vld [vmem:[#allocation8 + $0x18f8] sm:$0xff]
    %v3265 = vld [vmem:[#allocation8 + $0x1900] sm:$0xff]
    %v3266 = vld [vmem:[#allocation8 + $0x1908] sm:$0xff]
    %v3267 = vld [vmem:[#allocation8 + $0x1910] sm:$0xff]
    %v3268 = vld [vmem:[#allocation8 + $0x1918] sm:$0xff]
    %v3269 = vld [vmem:[#allocation8 + $0x1920] sm:$0xff]
    %v3270 = vld [vmem:[#allocation8 + $0x1928] sm:$0xff]
    %v3271 = vld [vmem:[#allocation8 + $0x1930] sm:$0xff]
    %v3272 = vld [vmem:[#allocation8 + $0x1938] sm:$0xff]
    %v3273 = vld [vmem:[#allocation8 + $0x1940] sm:$0xff]
    %v3274 = vld [vmem:[#allocation8 + $0x1948] sm:$0xff]
    %v3275 = vld [vmem:[#allocation8 + $0x1950] sm:$0xff]
    %v3276 = vld [vmem:[#allocation8 + $0x1958] sm:$0xff]
    %v3277 = vld [vmem:[#allocation8 + $0x1960] sm:$0xff]
    %v3278 = vld [vmem:[#allocation8 + $0x1968] sm:$0xff]
    %v3279 = vld [vmem:[#allocation8 + $0x1970] sm:$0xff]
    %v3280 = vld [vmem:[#allocation8 + $0x1978] sm:$0xff]
    %v3281 = vld [vmem:[#allocation8 + $0x1980] sm:$0xff]
    %v3282 = vld [vmem:[#allocation8 + $0x1988] sm:$0xff]
    %v3283 = vld [vmem:[#allocation8 + $0x1990] sm:$0xff]
    %v3284 = vld [vmem:[#allocation8 + $0x1998] sm:$0xff]
    %v3285 = vld [vmem:[#allocation8 + $0x19a0] sm:$0xff]
    %v3286 = vld [vmem:[#allocation8 + $0x19a8] sm:$0xff]
    %v3287 = vld [vmem:[#allocation8 + $0x19b0] sm:$0xff]
    %v3288 = vld [vmem:[#allocation8 + $0x19b8] sm:$0xff]
    %v3289 = vld [vmem:[#allocation8 + $0x19c0] sm:$0xff]
    %v3290 = vld [vmem:[#allocation8 + $0x19c8] sm:$0xff]
    %v3291 = vld [vmem:[#allocation8 + $0x19d0] sm:$0xff]
    %v3292 = vld [vmem:[#allocation8 + $0x19d8] sm:$0xff]
    %v3293 = vld [vmem:[#allocation8 + $0x19e0] sm:$0xff]
    %v3294 = vld [vmem:[#allocation8 + $0x19e8] sm:$0xff]
    %v3295 = vld [vmem:[#allocation8 + $0x19f0] sm:$0xff]
    %v3296 = vld [vmem:[#allocation8 + $0x19f8] sm:$0xff]
    %v3297 = vld [vmem:[#allocation8 + $0x1a00] sm:$0xff]
    %v3298 = vld [vmem:[#allocation8 + $0x1a08] sm:$0xff]
    %v3299 = vld [vmem:[#allocation8 + $0x1a10] sm:$0xff]
    %v3300 = vld [vmem:[#allocation8 + $0x1a18] sm:$0xff]
    %v3301 = vld [vmem:[#allocation8 + $0x1a20] sm:$0xff]
    %v3302 = vld [vmem:[#allocation8 + $0x1a28] sm:$0xff]
    %v3303 = vld [vmem:[#allocation8 + $0x1a30] sm:$0xff]
    %v3304 = vld [vmem:[#allocation8 + $0x1a38] sm:$0xff]
    %v3305 = vld [vmem:[#allocation8 + $0x1a40] sm:$0xff]
    %v3306 = vld [vmem:[#allocation8 + $0x1a48] sm:$0xff]
    %v3307 = vld [vmem:[#allocation8 + $0x1a50] sm:$0xff]
    %v3308 = vld [vmem:[#allocation8 + $0x1a58] sm:$0xff]
    %v3309 = vld [vmem:[#allocation8 + $0x1a60] sm:$0xff]
    %v3310 = vld [vmem:[#allocation8 + $0x1a68] sm:$0xff]
    %v3311 = vld [vmem:[#allocation8 + $0x1a70] sm:$0xff]
    %v3312 = vld [vmem:[#allocation8 + $0x1a78] sm:$0xff]
    %v3313 = vld [vmem:[#allocation8 + $0x1a80] sm:$0xff]
    %v3314 = vld [vmem:[#allocation8 + $0x1a88] sm:$0xff]
    %v3315 = vld [vmem:[#allocation8 + $0x1a90] sm:$0xff]
    %v3316 = vld [vmem:[#allocation8 + $0x1a98] sm:$0xff]
    %v3317 = vld [vmem:[#allocation8 + $0x1aa0] sm:$0xff]
    %v3318 = vld [vmem:[#allocation8 + $0x1aa8] sm:$0xff]
    %v3319 = vld [vmem:[#allocation8 + $0x1ab0] sm:$0xff]
    %v3320 = vld [vmem:[#allocation8 + $0x1ab8] sm:$0xff]
    %v3321 = vld [vmem:[#allocation8 + $0x1ac0] sm:$0xff]
    %v3322 = vld [vmem:[#allocation8 + $0x1ac8] sm:$0xff]
    %v3323 = vld [vmem:[#allocation8 + $0x1ad0] sm:$0xff]
    %v3324 = vld [vmem:[#allocation8 + $0x1ad8] sm:$0xff]
    %v3325 = vld [vmem:[#allocation8 + $0x1ae0] sm:$0xff]
    %v3326 = vld [vmem:[#allocation8 + $0x1ae8] sm:$0xff]
    %v3327 = vld [vmem:[#allocation8 + $0x1af0] sm:$0xff]
    %v3328 = vld [vmem:[#allocation8 + $0x1af8] sm:$0xff]
    %v3329 = vld [vmem:[#allocation8 + $0x1b00] sm:$0xff]
    %v3330 = vld [vmem:[#allocation8 + $0x1b08] sm:$0xff]
    %v3331 = vld [vmem:[#allocation8 + $0x1b10] sm:$0xff]
    %v3332 = vld [vmem:[#allocation8 + $0x1b18] sm:$0xff]
    %v3333 = vld [vmem:[#allocation8 + $0x1b20] sm:$0xff]
    %v3334 = vld [vmem:[#allocation8 + $0x1b28] sm:$0xff]
    %v3335 = vld [vmem:[#allocation8 + $0x1b30] sm:$0xff]
    %v3336 = vld [vmem:[#allocation8 + $0x1b38] sm:$0xff]
    %v3337 = vld [vmem:[#allocation8 + $0x1b40] sm:$0xff]
    %v3338 = vld [vmem:[#allocation8 + $0x1b48] sm:$0xff]
    %v3339 = vld [vmem:[#allocation8 + $0x1b50] sm:$0xff]
    %v3340 = vld [vmem:[#allocation8 + $0x1b58] sm:$0xff]
    %v3341 = vld [vmem:[#allocation8 + $0x1b60] sm:$0xff]
    %v3342 = vld [vmem:[#allocation8 + $0x1b68] sm:$0xff]
    %v3343 = vld [vmem:[#allocation8 + $0x1b70] sm:$0xff]
    %v3344 = vld [vmem:[#allocation8 + $0x1b78] sm:$0xff]
    %v3345 = vld [vmem:[#allocation8 + $0x1b80] sm:$0xff]
    %v3346 = vld [vmem:[#allocation8 + $0x1b88] sm:$0xff]
    %v3347 = vld [vmem:[#allocation8 + $0x1b90] sm:$0xff]
    %v3348 = vld [vmem:[#allocation8 + $0x1b98] sm:$0xff]
    %v3349 = vld [vmem:[#allocation8 + $0x1ba0] sm:$0xff]
    %v3350 = vld [vmem:[#allocation8 + $0x1ba8] sm:$0xff]
    %v3351 = vld [vmem:[#allocation8 + $0x1bb0] sm:$0xff]
    %v3352 = vld [vmem:[#allocation8 + $0x1bb8] sm:$0xff]
    %v3353 = vld [vmem:[#allocation8 + $0x1bc0] sm:$0xff]
    %v3354 = vld [vmem:[#allocation8 + $0x1bc8] sm:$0xff]
    %v3355 = vld [vmem:[#allocation8 + $0x1bd0] sm:$0xff]
    %v3356 = vld [vmem:[#allocation8 + $0x1bd8] sm:$0xff]
    %v3357 = vld [vmem:[#allocation8 + $0x1be0] sm:$0xff]
    %v3358 = vld [vmem:[#allocation8 + $0x1be8] sm:$0xff]
    %v3359 = vld [vmem:[#allocation8 + $0x1bf0] sm:$0xff]
    %v3360 = vld [vmem:[#allocation8 + $0x1bf8] sm:$0xff]
    %v3361 = vld [vmem:[#allocation8 + $0x1c00] sm:$0xff]
    %v3362 = vld [vmem:[#allocation8 + $0x1c08] sm:$0xff]
    %v3363 = vld [vmem:[#allocation8 + $0x1c10] sm:$0xff]
    %v3364 = vld [vmem:[#allocation8 + $0x1c18] sm:$0xff]
    %v3365 = vld [vmem:[#allocation8 + $0x1c20] sm:$0xff]
    %v3366 = vld [vmem:[#allocation8 + $0x1c28] sm:$0xff]
    %v3367 = vld [vmem:[#allocation8 + $0x1c30] sm:$0xff]
    %v3368 = vld [vmem:[#allocation8 + $0x1c38] sm:$0xff]
    %v3369 = vld [vmem:[#allocation8 + $0x1c40] sm:$0xff]
    %v3370 = vld [vmem:[#allocation8 + $0x1c48] sm:$0xff]
    %v3371 = vld [vmem:[#allocation8 + $0x1c50] sm:$0xff]
    %v3372 = vld [vmem:[#allocation8 + $0x1c58] sm:$0xff]
    %v3373 = vld [vmem:[#allocation8 + $0x1c60] sm:$0xff]
    %v3374 = vld [vmem:[#allocation8 + $0x1c68] sm:$0xff]
    %v3375 = vld [vmem:[#allocation8 + $0x1c70] sm:$0xff]
    %v3376 = vld [vmem:[#allocation8 + $0x1c78] sm:$0xff]
    %v3377 = vld [vmem:[#allocation8 + $0x1c80] sm:$0xff]
    %v3378 = vld [vmem:[#allocation8 + $0x1c88] sm:$0xff]
    %v3379 = vld [vmem:[#allocation8 + $0x1c90] sm:$0xff]
    %v3380 = vld [vmem:[#allocation8 + $0x1c98] sm:$0xff]
    %v3381 = vld [vmem:[#allocation8 + $0x1ca0] sm:$0xff]
    %v3382 = vld [vmem:[#allocation8 + $0x1ca8] sm:$0xff]
    %v3383 = vld [vmem:[#allocation8 + $0x1cb0] sm:$0xff]
    %v3384 = vld [vmem:[#allocation8 + $0x1cb8] sm:$0xff]
    %v3385 = vld [vmem:[#allocation8 + $0x1cc0] sm:$0xff]
    %v3386 = vld [vmem:[#allocation8 + $0x1cc8] sm:$0xff]
    %v3387 = vld [vmem:[#allocation8 + $0x1cd0] sm:$0xff]
    %v3388 = vld [vmem:[#allocation8 + $0x1cd8] sm:$0xff]
    %v3389 = vld [vmem:[#allocation8 + $0x1ce0] sm:$0xff]
    %v3390 = vld [vmem:[#allocation8 + $0x1ce8] sm:$0xff]
    %v3391 = vld [vmem:[#allocation8 + $0x1cf0] sm:$0xff]
    %v3392 = vld [vmem:[#allocation8 + $0x1cf8] sm:$0xff]
    %v3393 = vld [vmem:[#allocation8 + $0x1d00] sm:$0xff]
    %v3394 = vld [vmem:[#allocation8 + $0x1d08] sm:$0xff]
    %v3395 = vld [vmem:[#allocation8 + $0x1d10] sm:$0xff]
    %v3396 = vld [vmem:[#allocation8 + $0x1d18] sm:$0xff]
    %v3397 = vld [vmem:[#allocation8 + $0x1d20] sm:$0xff]
    %v3398 = vld [vmem:[#allocation8 + $0x1d28] sm:$0xff]
    %v3399 = vld [vmem:[#allocation8 + $0x1d30] sm:$0xff]
    %v3400 = vld [vmem:[#allocation8 + $0x1d38] sm:$0xff]
    %v3401 = vld [vmem:[#allocation8 + $0x1d40] sm:$0xff]
    %v3402 = vld [vmem:[#allocation8 + $0x1d48] sm:$0xff]
    %v3403 = vld [vmem:[#allocation8 + $0x1d50] sm:$0xff]
    %v3404 = vld [vmem:[#allocation8 + $0x1d58] sm:$0xff]
    %v3405 = vld [vmem:[#allocation8 + $0x1d60] sm:$0xff]
    %v3406 = vld [vmem:[#allocation8 + $0x1d68] sm:$0xff]
    %v3407 = vld [vmem:[#allocation8 + $0x1d70] sm:$0xff]
    %v3408 = vld [vmem:[#allocation8 + $0x1d78] sm:$0xff]
    %v3409 = vld [vmem:[#allocation8 + $0x1d80] sm:$0xff]
    %v3410 = vld [vmem:[#allocation8 + $0x1d88] sm:$0xff]
    %v3411 = vld [vmem:[#allocation8 + $0x1d90] sm:$0xff]
    %v3412 = vld [vmem:[#allocation8 + $0x1d98] sm:$0xff]
    %v3413 = vld [vmem:[#allocation8 + $0x1da0] sm:$0xff]
    %v3414 = vld [vmem:[#allocation8 + $0x1da8] sm:$0xff]
    %v3415 = vld [vmem:[#allocation8 + $0x1db0] sm:$0xff]
    %v3416 = vld [vmem:[#allocation8 + $0x1db8] sm:$0xff]
    %v3417 = vld [vmem:[#allocation8 + $0x1dc0] sm:$0xff]
    %v3418 = vld [vmem:[#allocation8 + $0x1dc8] sm:$0xff]
    %v3419 = vld [vmem:[#allocation8 + $0x1dd0] sm:$0xff]
    %v3420 = vld [vmem:[#allocation8 + $0x1dd8] sm:$0xff]
    %v3421 = vld [vmem:[#allocation8 + $0x1de0] sm:$0xff]
    %v3422 = vld [vmem:[#allocation8 + $0x1de8] sm:$0xff]
    %v3423 = vld [vmem:[#allocation8 + $0x1df0] sm:$0xff]
    %v3424 = vld [vmem:[#allocation8 + $0x1df8] sm:$0xff]
    %v3425 = vld [vmem:[#allocation8 + $0x1e00] sm:$0xff]
    %v3426 = vld [vmem:[#allocation8 + $0x1e08] sm:$0xff]
    %v3427 = vld [vmem:[#allocation8 + $0x1e10] sm:$0xff]
    %v3428 = vld [vmem:[#allocation8 + $0x1e18] sm:$0xff]
    %v3429 = vld [vmem:[#allocation8 + $0x1e20] sm:$0xff]
    %v3430 = vld [vmem:[#allocation8 + $0x1e28] sm:$0xff]
    %v3431 = vld [vmem:[#allocation8 + $0x1e30] sm:$0xff]
    %v3432 = vld [vmem:[#allocation8 + $0x1e38] sm:$0xff]
    %v3433 = vld [vmem:[#allocation8 + $0x1e40] sm:$0xff]
    %v3434 = vld [vmem:[#allocation8 + $0x1e48] sm:$0xff]
    %v3435 = vld [vmem:[#allocation8 + $0x1e50] sm:$0xff]
    %v3436 = vld [vmem:[#allocation8 + $0x1e58] sm:$0xff]
    %v3437 = vld [vmem:[#allocation8 + $0x1e60] sm:$0xff]
    %v3438 = vld [vmem:[#allocation8 + $0x1e68] sm:$0xff]
    %v3439 = vld [vmem:[#allocation8 + $0x1e70] sm:$0xff]
    %v3440 = vld [vmem:[#allocation8 + $0x1e78] sm:$0xff]
    %v3441 = vld [vmem:[#allocation8 + $0x1e80] sm:$0xff]
    %v3442 = vld [vmem:[#allocation8 + $0x1e88] sm:$0xff]
    %v3443 = vld [vmem:[#allocation8 + $0x1e90] sm:$0xff]
    %v3444 = vld [vmem:[#allocation8 + $0x1e98] sm:$0xff]
    %v3445 = vld [vmem:[#allocation8 + $0x1ea0] sm:$0xff]
    %v3446 = vld [vmem:[#allocation8 + $0x1ea8] sm:$0xff]
    %v3447 = vld [vmem:[#allocation8 + $0x1eb0] sm:$0xff]
    %v3448 = vld [vmem:[#allocation8 + $0x1eb8] sm:$0xff]
    %v3449 = vld [vmem:[#allocation8 + $0x1ec0] sm:$0xff]
    %v3450 = vld [vmem:[#allocation8 + $0x1ec8] sm:$0xff]
    %v3451 = vld [vmem:[#allocation8 + $0x1ed0] sm:$0xff]
    %v3452 = vld [vmem:[#allocation8 + $0x1ed8] sm:$0xff]
    %v3453 = vld [vmem:[#allocation8 + $0x1ee0] sm:$0xff]
    %v3454 = vld [vmem:[#allocation8 + $0x1ee8] sm:$0xff]
    %v3455 = vld [vmem:[#allocation8 + $0x1ef0] sm:$0xff]
    %v3456 = vld [vmem:[#allocation8 + $0x1ef8] sm:$0xff]
    %v3457 = vld [vmem:[#allocation8 + $0x1f00] sm:$0xff]
    %v3458 = vld [vmem:[#allocation8 + $0x1f08] sm:$0xff]
    %v3459 = vld [vmem:[#allocation8 + $0x1f10] sm:$0xff]
    %v3460 = vld [vmem:[#allocation8 + $0x1f18] sm:$0xff]
    %v3461 = vld [vmem:[#allocation8 + $0x1f20] sm:$0xff]
    %v3462 = vld [vmem:[#allocation8 + $0x1f28] sm:$0xff]
    %v3463 = vld [vmem:[#allocation8 + $0x1f30] sm:$0xff]
    %v3464 = vld [vmem:[#allocation8 + $0x1f38] sm:$0xff]
    %v3465 = vld [vmem:[#allocation8 + $0x1f40] sm:$0xff]
    %v3466 = vld [vmem:[#allocation8 + $0x1f48] sm:$0xff]
    %v3467 = vld [vmem:[#allocation8 + $0x1f50] sm:$0xff]
    %v3468 = vld [vmem:[#allocation8 + $0x1f58] sm:$0xff]
    %v3469 = vld [vmem:[#allocation8 + $0x1f60] sm:$0xff]
    %v3470 = vld [vmem:[#allocation8 + $0x1f68] sm:$0xff]
    %v3471 = vld [vmem:[#allocation8 + $0x1f70] sm:$0xff]
    %v3472 = vld [vmem:[#allocation8 + $0x1f78] sm:$0xff]
    %v3473 = vld [vmem:[#allocation8 + $0x1f80] sm:$0xff]
    %v3474 = vld [vmem:[#allocation8 + $0x1f88] sm:$0xff]
    %v3475 = vld [vmem:[#allocation8 + $0x1f90] sm:$0xff]
    %v3476 = vld [vmem:[#allocation8 + $0x1f98] sm:$0xff]
    %v3477 = vld [vmem:[#allocation8 + $0x1fa0] sm:$0xff]
    %v3478 = vld [vmem:[#allocation8 + $0x1fa8] sm:$0xff]
    %v3479 = vld [vmem:[#allocation8 + $0x1fb0] sm:$0xff]
    %v3480 = vld [vmem:[#allocation8 + $0x1fb8] sm:$0xff]
    %v3481 = vld [vmem:[#allocation8 + $0x1fc0] sm:$0xff]
    %v3482 = vld [vmem:[#allocation8 + $0x1fc8] sm:$0xff]
    %v3483 = vld [vmem:[#allocation8 + $0x1fd0] sm:$0xff]
    %v3484 = vld [vmem:[#allocation8 + $0x1fd8] sm:$0xff]
    %v3485 = vld [vmem:[#allocation8 + $0x1fe0] sm:$0xff]
    %v3486 = vld [vmem:[#allocation8 + $0x1fe8] sm:$0xff]
    %v3487 = vld [vmem:[#allocation8 + $0x1ff0] sm:$0xff]
    %v3488 = vld [vmem:[#allocation8 + $0x1ff8] sm:$0xff]
    %v3489 = vld [vmem:[#allocation10] sm:$0xf]
    %v3491 = vlaneseq
    %v3492 = vshrl.u32 %v3491, 7
    %v3493 = vsub.s32 0, %v3492
    %v3494 = vrot.slane %v3489, %v3493
    %v3495 = vlaneseq
    %v3496 = vshrl.u32 %v3495, 7
    %v3497 = vsub.s32 1, %v3496
    %v3498 = vrot.slane %v3489, %v3497
    %v3499 = vlaneseq
    %v3500 = vshrl.u32 %v3499, 7
    %v3501 = vsub.s32 2, %v3500
    %v3502 = vrot.slane %v3489, %v3501
    %v3503 = vlaneseq
    %v3504 = vshrl.u32 %v3503, 7
    %v3505 = vsub.s32 3, %v3504
    %v3506 = vrot.slane %v3489, %v3505
    %3511 = vmatprep.subr.mxu0 %v2526
    %3512 = vmatpush1.msra.mxu0 %v2525
    %3513 = vmatprep.subr.mxu0 %v2522
    %3514 = vmatpush1.msra.mxu0 %v2521
    %3515 = vmatprep.subr.mxu0 %v2518
    %3516 = vmatpush1.msra.mxu0 %v2517
    %3517 = vmatprep.subr.mxu0 %v2514
    %3518 = vmatpush1.msra.mxu0 %v2513
    %3519 = vmatprep.subr.mxu0 %v2510
    %3520 = vmatpush1.msra.mxu0 %v2509
    %3521 = vmatprep.subr.mxu0 %v2506
    %3522 = vmatpush1.msra.mxu0 %v2505
    %3523 = vmatprep.subr.mxu0 %v2502
    %3524 = vmatpush1.msra.mxu0 %v2501
    %3525 = vmatprep.subr.mxu0 %v2498
    %3526 = vmatpush1.msra.mxu0 %v2497
    %3527 = vmatprep.subr.mxu0 %v2494
    %3528 = vmatpush1.msra.mxu0 %v2493
    %3529 = vmatprep.subr.mxu0 %v2490
    %3530 = vmatpush1.msra.mxu0 %v2489
    %3531 = vmatprep.subr.mxu0 %v2486
    %3532 = vmatpush1.msra.mxu0 %v2485
    %3533 = vmatprep.subr.mxu0 %v2482
    %3534 = vmatpush1.msra.mxu0 %v2481
    %3535 = vmatprep.subr.mxu0 %v2478
    %3536 = vmatpush1.msra.mxu0 %v2477
    %3537 = vmatprep.subr.mxu0 %v2474
    %3538 = vmatpush1.msra.mxu0 %v2473
    %3539 = vmatprep.subr.mxu0 %v2470
    %3540 = vmatpush1.msra.mxu0 %v2469
    %3541 = vmatprep.subr.mxu0 %v2466
    %3542 = vmatpush1.msra.mxu0 %v2465
    %3543 = vmatprep.subr.mxu0 %v2590
    %3544 = vmatpush2.msra.mxu0 %v2589
    %3545 = vmatprep.subr.mxu0 %v2586
    %3546 = vmatpush2.msra.mxu0 %v2585
    %3547 = vmatprep.subr.mxu0 %v2582
    %3548 = vmatpush2.msra.mxu0 %v2581
    %3549 = vmatprep.subr.mxu0 %v2578
    %3550 = vmatpush2.msra.mxu0 %v2577
    %3551 = vmatprep.subr.mxu0 %v2574
    %3552 = vmatpush2.msra.mxu0 %v2573
    %3553 = vmatprep.subr.mxu0 %v2570
    %3554 = vmatpush2.msra.mxu0 %v2569
    %3555 = vmatprep.subr.mxu0 %v2566
    %3556 = vmatpush2.msra.mxu0 %v2565
    %3557 = vmatprep.subr.mxu0 %v2562
    %3558 = vmatpush2.msra.mxu0 %v2561
    %3559 = vmatprep.subr.mxu0 %v2558
    %3560 = vmatpush2.msra.mxu0 %v2557
    %3561 = vmatprep.subr.mxu0 %v2554
    %3562 = vmatpush2.msra.mxu0 %v2553
    %3563 = vmatprep.subr.mxu0 %v2550
    %3564 = vmatpush2.msra.mxu0 %v2549
    %3565 = vmatprep.subr.mxu0 %v2546
    %3566 = vmatpush2.msra.mxu0 %v2545
    %3567 = vmatprep.subr.mxu0 %v2542
    %3568 = vmatpush2.msra.mxu0 %v2541
    %3569 = vmatprep.subr.mxu0 %v2538
    %3570 = vmatpush2.msra.mxu0 %v2537
    %3571 = vmatprep.subr.mxu0 %v2534
    %3572 = vmatpush2.msra.mxu0 %v2533
    %3573 = vmatprep.subr.mxu0 %v2530
    %3574 = vmatpush2.msra.mxu0 %v2529
    %3575 = vmatprep.mubr.f32.mxu0 %v2434
    %3576 = vmatmul.mubr.f32.gmra.mxu0 %v2433
    %v3577 = vpop.f32.mrf.mxu0
    %v3578 = vadd.f32 %v3494, %v3577
    %v3579 = vpop.f32.mrf.mxu0
    %v3580 = vadd.f32 %v3498, %v3579
    %3581 = vmatprep.mubr.f32.mxu0 %v2450
    %3582 = vmatmul.mubr.f32.gmra.mxu0 %v2449
    %v3583 = vpop.f32.mrf.mxu0
    %v3584 = vadd.f32 %v3494, %v3583
    %v3585 = vpop.f32.mrf.mxu0
    %v3586 = vadd.f32 %v3498, %v3585
    %3587 = vdwg.mxu0
    %3588 = vmatprep.subr.mxu0 %v2654
    %3589 = vmatpush1.msra.mxu0 %v2653
    %3590 = vmatprep.subr.mxu0 %v2650
    %3591 = vmatpush1.msra.mxu0 %v2649
    %3592 = vmatprep.subr.mxu0 %v2646
    %3593 = vmatpush1.msra.mxu0 %v2645
    %3594 = vmatprep.subr.mxu0 %v2642
    %3595 = vmatpush1.msra.mxu0 %v2641
    %3596 = vmatprep.subr.mxu0 %v2638
    %3597 = vmatpush1.msra.mxu0 %v2637
    %3598 = vmatprep.subr.mxu0 %v2634
    %3599 = vmatpush1.msra.mxu0 %v2633
    %3600 = vmatprep.subr.mxu0 %v2630
    %3601 = vmatpush1.msra.mxu0 %v2629
    %3602 = vmatprep.subr.mxu0 %v2626
    %3603 = vmatpush1.msra.mxu0 %v2625
    %3604 = vmatprep.subr.mxu0 %v2622
    %3605 = vmatpush1.msra.mxu0 %v2621
    %3606 = vmatprep.subr.mxu0 %v2618
    %3607 = vmatpush1.msra.mxu0 %v2617
    %3608 = vmatprep.subr.mxu0 %v2614
    %3609 = vmatpush1.msra.mxu0 %v2613
    %3610 = vmatprep.subr.mxu0 %v2610
    %3611 = vmatpush1.msra.mxu0 %v2609
    %3612 = vmatprep.subr.mxu0 %v2606
    %3613 = vmatpush1.msra.mxu0 %v2605
    %3614 = vmatprep.subr.mxu0 %v2602
    %3615 = vmatpush1.msra.mxu0 %v2601
    %3616 = vmatprep.subr.mxu0 %v2598
    %3617 = vmatpush1.msra.mxu0 %v2597
    %3618 = vmatprep.subr.mxu0 %v2594
    %3619 = vmatpush1.msra.mxu0 %v2593
    %3620 = vmatprep.subr.mxu0 %v2718
    %3621 = vmatpush2.msra.mxu0 %v2717
    %3622 = vmatprep.subr.mxu0 %v2714
    %3623 = vmatpush2.msra.mxu0 %v2713
    %3624 = vmatprep.subr.mxu0 %v2710
    %3625 = vmatpush2.msra.mxu0 %v2709
    %3626 = vmatprep.subr.mxu0 %v2706
    %3627 = vmatpush2.msra.mxu0 %v2705
    %3628 = vmatprep.subr.mxu0 %v2702
    %3629 = vmatpush2.msra.mxu0 %v2701
    %3630 = vmatprep.subr.mxu0 %v2698
    %3631 = vmatpush2.msra.mxu0 %v2697
    %3632 = vmatprep.subr.mxu0 %v2694
    %3633 = vmatpush2.msra.mxu0 %v2693
    %3634 = vmatprep.subr.mxu0 %v2690
    %3635 = vmatpush2.msra.mxu0 %v2689
    %3636 = vmatprep.subr.mxu0 %v2686
    %3637 = vmatpush2.msra.mxu0 %v2685
    %3638 = vmatprep.subr.mxu0 %v2682
    %3639 = vmatpush2.msra.mxu0 %v2681
    %3640 = vmatprep.subr.mxu0 %v2678
    %3641 = vmatpush2.msra.mxu0 %v2677
    %3642 = vmatprep.subr.mxu0 %v2674
    %3643 = vmatpush2.msra.mxu0 %v2673
    %3644 = vmatprep.subr.mxu0 %v2670
    %3645 = vmatpush2.msra.mxu0 %v2669
    %3646 = vmatprep.subr.mxu0 %v2666
    %3647 = vmatpush2.msra.mxu0 %v2665
    %3648 = vmatprep.subr.mxu0 %v2662
    %3649 = vmatpush2.msra.mxu0 %v2661
    %3650 = vmatprep.subr.mxu0 %v2658
    %3651 = vmatpush2.msra.mxu0 %v2657
    %3652 = vmatprep.mubr.f32.mxu0 %v2436
    %3653 = vmatmul.mubr.f32.gmra.mxu0 %v2435
    %v3654 = vpop.f32.mrf.mxu0
    %v3655 = vadd.f32 %v3578, %v3654
    %v3656 = vpop.f32.mrf.mxu0
    %v3657 = vadd.f32 %v3580, %v3656
    %3658 = vmatprep.mubr.f32.mxu0 %v2452
    %3659 = vmatmul.mubr.f32.gmra.mxu0 %v2451
    %v3660 = vpop.f32.mrf.mxu0
    %v3661 = vadd.f32 %v3584, %v3660
    %v3662 = vpop.f32.mrf.mxu0
    %v3663 = vadd.f32 %v3586, %v3662
    %3664 = vdwg.mxu0
    %3665 = vmatprep.subr.mxu0 %v2782
    %3666 = vmatpush1.msra.mxu0 %v2781
    %3667 = vmatprep.subr.mxu0 %v2778
    %3668 = vmatpush1.msra.mxu0 %v2777
    %3669 = vmatprep.subr.mxu0 %v2774
    %3670 = vmatpush1.msra.mxu0 %v2773
    %3671 = vmatprep.subr.mxu0 %v2770
    %3672 = vmatpush1.msra.mxu0 %v2769
    %3673 = vmatprep.subr.mxu0 %v2766
    %3674 = vmatpush1.msra.mxu0 %v2765
    %3675 = vmatprep.subr.mxu0 %v2762
    %3676 = vmatpush1.msra.mxu0 %v2761
    %3677 = vmatprep.subr.mxu0 %v2758
    %3678 = vmatpush1.msra.mxu0 %v2757
    %3679 = vmatprep.subr.mxu0 %v2754
    %3680 = vmatpush1.msra.mxu0 %v2753
    %3681 = vmatprep.subr.mxu0 %v2750
    %3682 = vmatpush1.msra.mxu0 %v2749
    %3683 = vmatprep.subr.mxu0 %v2746
    %3684 = vmatpush1.msra.mxu0 %v2745
    %3685 = vmatprep.subr.mxu0 %v2742
    %3686 = vmatpush1.msra.mxu0 %v2741
    %3687 = vmatprep.subr.mxu0 %v2738
    %3688 = vmatpush1.msra.mxu0 %v2737
    %3689 = vmatprep.subr.mxu0 %v2734
    %3690 = vmatpush1.msra.mxu0 %v2733
    %3691 = vmatprep.subr.mxu0 %v2730
    %3692 = vmatpush1.msra.mxu0 %v2729
    %3693 = vmatprep.subr.mxu0 %v2726
    %3694 = vmatpush1.msra.mxu0 %v2725
    %3695 = vmatprep.subr.mxu0 %v2722
    %3696 = vmatpush1.msra.mxu0 %v2721
    %3697 = vmatprep.subr.mxu0 %v2846
    %3698 = vmatpush2.msra.mxu0 %v2845
    %3699 = vmatprep.subr.mxu0 %v2842
    %3700 = vmatpush2.msra.mxu0 %v2841
    %3701 = vmatprep.subr.mxu0 %v2838
    %3702 = vmatpush2.msra.mxu0 %v2837
    %3703 = vmatprep.subr.mxu0 %v2834
    %3704 = vmatpush2.msra.mxu0 %v2833
    %3705 = vmatprep.subr.mxu0 %v2830
    %3706 = vmatpush2.msra.mxu0 %v2829
    %3707 = vmatprep.subr.mxu0 %v2826
    %3708 = vmatpush2.msra.mxu0 %v2825
    %3709 = vmatprep.subr.mxu0 %v2822
    %3710 = vmatpush2.msra.mxu0 %v2821
    %3711 = vmatprep.subr.mxu0 %v2818
    %3712 = vmatpush2.msra.mxu0 %v2817
    %3713 = vmatprep.subr.mxu0 %v2814
    %3714 = vmatpush2.msra.mxu0 %v2813
    %3715 = vmatprep.subr.mxu0 %v2810
    %3716 = vmatpush2.msra.mxu0 %v2809
    %3717 = vmatprep.subr.mxu0 %v2806
    %3718 = vmatpush2.msra.mxu0 %v2805
    %3719 = vmatprep.subr.mxu0 %v2802
    %3720 = vmatpush2.msra.mxu0 %v2801
    %3721 = vmatprep.subr.mxu0 %v2798
    %3722 = vmatpush2.msra.mxu0 %v2797
    %3723 = vmatprep.subr.mxu0 %v2794
    %3724 = vmatpush2.msra.mxu0 %v2793
    %3725 = vmatprep.subr.mxu0 %v2790
    %3726 = vmatpush2.msra.mxu0 %v2789
    %3727 = vmatprep.subr.mxu0 %v2786
    %3728 = vmatpush2.msra.mxu0 %v2785
    %3729 = vmatprep.mubr.f32.mxu0 %v2438
    %3730 = vmatmul.mubr.f32.gmra.mxu0 %v2437
    %v3731 = vpop.f32.mrf.mxu0
    %v3732 = vadd.f32 %v3655, %v3731
    %v3733 = vpop.f32.mrf.mxu0
    %v3734 = vadd.f32 %v3657, %v3733
    %3735 = vmatprep.mubr.f32.mxu0 %v2454
    %3736 = vmatmul.mubr.f32.gmra.mxu0 %v2453
    %v3737 = vpop.f32.mrf.mxu0
    %v3738 = vadd.f32 %v3661, %v3737
    %v3739 = vpop.f32.mrf.mxu0
    %v3740 = vadd.f32 %v3663, %v3739
    %3741 = vdwg.mxu0
    %3742 = vmatprep.subr.mxu0 %v2910
    %3743 = vmatpush1.msra.mxu0 %v2909
    %3744 = vmatprep.subr.mxu0 %v2906
    %3745 = vmatpush1.msra.mxu0 %v2905
    %3746 = vmatprep.subr.mxu0 %v2902
    %3747 = vmatpush1.msra.mxu0 %v2901
    %3748 = vmatprep.subr.mxu0 %v2898
    %3749 = vmatpush1.msra.mxu0 %v2897
    %3750 = vmatprep.subr.mxu0 %v2894
    %3751 = vmatpush1.msra.mxu0 %v2893
    %3752 = vmatprep.subr.mxu0 %v2890
    %3753 = vmatpush1.msra.mxu0 %v2889
    %3754 = vmatprep.subr.mxu0 %v2886
    %3755 = vmatpush1.msra.mxu0 %v2885
    %3756 = vmatprep.subr.mxu0 %v2882
    %3757 = vmatpush1.msra.mxu0 %v2881
    %3758 = vmatprep.subr.mxu0 %v2878
    %3759 = vmatpush1.msra.mxu0 %v2877
    %3760 = vmatprep.subr.mxu0 %v2874
    %3761 = vmatpush1.msra.mxu0 %v2873
    %3762 = vmatprep.subr.mxu0 %v2870
    %3763 = vmatpush1.msra.mxu0 %v2869
    %3764 = vmatprep.subr.mxu0 %v2866
    %3765 = vmatpush1.msra.mxu0 %v2865
    %3766 = vmatprep.subr.mxu0 %v2862
    %3767 = vmatpush1.msra.mxu0 %v2861
    %3768 = vmatprep.subr.mxu0 %v2858
    %3769 = vmatpush1.msra.mxu0 %v2857
    %3770 = vmatprep.subr.mxu0 %v2854
    %3771 = vmatpush1.msra.mxu0 %v2853
    %3772 = vmatprep.subr.mxu0 %v2850
    %3773 = vmatpush1.msra.mxu0 %v2849
    %3774 = vmatprep.subr.mxu0 %v2974
    %3775 = vmatpush2.msra.mxu0 %v2973
    %3776 = vmatprep.subr.mxu0 %v2970
    %3777 = vmatpush2.msra.mxu0 %v2969
    %3778 = vmatprep.subr.mxu0 %v2966
    %3779 = vmatpush2.msra.mxu0 %v2965
    %3780 = vmatprep.subr.mxu0 %v2962
    %3781 = vmatpush2.msra.mxu0 %v2961
    %3782 = vmatprep.subr.mxu0 %v2958
    %3783 = vmatpush2.msra.mxu0 %v2957
    %3784 = vmatprep.subr.mxu0 %v2954
    %3785 = vmatpush2.msra.mxu0 %v2953
    %3786 = vmatprep.subr.mxu0 %v2950
    %3787 = vmatpush2.msra.mxu0 %v2949
    %3788 = vmatprep.subr.mxu0 %v2946
    %3789 = vmatpush2.msra.mxu0 %v2945
    %3790 = vmatprep.subr.mxu0 %v2942
    %3791 = vmatpush2.msra.mxu0 %v2941
    %3792 = vmatprep.subr.mxu0 %v2938
    %3793 = vmatpush2.msra.mxu0 %v2937
    %3794 = vmatprep.subr.mxu0 %v2934
    %3795 = vmatpush2.msra.mxu0 %v2933
    %3796 = vmatprep.subr.mxu0 %v2930
    %3797 = vmatpush2.msra.mxu0 %v2929
    %3798 = vmatprep.subr.mxu0 %v2926
    %3799 = vmatpush2.msra.mxu0 %v2925
    %3800 = vmatprep.subr.mxu0 %v2922
    %3801 = vmatpush2.msra.mxu0 %v2921
    %3802 = vmatprep.subr.mxu0 %v2918
    %3803 = vmatpush2.msra.mxu0 %v2917
    %3804 = vmatprep.subr.mxu0 %v2914
    %3805 = vmatpush2.msra.mxu0 %v2913
    %3806 = vmatprep.mubr.f32.mxu0 %v2440
    %3807 = vmatmul.mubr.f32.gmra.mxu0 %v2439
    %v3808 = vpop.f32.mrf.mxu0
    %v3809 = vadd.f32 %v3732, %v3808
    %v3810 = vpop.f32.mrf.mxu0
    %v3811 = vadd.f32 %v3734, %v3810
    %3812 = vmatprep.mubr.f32.mxu0 %v2456
    %3813 = vmatmul.mubr.f32.gmra.mxu0 %v2455
    %v3814 = vpop.f32.mrf.mxu0
    %v3815 = vadd.f32 %v3738, %v3814
    %v3816 = vpop.f32.mrf.mxu0
    %v3817 = vadd.f32 %v3740, %v3816
    %3818 = vdwg.mxu0
    %3819 = vmatprep.subr.mxu0 %v3038
    %3820 = vmatpush1.msra.mxu0 %v3037
    %3821 = vmatprep.subr.mxu0 %v3034
    %3822 = vmatpush1.msra.mxu0 %v3033
    %3823 = vmatprep.subr.mxu0 %v3030
    %3824 = vmatpush1.msra.mxu0 %v3029
    %3825 = vmatprep.subr.mxu0 %v3026
    %3826 = vmatpush1.msra.mxu0 %v3025
    %3827 = vmatprep.subr.mxu0 %v3022
    %3828 = vmatpush1.msra.mxu0 %v3021
    %3829 = vmatprep.subr.mxu0 %v3018
    %3830 = vmatpush1.msra.mxu0 %v3017
    %3831 = vmatprep.subr.mxu0 %v3014
    %3832 = vmatpush1.msra.mxu0 %v3013
    %3833 = vmatprep.subr.mxu0 %v3010
    %3834 = vmatpush1.msra.mxu0 %v3009
    %3835 = vmatprep.subr.mxu0 %v3006
    %3836 = vmatpush1.msra.mxu0 %v3005
    %3837 = vmatprep.subr.mxu0 %v3002
    %3838 = vmatpush1.msra.mxu0 %v3001
    %3839 = vmatprep.subr.mxu0 %v2998
    %3840 = vmatpush1.msra.mxu0 %v2997
    %3841 = vmatprep.subr.mxu0 %v2994
    %3842 = vmatpush1.msra.mxu0 %v2993
    %3843 = vmatprep.subr.mxu0 %v2990
    %3844 = vmatpush1.msra.mxu0 %v2989
    %3845 = vmatprep.subr.mxu0 %v2986
    %3846 = vmatpush1.msra.mxu0 %v2985
    %3847 = vmatprep.subr.mxu0 %v2982
    %3848 = vmatpush1.msra.mxu0 %v2981
    %3849 = vmatprep.subr.mxu0 %v2978
    %3850 = vmatpush1.msra.mxu0 %v2977
    %3851 = vmatprep.subr.mxu0 %v3102
    %3852 = vmatpush2.msra.mxu0 %v3101
    %3853 = vmatprep.subr.mxu0 %v3098
    %3854 = vmatpush2.msra.mxu0 %v3097
    %3855 = vmatprep.subr.mxu0 %v3094
    %3856 = vmatpush2.msra.mxu0 %v3093
    %3857 = vmatprep.subr.mxu0 %v3090
    %3858 = vmatpush2.msra.mxu0 %v3089
    %3859 = vmatprep.subr.mxu0 %v3086
    %3860 = vmatpush2.msra.mxu0 %v3085
    %3861 = vmatprep.subr.mxu0 %v3082
    %3862 = vmatpush2.msra.mxu0 %v3081
    %3863 = vmatprep.subr.mxu0 %v3078
    %3864 = vmatpush2.msra.mxu0 %v3077
    %3865 = vmatprep.subr.mxu0 %v3074
    %3866 = vmatpush2.msra.mxu0 %v3073
    %3867 = vmatprep.subr.mxu0 %v3070
    %3868 = vmatpush2.msra.mxu0 %v3069
    %3869 = vmatprep.subr.mxu0 %v3066
    %3870 = vmatpush2.msra.mxu0 %v3065
    %3871 = vmatprep.subr.mxu0 %v3062
    %3872 = vmatpush2.msra.mxu0 %v3061
    %3873 = vmatprep.subr.mxu0 %v3058
    %3874 = vmatpush2.msra.mxu0 %v3057
    %3875 = vmatprep.subr.mxu0 %v3054
    %3876 = vmatpush2.msra.mxu0 %v3053
    %3877 = vmatprep.subr.mxu0 %v3050
    %3878 = vmatpush2.msra.mxu0 %v3049
    %3879 = vmatprep.subr.mxu0 %v3046
    %3880 = vmatpush2.msra.mxu0 %v3045
    %3881 = vmatprep.subr.mxu0 %v3042
    %3882 = vmatpush2.msra.mxu0 %v3041
    %3883 = vmatprep.mubr.f32.mxu0 %v2442
    %3884 = vmatmul.mubr.f32.gmra.mxu0 %v2441
    %v3885 = vpop.f32.mrf.mxu0
    %v3886 = vadd.f32 %v3809, %v3885
    %v3887 = vpop.f32.mrf.mxu0
    %v3888 = vadd.f32 %v3811, %v3887
    %3889 = vmatprep.mubr.f32.mxu0 %v2458
    %3890 = vmatmul.mubr.f32.gmra.mxu0 %v2457
    %v3891 = vpop.f32.mrf.mxu0
    %v3892 = vadd.f32 %v3815, %v3891
    %v3893 = vpop.f32.mrf.mxu0
    %v3894 = vadd.f32 %v3817, %v3893
    %3895 = vdwg.mxu0
    %3896 = vmatprep.subr.mxu0 %v3166
    %3897 = vmatpush1.msra.mxu0 %v3165
    %3898 = vmatprep.subr.mxu0 %v3162
    %3899 = vmatpush1.msra.mxu0 %v3161
    %3900 = vmatprep.subr.mxu0 %v3158
    %3901 = vmatpush1.msra.mxu0 %v3157
    %3902 = vmatprep.subr.mxu0 %v3154
    %3903 = vmatpush1.msra.mxu0 %v3153
    %3904 = vmatprep.subr.mxu0 %v3150
    %3905 = vmatpush1.msra.mxu0 %v3149
    %3906 = vmatprep.subr.mxu0 %v3146
    %3907 = vmatpush1.msra.mxu0 %v3145
    %3908 = vmatprep.subr.mxu0 %v3142
    %3909 = vmatpush1.msra.mxu0 %v3141
    %3910 = vmatprep.subr.mxu0 %v3138
    %3911 = vmatpush1.msra.mxu0 %v3137
    %3912 = vmatprep.subr.mxu0 %v3134
    %3913 = vmatpush1.msra.mxu0 %v3133
    %3914 = vmatprep.subr.mxu0 %v3130
    %3915 = vmatpush1.msra.mxu0 %v3129
    %3916 = vmatprep.subr.mxu0 %v3126
    %3917 = vmatpush1.msra.mxu0 %v3125
    %3918 = vmatprep.subr.mxu0 %v3122
    %3919 = vmatpush1.msra.mxu0 %v3121
    %3920 = vmatprep.subr.mxu0 %v3118
    %3921 = vmatpush1.msra.mxu0 %v3117
    %3922 = vmatprep.subr.mxu0 %v3114
    %3923 = vmatpush1.msra.mxu0 %v3113
    %3924 = vmatprep.subr.mxu0 %v3110
    %3925 = vmatpush1.msra.mxu0 %v3109
    %3926 = vmatprep.subr.mxu0 %v3106
    %3927 = vmatpush1.msra.mxu0 %v3105
    %3928 = vmatprep.subr.mxu0 %v3230
    %3929 = vmatpush2.msra.mxu0 %v3229
    %3930 = vmatprep.subr.mxu0 %v3226
    %3931 = vmatpush2.msra.mxu0 %v3225
    %3932 = vmatprep.subr.mxu0 %v3222
    %3933 = vmatpush2.msra.mxu0 %v3221
    %3934 = vmatprep.subr.mxu0 %v3218
    %3935 = vmatpush2.msra.mxu0 %v3217
    %3936 = vmatprep.subr.mxu0 %v3214
    %3937 = vmatpush2.msra.mxu0 %v3213
    %3938 = vmatprep.subr.mxu0 %v3210
    %3939 = vmatpush2.msra.mxu0 %v3209
    %3940 = vmatprep.subr.mxu0 %v3206
    %3941 = vmatpush2.msra.mxu0 %v3205
    %3942 = vmatprep.subr.mxu0 %v3202
    %3943 = vmatpush2.msra.mxu0 %v3201
    %3944 = vmatprep.subr.mxu0 %v3198
    %3945 = vmatpush2.msra.mxu0 %v3197
    %3946 = vmatprep.subr.mxu0 %v3194
    %3947 = vmatpush2.msra.mxu0 %v3193
    %3948 = vmatprep.subr.mxu0 %v3190
    %3949 = vmatpush2.msra.mxu0 %v3189
    %3950 = vmatprep.subr.mxu0 %v3186
    %3951 = vmatpush2.msra.mxu0 %v3185
    %3952 = vmatprep.subr.mxu0 %v3182
    %3953 = vmatpush2.msra.mxu0 %v3181
    %3954 = vmatprep.subr.mxu0 %v3178
    %3955 = vmatpush2.msra.mxu0 %v3177
    %3956 = vmatprep.subr.mxu0 %v3174
    %3957 = vmatpush2.msra.mxu0 %v3173
    %3958 = vmatprep.subr.mxu0 %v3170
    %3959 = vmatpush2.msra.mxu0 %v3169
    %3960 = vmatprep.mubr.f32.mxu0 %v2444
    %3961 = vmatmul.mubr.f32.gmra.mxu0 %v2443
    %v3962 = vpop.f32.mrf.mxu0
    %v3963 = vadd.f32 %v3886, %v3962
    %v3964 = vpop.f32.mrf.mxu0
    %v3965 = vadd.f32 %v3888, %v3964
    %3966 = vmatprep.mubr.f32.mxu0 %v2460
    %3967 = vmatmul.mubr.f32.gmra.mxu0 %v2459
    %v3968 = vpop.f32.mrf.mxu0
    %v3969 = vadd.f32 %v3892, %v3968
    %v3970 = vpop.f32.mrf.mxu0
    %v3971 = vadd.f32 %v3894, %v3970
    %3972 = vdwg.mxu0
    %3973 = vmatprep.subr.mxu0 %v3294
    %3974 = vmatpush1.msra.mxu0 %v3293
    %3975 = vmatprep.subr.mxu0 %v3290
    %3976 = vmatpush1.msra.mxu0 %v3289
    %3977 = vmatprep.subr.mxu0 %v3286
    %3978 = vmatpush1.msra.mxu0 %v3285
    %3979 = vmatprep.subr.mxu0 %v3282
    %3980 = vmatpush1.msra.mxu0 %v3281
    %3981 = vmatprep.subr.mxu0 %v3278
    %3982 = vmatpush1.msra.mxu0 %v3277
    %3983 = vmatprep.subr.mxu0 %v3274
    %3984 = vmatpush1.msra.mxu0 %v3273
    %3985 = vmatprep.subr.mxu0 %v3270
    %3986 = vmatpush1.msra.mxu0 %v3269
    %3987 = vmatprep.subr.mxu0 %v3266
    %3988 = vmatpush1.msra.mxu0 %v3265
    %3989 = vmatprep.subr.mxu0 %v3262
    %3990 = vmatpush1.msra.mxu0 %v3261
    %3991 = vmatprep.subr.mxu0 %v3258
    %3992 = vmatpush1.msra.mxu0 %v3257
    %3993 = vmatprep.subr.mxu0 %v3254
    %3994 = vmatpush1.msra.mxu0 %v3253
    %3995 = vmatprep.subr.mxu0 %v3250
    %3996 = vmatpush1.msra.mxu0 %v3249
    %3997 = vmatprep.subr.mxu0 %v3246
    %3998 = vmatpush1.msra.mxu0 %v3245
    %3999 = vmatprep.subr.mxu0 %v3242
    %4000 = vmatpush1.msra.mxu0 %v3241
    %4001 = vmatprep.subr.mxu0 %v3238
    %4002 = vmatpush1.msra.mxu0 %v3237
    %4003 = vmatprep.subr.mxu0 %v3234
    %4004 = vmatpush1.msra.mxu0 %v3233
    %4005 = vmatprep.subr.mxu0 %v3358
    %4006 = vmatpush2.msra.mxu0 %v3357
    %4007 = vmatprep.subr.mxu0 %v3354
    %4008 = vmatpush2.msra.mxu0 %v3353
    %4009 = vmatprep.subr.mxu0 %v3350
    %4010 = vmatpush2.msra.mxu0 %v3349
    %4011 = vmatprep.subr.mxu0 %v3346
    %4012 = vmatpush2.msra.mxu0 %v3345
    %4013 = vmatprep.subr.mxu0 %v3342
    %4014 = vmatpush2.msra.mxu0 %v3341
    %4015 = vmatprep.subr.mxu0 %v3338
    %4016 = vmatpush2.msra.mxu0 %v3337
    %4017 = vmatprep.subr.mxu0 %v3334
    %4018 = vmatpush2.msra.mxu0 %v3333
    %4019 = vmatprep.subr.mxu0 %v3330
    %4020 = vmatpush2.msra.mxu0 %v3329
    %4021 = vmatprep.subr.mxu0 %v3326
    %4022 = vmatpush2.msra.mxu0 %v3325
    %4023 = vmatprep.subr.mxu0 %v3322
    %4024 = vmatpush2.msra.mxu0 %v3321
    %4025 = vmatprep.subr.mxu0 %v3318
    %4026 = vmatpush2.msra.mxu0 %v3317
    %4027 = vmatprep.subr.mxu0 %v3314
    %4028 = vmatpush2.msra.mxu0 %v3313
    %4029 = vmatprep.subr.mxu0 %v3310
    %4030 = vmatpush2.msra.mxu0 %v3309
    %4031 = vmatprep.subr.mxu0 %v3306
    %4032 = vmatpush2.msra.mxu0 %v3305
    %4033 = vmatprep.subr.mxu0 %v3302
    %4034 = vmatpush2.msra.mxu0 %v3301
    %4035 = vmatprep.subr.mxu0 %v3298
    %4036 = vmatpush2.msra.mxu0 %v3297
    %4037 = vmatprep.mubr.f32.mxu0 %v2446
    %4038 = vmatmul.mubr.f32.gmra.mxu0 %v2445
    %v4039 = vpop.f32.mrf.mxu0
    %v4040 = vadd.f32 %v3963, %v4039
    %v4041 = vpop.f32.mrf.mxu0
    %v4042 = vadd.f32 %v3965, %v4041
    %4043 = vmatprep.mubr.f32.mxu0 %v2462
    %4044 = vmatmul.mubr.f32.gmra.mxu0 %v2461
    %v4045 = vpop.f32.mrf.mxu0
    %v4046 = vadd.f32 %v3969, %v4045
    %v4047 = vpop.f32.mrf.mxu0
    %v4048 = vadd.f32 %v3971, %v4047
    %4049 = vdwg.mxu0
    %4050 = vmatprep.subr.mxu0 %v3422
    %4051 = vmatpush1.msra.mxu0 %v3421
    %4052 = vmatprep.subr.mxu0 %v3418
    %4053 = vmatpush1.msra.mxu0 %v3417
    %4054 = vmatprep.subr.mxu0 %v3414
    %4055 = vmatpush1.msra.mxu0 %v3413
    %4056 = vmatprep.subr.mxu0 %v3410
    %4057 = vmatpush1.msra.mxu0 %v3409
    %4058 = vmatprep.subr.mxu0 %v3406
    %4059 = vmatpush1.msra.mxu0 %v3405
    %4060 = vmatprep.subr.mxu0 %v3402
    %4061 = vmatpush1.msra.mxu0 %v3401
    %4062 = vmatprep.subr.mxu0 %v3398
    %4063 = vmatpush1.msra.mxu0 %v3397
    %4064 = vmatprep.subr.mxu0 %v3394
    %4065 = vmatpush1.msra.mxu0 %v3393
    %4066 = vmatprep.subr.mxu0 %v3390
    %4067 = vmatpush1.msra.mxu0 %v3389
    %4068 = vmatprep.subr.mxu0 %v3386
    %4069 = vmatpush1.msra.mxu0 %v3385
    %4070 = vmatprep.subr.mxu0 %v3382
    %4071 = vmatpush1.msra.mxu0 %v3381
    %4072 = vmatprep.subr.mxu0 %v3378
    %4073 = vmatpush1.msra.mxu0 %v3377
    %4074 = vmatprep.subr.mxu0 %v3374
    %4075 = vmatpush1.msra.mxu0 %v3373
    %4076 = vmatprep.subr.mxu0 %v3370
    %4077 = vmatpush1.msra.mxu0 %v3369
    %4078 = vmatprep.subr.mxu0 %v3366
    %4079 = vmatpush1.msra.mxu0 %v3365
    %4080 = vmatprep.subr.mxu0 %v3362
    %4081 = vmatpush1.msra.mxu0 %v3361
    %4082 = vmatprep.subr.mxu0 %v3486
    %4083 = vmatpush2.msra.mxu0 %v3485
    %4084 = vmatprep.subr.mxu0 %v3482
    %4085 = vmatpush2.msra.mxu0 %v3481
    %4086 = vmatprep.subr.mxu0 %v3478
    %4087 = vmatpush2.msra.mxu0 %v3477
    %4088 = vmatprep.subr.mxu0 %v3474
    %4089 = vmatpush2.msra.mxu0 %v3473
    %4090 = vmatprep.subr.mxu0 %v3470
    %4091 = vmatpush2.msra.mxu0 %v3469
    %4092 = vmatprep.subr.mxu0 %v3466
    %4093 = vmatpush2.msra.mxu0 %v3465
    %4094 = vmatprep.subr.mxu0 %v3462
    %4095 = vmatpush2.msra.mxu0 %v3461
    %4096 = vmatprep.subr.mxu0 %v3458
    %4097 = vmatpush2.msra.mxu0 %v3457
    %4098 = vmatprep.subr.mxu0 %v3454
    %4099 = vmatpush2.msra.mxu0 %v3453
    %4100 = vmatprep.subr.mxu0 %v3450
    %4101 = vmatpush2.msra.mxu0 %v3449
    %4102 = vmatprep.subr.mxu0 %v3446
    %4103 = vmatpush2.msra.mxu0 %v3445
    %4104 = vmatprep.subr.mxu0 %v3442
    %4105 = vmatpush2.msra.mxu0 %v3441
    %4106 = vmatprep.subr.mxu0 %v3438
    %4107 = vmatpush2.msra.mxu0 %v3437
    %4108 = vmatprep.subr.mxu0 %v3434
    %4109 = vmatpush2.msra.mxu0 %v3433
    %4110 = vmatprep.subr.mxu0 %v3430
    %4111 = vmatpush2.msra.mxu0 %v3429
    %4112 = vmatprep.subr.mxu0 %v3426
    %4113 = vmatpush2.msra.mxu0 %v3425
    %4114 = vmatprep.mubr.f32.mxu0 %v2448
    %4115 = vmatmul.mubr.f32.gmra.mxu0 %v2447
    %v4116 = vpop.f32.mrf.mxu0
    %v4117 = vadd.f32 %v4040, %v4116
    %v4118 = vpop.f32.mrf.mxu0
    %v4119 = vadd.f32 %v4042, %v4118
    %4120 = vmatprep.mubr.f32.mxu0 %v2464
    %4121 = vmatmul.mubr.f32.gmra.mxu0 %v2463
    %v4122 = vpop.f32.mrf.mxu0
    %v4123 = vadd.f32 %v4046, %v4122
    %v4124 = vpop.f32.mrf.mxu0
    %v4125 = vadd.f32 %v4048, %v4124
    %4126 = vdwg.mxu0
    %4127 = vmatprep.subr.mxu0 %v2528
    %4128 = vmatpush1.msra.mxu0 %v2527
    %4129 = vmatprep.subr.mxu0 %v2524
    %4130 = vmatpush1.msra.mxu0 %v2523
    %4131 = vmatprep.subr.mxu0 %v2520
    %4132 = vmatpush1.msra.mxu0 %v2519
    %4133 = vmatprep.subr.mxu0 %v2516
    %4134 = vmatpush1.msra.mxu0 %v2515
    %4135 = vmatprep.subr.mxu0 %v2512
    %4136 = vmatpush1.msra.mxu0 %v2511
    %4137 = vmatprep.subr.mxu0 %v2508
    %4138 = vmatpush1.msra.mxu0 %v2507
    %4139 = vmatprep.subr.mxu0 %v2504
    %4140 = vmatpush1.msra.mxu0 %v2503
    %4141 = vmatprep.subr.mxu0 %v2500
    %4142 = vmatpush1.msra.mxu0 %v2499
    %4143 = vmatprep.subr.mxu0 %v2496
    %4144 = vmatpush1.msra.mxu0 %v2495
    %4145 = vmatprep.subr.mxu0 %v2492
    %4146 = vmatpush1.msra.mxu0 %v2491
    %4147 = vmatprep.subr.mxu0 %v2488
    %4148 = vmatpush1.msra.mxu0 %v2487
    %4149 = vmatprep.subr.mxu0 %v2484
    %4150 = vmatpush1.msra.mxu0 %v2483
    %4151 = vmatprep.subr.mxu0 %v2480
    %4152 = vmatpush1.msra.mxu0 %v2479
    %4153 = vmatprep.subr.mxu0 %v2476
    %4154 = vmatpush1.msra.mxu0 %v2475
    %4155 = vmatprep.subr.mxu0 %v2472
    %4156 = vmatpush1.msra.mxu0 %v2471
    %4157 = vmatprep.subr.mxu0 %v2468
    %4158 = vmatpush1.msra.mxu0 %v2467
    %4159 = vmatprep.subr.mxu0 %v2592
    %4160 = vmatpush2.msra.mxu0 %v2591
    %4161 = vmatprep.subr.mxu0 %v2588
    %4162 = vmatpush2.msra.mxu0 %v2587
    %4163 = vmatprep.subr.mxu0 %v2584
    %4164 = vmatpush2.msra.mxu0 %v2583
    %4165 = vmatprep.subr.mxu0 %v2580
    %4166 = vmatpush2.msra.mxu0 %v2579
    %4167 = vmatprep.subr.mxu0 %v2576
    %4168 = vmatpush2.msra.mxu0 %v2575
    %4169 = vmatprep.subr.mxu0 %v2572
    %4170 = vmatpush2.msra.mxu0 %v2571
    %4171 = vmatprep.subr.mxu0 %v2568
    %4172 = vmatpush2.msra.mxu0 %v2567
    %4173 = vmatprep.subr.mxu0 %v2564
    %4174 = vmatpush2.msra.mxu0 %v2563
    %4175 = vmatprep.subr.mxu0 %v2560
    %4176 = vmatpush2.msra.mxu0 %v2559
    %4177 = vmatprep.subr.mxu0 %v2556
    %4178 = vmatpush2.msra.mxu0 %v2555
    %4179 = vmatprep.subr.mxu0 %v2552
    %4180 = vmatpush2.msra.mxu0 %v2551
    %4181 = vmatprep.subr.mxu0 %v2548
    %4182 = vmatpush2.msra.mxu0 %v2547
    %4183 = vmatprep.subr.mxu0 %v2544
    %4184 = vmatpush2.msra.mxu0 %v2543
    %4185 = vmatprep.subr.mxu0 %v2540
    %4186 = vmatpush2.msra.mxu0 %v2539
    %4187 = vmatprep.subr.mxu0 %v2536
    %4188 = vmatpush2.msra.mxu0 %v2535
    %4189 = vmatprep.subr.mxu0 %v2532
    %4190 = vmatpush2.msra.mxu0 %v2531
    %4191 = vmatprep.mubr.f32.mxu0 %v2434
    %4192 = vmatmul.mubr.f32.gmra.mxu0 %v2433
    %v4193 = vpop.f32.mrf.mxu0
    %v4194 = vadd.f32 %v3502, %v4193
    %v4195 = vpop.f32.mrf.mxu0
    %v4196 = vadd.f32 %v3506, %v4195
    %4197 = vmatprep.mubr.f32.mxu0 %v2450
    %4198 = vmatmul.mubr.f32.gmra.mxu0 %v2449
    %v4199 = vpop.f32.mrf.mxu0
    %v4200 = vadd.f32 %v3502, %v4199
    %v4201 = vpop.f32.mrf.mxu0
    %v4202 = vadd.f32 %v3506, %v4201
    %4203 = vdwg.mxu0
    %4204 = vmatprep.subr.mxu0 %v2656
    %4205 = vmatpush1.msra.mxu0 %v2655
    %4206 = vmatprep.subr.mxu0 %v2652
    %4207 = vmatpush1.msra.mxu0 %v2651
    %4208 = vmatprep.subr.mxu0 %v2648
    %4209 = vmatpush1.msra.mxu0 %v2647
    %4210 = vmatprep.subr.mxu0 %v2644
    %4211 = vmatpush1.msra.mxu0 %v2643
    %4212 = vmatprep.subr.mxu0 %v2640
    %4213 = vmatpush1.msra.mxu0 %v2639
    %4214 = vmatprep.subr.mxu0 %v2636
    %4215 = vmatpush1.msra.mxu0 %v2635
    %4216 = vmatprep.subr.mxu0 %v2632
    %4217 = vmatpush1.msra.mxu0 %v2631
    %4218 = vmatprep.subr.mxu0 %v2628
    %4219 = vmatpush1.msra.mxu0 %v2627
    %4220 = vmatprep.subr.mxu0 %v2624
    %4221 = vmatpush1.msra.mxu0 %v2623
    %4222 = vmatprep.subr.mxu0 %v2620
    %4223 = vmatpush1.msra.mxu0 %v2619
    %4224 = vmatprep.subr.mxu0 %v2616
    %4225 = vmatpush1.msra.mxu0 %v2615
    %4226 = vmatprep.subr.mxu0 %v2612
    %4227 = vmatpush1.msra.mxu0 %v2611
    %4228 = vmatprep.subr.mxu0 %v2608
    %4229 = vmatpush1.msra.mxu0 %v2607
    %4230 = vmatprep.subr.mxu0 %v2604
    %4231 = vmatpush1.msra.mxu0 %v2603
    %4232 = vmatprep.subr.mxu0 %v2600
    %4233 = vmatpush1.msra.mxu0 %v2599
    %4234 = vmatprep.subr.mxu0 %v2596
    %4235 = vmatpush1.msra.mxu0 %v2595
    %4236 = vmatprep.subr.mxu0 %v2720
    %4237 = vmatpush2.msra.mxu0 %v2719
    %4238 = vmatprep.subr.mxu0 %v2716
    %4239 = vmatpush2.msra.mxu0 %v2715
    %4240 = vmatprep.subr.mxu0 %v2712
    %4241 = vmatpush2.msra.mxu0 %v2711
    %4242 = vmatprep.subr.mxu0 %v2708
    %4243 = vmatpush2.msra.mxu0 %v2707
    %4244 = vmatprep.subr.mxu0 %v2704
    %4245 = vmatpush2.msra.mxu0 %v2703
    %4246 = vmatprep.subr.mxu0 %v2700
    %4247 = vmatpush2.msra.mxu0 %v2699
    %4248 = vmatprep.subr.mxu0 %v2696
    %4249 = vmatpush2.msra.mxu0 %v2695
    %4250 = vmatprep.subr.mxu0 %v2692
    %4251 = vmatpush2.msra.mxu0 %v2691
    %4252 = vmatprep.subr.mxu0 %v2688
    %4253 = vmatpush2.msra.mxu0 %v2687
    %4254 = vmatprep.subr.mxu0 %v2684
    %4255 = vmatpush2.msra.mxu0 %v2683
    %4256 = vmatprep.subr.mxu0 %v2680
    %4257 = vmatpush2.msra.mxu0 %v2679
    %4258 = vmatprep.subr.mxu0 %v2676
    %4259 = vmatpush2.msra.mxu0 %v2675
    %4260 = vmatprep.subr.mxu0 %v2672
    %4261 = vmatpush2.msra.mxu0 %v2671
    %4262 = vmatprep.subr.mxu0 %v2668
    %4263 = vmatpush2.msra.mxu0 %v2667
    %4264 = vmatprep.subr.mxu0 %v2664
    %4265 = vmatpush2.msra.mxu0 %v2663
    %4266 = vmatprep.subr.mxu0 %v2660
    %4267 = vmatpush2.msra.mxu0 %v2659
    %4268 = vmatprep.mubr.f32.mxu0 %v2436
    %4269 = vmatmul.mubr.f32.gmra.mxu0 %v2435
    %v4270 = vpop.f32.mrf.mxu0
    %v4271 = vadd.f32 %v4194, %v4270
    %v4272 = vpop.f32.mrf.mxu0
    %v4273 = vadd.f32 %v4196, %v4272
    %4274 = vmatprep.mubr.f32.mxu0 %v2452
    %4275 = vmatmul.mubr.f32.gmra.mxu0 %v2451
    %v4276 = vpop.f32.mrf.mxu0
    %v4277 = vadd.f32 %v4200, %v4276
    %v4278 = vpop.f32.mrf.mxu0
    %v4279 = vadd.f32 %v4202, %v4278
    %4280 = vdwg.mxu0
    %4281 = vmatprep.subr.mxu0 %v2784
    %4282 = vmatpush1.msra.mxu0 %v2783
    %4283 = vmatprep.subr.mxu0 %v2780
    %4284 = vmatpush1.msra.mxu0 %v2779
    %4285 = vmatprep.subr.mxu0 %v2776
    %4286 = vmatpush1.msra.mxu0 %v2775
    %4287 = vmatprep.subr.mxu0 %v2772
    %4288 = vmatpush1.msra.mxu0 %v2771
    %4289 = vmatprep.subr.mxu0 %v2768
    %4290 = vmatpush1.msra.mxu0 %v2767
    %4291 = vmatprep.subr.mxu0 %v2764
    %4292 = vmatpush1.msra.mxu0 %v2763
    %4293 = vmatprep.subr.mxu0 %v2760
    %4294 = vmatpush1.msra.mxu0 %v2759
    %4295 = vmatprep.subr.mxu0 %v2756
    %4296 = vmatpush1.msra.mxu0 %v2755
    %4297 = vmatprep.subr.mxu0 %v2752
    %4298 = vmatpush1.msra.mxu0 %v2751
    %4299 = vmatprep.subr.mxu0 %v2748
    %4300 = vmatpush1.msra.mxu0 %v2747
    %4301 = vmatprep.subr.mxu0 %v2744
    %4302 = vmatpush1.msra.mxu0 %v2743
    %4303 = vmatprep.subr.mxu0 %v2740
    %4304 = vmatpush1.msra.mxu0 %v2739
    %4305 = vmatprep.subr.mxu0 %v2736
    %4306 = vmatpush1.msra.mxu0 %v2735
    %4307 = vmatprep.subr.mxu0 %v2732
    %4308 = vmatpush1.msra.mxu0 %v2731
    %4309 = vmatprep.subr.mxu0 %v2728
    %4310 = vmatpush1.msra.mxu0 %v2727
    %4311 = vmatprep.subr.mxu0 %v2724
    %4312 = vmatpush1.msra.mxu0 %v2723
    %4313 = vmatprep.subr.mxu0 %v2848
    %4314 = vmatpush2.msra.mxu0 %v2847
    %4315 = vmatprep.subr.mxu0 %v2844
    %4316 = vmatpush2.msra.mxu0 %v2843
    %4317 = vmatprep.subr.mxu0 %v2840
    %4318 = vmatpush2.msra.mxu0 %v2839
    %4319 = vmatprep.subr.mxu0 %v2836
    %4320 = vmatpush2.msra.mxu0 %v2835
    %4321 = vmatprep.subr.mxu0 %v2832
    %4322 = vmatpush2.msra.mxu0 %v2831
    %4323 = vmatprep.subr.mxu0 %v2828
    %4324 = vmatpush2.msra.mxu0 %v2827
    %4325 = vmatprep.subr.mxu0 %v2824
    %4326 = vmatpush2.msra.mxu0 %v2823
    %4327 = vmatprep.subr.mxu0 %v2820
    %4328 = vmatpush2.msra.mxu0 %v2819
    %4329 = vmatprep.subr.mxu0 %v2816
    %4330 = vmatpush2.msra.mxu0 %v2815
    %4331 = vmatprep.subr.mxu0 %v2812
    %4332 = vmatpush2.msra.mxu0 %v2811
    %4333 = vmatprep.subr.mxu0 %v2808
    %4334 = vmatpush2.msra.mxu0 %v2807
    %4335 = vmatprep.subr.mxu0 %v2804
    %4336 = vmatpush2.msra.mxu0 %v2803
    %4337 = vmatprep.subr.mxu0 %v2800
    %4338 = vmatpush2.msra.mxu0 %v2799
    %4339 = vmatprep.subr.mxu0 %v2796
    %4340 = vmatpush2.msra.mxu0 %v2795
    %4341 = vmatprep.subr.mxu0 %v2792
    %4342 = vmatpush2.msra.mxu0 %v2791
    %4343 = vmatprep.subr.mxu0 %v2788
    %4344 = vmatpush2.msra.mxu0 %v2787
    %4345 = vmatprep.mubr.f32.mxu0 %v2438
    %4346 = vmatmul.mubr.f32.gmra.mxu0 %v2437
    %v4347 = vpop.f32.mrf.mxu0
    %v4348 = vadd.f32 %v4271, %v4347
    %v4349 = vpop.f32.mrf.mxu0
    %v4350 = vadd.f32 %v4273, %v4349
    %4351 = vmatprep.mubr.f32.mxu0 %v2454
    %4352 = vmatmul.mubr.f32.gmra.mxu0 %v2453
    %v4353 = vpop.f32.mrf.mxu0
    %v4354 = vadd.f32 %v4277, %v4353
    %v4355 = vpop.f32.mrf.mxu0
    %v4356 = vadd.f32 %v4279, %v4355
    %4357 = vdwg.mxu0
    %4358 = vmatprep.subr.mxu0 %v2912
    %4359 = vmatpush1.msra.mxu0 %v2911
    %4360 = vmatprep.subr.mxu0 %v2908
    %4361 = vmatpush1.msra.mxu0 %v2907
    %4362 = vmatprep.subr.mxu0 %v2904
    %4363 = vmatpush1.msra.mxu0 %v2903
    %4364 = vmatprep.subr.mxu0 %v2900
    %4365 = vmatpush1.msra.mxu0 %v2899
    %4366 = vmatprep.subr.mxu0 %v2896
    %4367 = vmatpush1.msra.mxu0 %v2895
    %4368 = vmatprep.subr.mxu0 %v2892
    %4369 = vmatpush1.msra.mxu0 %v2891
    %4370 = vmatprep.subr.mxu0 %v2888
    %4371 = vmatpush1.msra.mxu0 %v2887
    %4372 = vmatprep.subr.mxu0 %v2884
    %4373 = vmatpush1.msra.mxu0 %v2883
    %4374 = vmatprep.subr.mxu0 %v2880
    %4375 = vmatpush1.msra.mxu0 %v2879
    %4376 = vmatprep.subr.mxu0 %v2876
    %4377 = vmatpush1.msra.mxu0 %v2875
    %4378 = vmatprep.subr.mxu0 %v2872
    %4379 = vmatpush1.msra.mxu0 %v2871
    %4380 = vmatprep.subr.mxu0 %v2868
    %4381 = vmatpush1.msra.mxu0 %v2867
    %4382 = vmatprep.subr.mxu0 %v2864
    %4383 = vmatpush1.msra.mxu0 %v2863
    %4384 = vmatprep.subr.mxu0 %v2860
    %4385 = vmatpush1.msra.mxu0 %v2859
    %4386 = vmatprep.subr.mxu0 %v2856
    %4387 = vmatpush1.msra.mxu0 %v2855
    %4388 = vmatprep.subr.mxu0 %v2852
    %4389 = vmatpush1.msra.mxu0 %v2851
    %4390 = vmatprep.subr.mxu0 %v2976
    %4391 = vmatpush2.msra.mxu0 %v2975
    %4392 = vmatprep.subr.mxu0 %v2972
    %4393 = vmatpush2.msra.mxu0 %v2971
    %4394 = vmatprep.subr.mxu0 %v2968
    %4395 = vmatpush2.msra.mxu0 %v2967
    %4396 = vmatprep.subr.mxu0 %v2964
    %4397 = vmatpush2.msra.mxu0 %v2963
    %4398 = vmatprep.subr.mxu0 %v2960
    %4399 = vmatpush2.msra.mxu0 %v2959
    %4400 = vmatprep.subr.mxu0 %v2956
    %4401 = vmatpush2.msra.mxu0 %v2955
    %4402 = vmatprep.subr.mxu0 %v2952
    %4403 = vmatpush2.msra.mxu0 %v2951
    %4404 = vmatprep.subr.mxu0 %v2948
    %4405 = vmatpush2.msra.mxu0 %v2947
    %4406 = vmatprep.subr.mxu0 %v2944
    %4407 = vmatpush2.msra.mxu0 %v2943
    %4408 = vmatprep.subr.mxu0 %v2940
    %4409 = vmatpush2.msra.mxu0 %v2939
    %4410 = vmatprep.subr.mxu0 %v2936
    %4411 = vmatpush2.msra.mxu0 %v2935
    %4412 = vmatprep.subr.mxu0 %v2932
    %4413 = vmatpush2.msra.mxu0 %v2931
    %4414 = vmatprep.subr.mxu0 %v2928
    %4415 = vmatpush2.msra.mxu0 %v2927
    %4416 = vmatprep.subr.mxu0 %v2924
    %4417 = vmatpush2.msra.mxu0 %v2923
    %4418 = vmatprep.subr.mxu0 %v2920
    %4419 = vmatpush2.msra.mxu0 %v2919
    %4420 = vmatprep.subr.mxu0 %v2916
    %4421 = vmatpush2.msra.mxu0 %v2915
    %4422 = vmatprep.mubr.f32.mxu0 %v2440
    %4423 = vmatmul.mubr.f32.gmra.mxu0 %v2439
    %v4424 = vpop.f32.mrf.mxu0
    %v4425 = vadd.f32 %v4348, %v4424
    %v4426 = vpop.f32.mrf.mxu0
    %v4427 = vadd.f32 %v4350, %v4426
    %4428 = vmatprep.mubr.f32.mxu0 %v2456
    %4429 = vmatmul.mubr.f32.gmra.mxu0 %v2455
    %v4430 = vpop.f32.mrf.mxu0
    %v4431 = vadd.f32 %v4354, %v4430
    %v4432 = vpop.f32.mrf.mxu0
    %v4433 = vadd.f32 %v4356, %v4432
    %4434 = vdwg.mxu0
    %4435 = vmatprep.subr.mxu0 %v3040
    %4436 = vmatpush1.msra.mxu0 %v3039
    %4437 = vmatprep.subr.mxu0 %v3036
    %4438 = vmatpush1.msra.mxu0 %v3035
    %4439 = vmatprep.subr.mxu0 %v3032
    %4440 = vmatpush1.msra.mxu0 %v3031
    %4441 = vmatprep.subr.mxu0 %v3028
    %4442 = vmatpush1.msra.mxu0 %v3027
    %4443 = vmatprep.subr.mxu0 %v3024
    %4444 = vmatpush1.msra.mxu0 %v3023
    %4445 = vmatprep.subr.mxu0 %v3020
    %4446 = vmatpush1.msra.mxu0 %v3019
    %4447 = vmatprep.subr.mxu0 %v3016
    %4448 = vmatpush1.msra.mxu0 %v3015
    %4449 = vmatprep.subr.mxu0 %v3012
    %4450 = vmatpush1.msra.mxu0 %v3011
    %4451 = vmatprep.subr.mxu0 %v3008
    %4452 = vmatpush1.msra.mxu0 %v3007
    %4453 = vmatprep.subr.mxu0 %v3004
    %4454 = vmatpush1.msra.mxu0 %v3003
    %4455 = vmatprep.subr.mxu0 %v3000
    %4456 = vmatpush1.msra.mxu0 %v2999
    %4457 = vmatprep.subr.mxu0 %v2996
    %4458 = vmatpush1.msra.mxu0 %v2995
    %4459 = vmatprep.subr.mxu0 %v2992
    %4460 = vmatpush1.msra.mxu0 %v2991
    %4461 = vmatprep.subr.mxu0 %v2988
    %4462 = vmatpush1.msra.mxu0 %v2987
    %4463 = vmatprep.subr.mxu0 %v2984
    %4464 = vmatpush1.msra.mxu0 %v2983
    %4465 = vmatprep.subr.mxu0 %v2980
    %4466 = vmatpush1.msra.mxu0 %v2979
    %4467 = vmatprep.subr.mxu0 %v3104
    %4468 = vmatpush2.msra.mxu0 %v3103
    %4469 = vmatprep.subr.mxu0 %v3100
    %4470 = vmatpush2.msra.mxu0 %v3099
    %4471 = vmatprep.subr.mxu0 %v3096
    %4472 = vmatpush2.msra.mxu0 %v3095
    %4473 = vmatprep.subr.mxu0 %v3092
    %4474 = vmatpush2.msra.mxu0 %v3091
    %4475 = vmatprep.subr.mxu0 %v3088
    %4476 = vmatpush2.msra.mxu0 %v3087
    %4477 = vmatprep.subr.mxu0 %v3084
    %4478 = vmatpush2.msra.mxu0 %v3083
    %4479 = vmatprep.subr.mxu0 %v3080
    %4480 = vmatpush2.msra.mxu0 %v3079
    %4481 = vmatprep.subr.mxu0 %v3076
    %4482 = vmatpush2.msra.mxu0 %v3075
    %4483 = vmatprep.subr.mxu0 %v3072
    %4484 = vmatpush2.msra.mxu0 %v3071
    %4485 = vmatprep.subr.mxu0 %v3068
    %4486 = vmatpush2.msra.mxu0 %v3067
    %4487 = vmatprep.subr.mxu0 %v3064
    %4488 = vmatpush2.msra.mxu0 %v3063
    %4489 = vmatprep.subr.mxu0 %v3060
    %4490 = vmatpush2.msra.mxu0 %v3059
    %4491 = vmatprep.subr.mxu0 %v3056
    %4492 = vmatpush2.msra.mxu0 %v3055
    %4493 = vmatprep.subr.mxu0 %v3052
    %4494 = vmatpush2.msra.mxu0 %v3051
    %4495 = vmatprep.subr.mxu0 %v3048
    %4496 = vmatpush2.msra.mxu0 %v3047
    %4497 = vmatprep.subr.mxu0 %v3044
    %4498 = vmatpush2.msra.mxu0 %v3043
    %4499 = vmatprep.mubr.f32.mxu0 %v2442
    %4500 = vmatmul.mubr.f32.gmra.mxu0 %v2441
    %v4501 = vpop.f32.mrf.mxu0
    %v4502 = vadd.f32 %v4425, %v4501
    %v4503 = vpop.f32.mrf.mxu0
    %v4504 = vadd.f32 %v4427, %v4503
    %4505 = vmatprep.mubr.f32.mxu0 %v2458
    %4506 = vmatmul.mubr.f32.gmra.mxu0 %v2457
    %v4507 = vpop.f32.mrf.mxu0
    %v4508 = vadd.f32 %v4431, %v4507
    %v4509 = vpop.f32.mrf.mxu0
    %v4510 = vadd.f32 %v4433, %v4509
    %4511 = vdwg.mxu0
    %4512 = vmatprep.subr.mxu0 %v3168
    %4513 = vmatpush1.msra.mxu0 %v3167
    %4514 = vmatprep.subr.mxu0 %v3164
    %4515 = vmatpush1.msra.mxu0 %v3163
    %4516 = vmatprep.subr.mxu0 %v3160
    %4517 = vmatpush1.msra.mxu0 %v3159
    %4518 = vmatprep.subr.mxu0 %v3156
    %4519 = vmatpush1.msra.mxu0 %v3155
    %4520 = vmatprep.subr.mxu0 %v3152
    %4521 = vmatpush1.msra.mxu0 %v3151
    %4522 = vmatprep.subr.mxu0 %v3148
    %4523 = vmatpush1.msra.mxu0 %v3147
    %4524 = vmatprep.subr.mxu0 %v3144
    %4525 = vmatpush1.msra.mxu0 %v3143
    %4526 = vmatprep.subr.mxu0 %v3140
    %4527 = vmatpush1.msra.mxu0 %v3139
    %4528 = vmatprep.subr.mxu0 %v3136
    %4529 = vmatpush1.msra.mxu0 %v3135
    %4530 = vmatprep.subr.mxu0 %v3132
    %4531 = vmatpush1.msra.mxu0 %v3131
    %4532 = vmatprep.subr.mxu0 %v3128
    %4533 = vmatpush1.msra.mxu0 %v3127
    %4534 = vmatprep.subr.mxu0 %v3124
    %4535 = vmatpush1.msra.mxu0 %v3123
    %4536 = vmatprep.subr.mxu0 %v3120
    %4537 = vmatpush1.msra.mxu0 %v3119
    %4538 = vmatprep.subr.mxu0 %v3116
    %4539 = vmatpush1.msra.mxu0 %v3115
    %4540 = vmatprep.subr.mxu0 %v3112
    %4541 = vmatpush1.msra.mxu0 %v3111
    %4542 = vmatprep.subr.mxu0 %v3108
    %4543 = vmatpush1.msra.mxu0 %v3107
    %4544 = vmatprep.subr.mxu0 %v3232
    %4545 = vmatpush2.msra.mxu0 %v3231
    %4546 = vmatprep.subr.mxu0 %v3228
    %4547 = vmatpush2.msra.mxu0 %v3227
    %4548 = vmatprep.subr.mxu0 %v3224
    %4549 = vmatpush2.msra.mxu0 %v3223
    %4550 = vmatprep.subr.mxu0 %v3220
    %4551 = vmatpush2.msra.mxu0 %v3219
    %4552 = vmatprep.subr.mxu0 %v3216
    %4553 = vmatpush2.msra.mxu0 %v3215
    %4554 = vmatprep.subr.mxu0 %v3212
    %4555 = vmatpush2.msra.mxu0 %v3211
    %4556 = vmatprep.subr.mxu0 %v3208
    %4557 = vmatpush2.msra.mxu0 %v3207
    %4558 = vmatprep.subr.mxu0 %v3204
    %4559 = vmatpush2.msra.mxu0 %v3203
    %4560 = vmatprep.subr.mxu0 %v3200
    %4561 = vmatpush2.msra.mxu0 %v3199
    %4562 = vmatprep.subr.mxu0 %v3196
    %4563 = vmatpush2.msra.mxu0 %v3195
    %4564 = vmatprep.subr.mxu0 %v3192
    %4565 = vmatpush2.msra.mxu0 %v3191
    %4566 = vmatprep.subr.mxu0 %v3188
    %4567 = vmatpush2.msra.mxu0 %v3187
    %4568 = vmatprep.subr.mxu0 %v3184
    %4569 = vmatpush2.msra.mxu0 %v3183
    %4570 = vmatprep.subr.mxu0 %v3180
    %4571 = vmatpush2.msra.mxu0 %v3179
    %4572 = vmatprep.subr.mxu0 %v3176
    %4573 = vmatpush2.msra.mxu0 %v3175
    %4574 = vmatprep.subr.mxu0 %v3172
    %4575 = vmatpush2.msra.mxu0 %v3171
    %4576 = vmatprep.mubr.f32.mxu0 %v2444
    %4577 = vmatmul.mubr.f32.gmra.mxu0 %v2443
    %v4578 = vpop.f32.mrf.mxu0
    %v4579 = vadd.f32 %v4502, %v4578
    %v4580 = vpop.f32.mrf.mxu0
    %v4581 = vadd.f32 %v4504, %v4580
    %4582 = vmatprep.mubr.f32.mxu0 %v2460
    %4583 = vmatmul.mubr.f32.gmra.mxu0 %v2459
    %v4584 = vpop.f32.mrf.mxu0
    %v4585 = vadd.f32 %v4508, %v4584
    %v4586 = vpop.f32.mrf.mxu0
    %v4587 = vadd.f32 %v4510, %v4586
    %4588 = vdwg.mxu0
    %4589 = vmatprep.subr.mxu0 %v3296
    %4590 = vmatpush1.msra.mxu0 %v3295
    %4591 = vmatprep.subr.mxu0 %v3292
    %4592 = vmatpush1.msra.mxu0 %v3291
    %4593 = vmatprep.subr.mxu0 %v3288
    %4594 = vmatpush1.msra.mxu0 %v3287
    %4595 = vmatprep.subr.mxu0 %v3284
    %4596 = vmatpush1.msra.mxu0 %v3283
    %4597 = vmatprep.subr.mxu0 %v3280
    %4598 = vmatpush1.msra.mxu0 %v3279
    %4599 = vmatprep.subr.mxu0 %v3276
    %4600 = vmatpush1.msra.mxu0 %v3275
    %4601 = vmatprep.subr.mxu0 %v3272
    %4602 = vmatpush1.msra.mxu0 %v3271
    %4603 = vmatprep.subr.mxu0 %v3268
    %4604 = vmatpush1.msra.mxu0 %v3267
    %4605 = vmatprep.subr.mxu0 %v3264
    %4606 = vmatpush1.msra.mxu0 %v3263
    %4607 = vmatprep.subr.mxu0 %v3260
    %4608 = vmatpush1.msra.mxu0 %v3259
    %4609 = vmatprep.subr.mxu0 %v3256
    %4610 = vmatpush1.msra.mxu0 %v3255
    %4611 = vmatprep.subr.mxu0 %v3252
    %4612 = vmatpush1.msra.mxu0 %v3251
    %4613 = vmatprep.subr.mxu0 %v3248
    %4614 = vmatpush1.msra.mxu0 %v3247
    %4615 = vmatprep.subr.mxu0 %v3244
    %4616 = vmatpush1.msra.mxu0 %v3243
    %4617 = vmatprep.subr.mxu0 %v3240
    %4618 = vmatpush1.msra.mxu0 %v3239
    %4619 = vmatprep.subr.mxu0 %v3236
    %4620 = vmatpush1.msra.mxu0 %v3235
    %4621 = vmatprep.subr.mxu0 %v3360
    %4622 = vmatpush2.msra.mxu0 %v3359
    %4623 = vmatprep.subr.mxu0 %v3356
    %4624 = vmatpush2.msra.mxu0 %v3355
    %4625 = vmatprep.subr.mxu0 %v3352
    %4626 = vmatpush2.msra.mxu0 %v3351
    %4627 = vmatprep.subr.mxu0 %v3348
    %4628 = vmatpush2.msra.mxu0 %v3347
    %4629 = vmatprep.subr.mxu0 %v3344
    %4630 = vmatpush2.msra.mxu0 %v3343
    %4631 = vmatprep.subr.mxu0 %v3340
    %4632 = vmatpush2.msra.mxu0 %v3339
    %4633 = vmatprep.subr.mxu0 %v3336
    %4634 = vmatpush2.msra.mxu0 %v3335
    %4635 = vmatprep.subr.mxu0 %v3332
    %4636 = vmatpush2.msra.mxu0 %v3331
    %4637 = vmatprep.subr.mxu0 %v3328
    %4638 = vmatpush2.msra.mxu0 %v3327
    %4639 = vmatprep.subr.mxu0 %v3324
    %4640 = vmatpush2.msra.mxu0 %v3323
    %4641 = vmatprep.subr.mxu0 %v3320
    %4642 = vmatpush2.msra.mxu0 %v3319
    %4643 = vmatprep.subr.mxu0 %v3316
    %4644 = vmatpush2.msra.mxu0 %v3315
    %4645 = vmatprep.subr.mxu0 %v3312
    %4646 = vmatpush2.msra.mxu0 %v3311
    %4647 = vmatprep.subr.mxu0 %v3308
    %4648 = vmatpush2.msra.mxu0 %v3307
    %4649 = vmatprep.subr.mxu0 %v3304
    %4650 = vmatpush2.msra.mxu0 %v3303
    %4651 = vmatprep.subr.mxu0 %v3300
    %4652 = vmatpush2.msra.mxu0 %v3299
    %4653 = vmatprep.mubr.f32.mxu0 %v2446
    %4654 = vmatmul.mubr.f32.gmra.mxu0 %v2445
    %v4655 = vpop.f32.mrf.mxu0
    %v4656 = vadd.f32 %v4579, %v4655
    %v4657 = vpop.f32.mrf.mxu0
    %v4658 = vadd.f32 %v4581, %v4657
    %4659 = vmatprep.mubr.f32.mxu0 %v2462
    %4660 = vmatmul.mubr.f32.gmra.mxu0 %v2461
    %v4661 = vpop.f32.mrf.mxu0
    %v4662 = vadd.f32 %v4585, %v4661
    %v4663 = vpop.f32.mrf.mxu0
    %v4664 = vadd.f32 %v4587, %v4663
    %4665 = vdwg.mxu0
    %4666 = vmatprep.subr.mxu0 %v3424
    %4667 = vmatpush1.msra.mxu0 %v3423
    %4668 = vmatprep.subr.mxu0 %v3420
    %4669 = vmatpush1.msra.mxu0 %v3419
    %4670 = vmatprep.subr.mxu0 %v3416
    %4671 = vmatpush1.msra.mxu0 %v3415
    %4672 = vmatprep.subr.mxu0 %v3412
    %4673 = vmatpush1.msra.mxu0 %v3411
    %4674 = vmatprep.subr.mxu0 %v3408
    %4675 = vmatpush1.msra.mxu0 %v3407
    %4676 = vmatprep.subr.mxu0 %v3404
    %4677 = vmatpush1.msra.mxu0 %v3403
    %4678 = vmatprep.subr.mxu0 %v3400
    %4679 = vmatpush1.msra.mxu0 %v3399
    %4680 = vmatprep.subr.mxu0 %v3396
    %4681 = vmatpush1.msra.mxu0 %v3395
    %4682 = vmatprep.subr.mxu0 %v3392
    %4683 = vmatpush1.msra.mxu0 %v3391
    %4684 = vmatprep.subr.mxu0 %v3388
    %4685 = vmatpush1.msra.mxu0 %v3387
    %4686 = vmatprep.subr.mxu0 %v3384
    %4687 = vmatpush1.msra.mxu0 %v3383
    %4688 = vmatprep.subr.mxu0 %v3380
    %4689 = vmatpush1.msra.mxu0 %v3379
    %4690 = vmatprep.subr.mxu0 %v3376
    %4691 = vmatpush1.msra.mxu0 %v3375
    %4692 = vmatprep.subr.mxu0 %v3372
    %4693 = vmatpush1.msra.mxu0 %v3371
    %4694 = vmatprep.subr.mxu0 %v3368
    %4695 = vmatpush1.msra.mxu0 %v3367
    %4696 = vmatprep.subr.mxu0 %v3364
    %4697 = vmatpush1.msra.mxu0 %v3363
    %4698 = vmatprep.subr.mxu0 %v3488
    %4699 = vmatpush2.msra.mxu0 %v3487
    %4700 = vmatprep.subr.mxu0 %v3484
    %4701 = vmatpush2.msra.mxu0 %v3483
    %4702 = vmatprep.subr.mxu0 %v3480
    %4703 = vmatpush2.msra.mxu0 %v3479
    %4704 = vmatprep.subr.mxu0 %v3476
    %4705 = vmatpush2.msra.mxu0 %v3475
    %4706 = vmatprep.subr.mxu0 %v3472
    %4707 = vmatpush2.msra.mxu0 %v3471
    %4708 = vmatprep.subr.mxu0 %v3468
    %4709 = vmatpush2.msra.mxu0 %v3467
    %4710 = vmatprep.subr.mxu0 %v3464
    %4711 = vmatpush2.msra.mxu0 %v3463
    %4712 = vmatprep.subr.mxu0 %v3460
    %4713 = vmatpush2.msra.mxu0 %v3459
    %4714 = vmatprep.subr.mxu0 %v3456
    %4715 = vmatpush2.msra.mxu0 %v3455
    %4716 = vmatprep.subr.mxu0 %v3452
    %4717 = vmatpush2.msra.mxu0 %v3451
    %4718 = vmatprep.subr.mxu0 %v3448
    %4719 = vmatpush2.msra.mxu0 %v3447
    %4720 = vmatprep.subr.mxu0 %v3444
    %4721 = vmatpush2.msra.mxu0 %v3443
    %4722 = vmatprep.subr.mxu0 %v3440
    %4723 = vmatpush2.msra.mxu0 %v3439
    %4724 = vmatprep.subr.mxu0 %v3436
    %4725 = vmatpush2.msra.mxu0 %v3435
    %4726 = vmatprep.subr.mxu0 %v3432
    %4727 = vmatpush2.msra.mxu0 %v3431
    %4728 = vmatprep.subr.mxu0 %v3428
    %4729 = vmatpush2.msra.mxu0 %v3427
    %4730 = vmatprep.mubr.f32.mxu0 %v2448
    %4731 = vmatmul.mubr.f32.gmra.mxu0 %v2447
    %v4732 = vpop.f32.mrf.mxu0
    %v4733 = vadd.f32 %v4656, %v4732
    %v4734 = vpop.f32.mrf.mxu0
    %v4735 = vadd.f32 %v4658, %v4734
    %4736 = vmatprep.mubr.f32.mxu0 %v2464
    %4737 = vmatmul.mubr.f32.gmra.mxu0 %v2463
    %v4738 = vpop.f32.mrf.mxu0
    %v4739 = vadd.f32 %v4662, %v4738
    %v4740 = vpop.f32.mrf.mxu0
    %v4741 = vadd.f32 %v4664, %v4740
    %4742 = vdwg.mxu0
    %4743 = vst [vmem:[#allocation11] sm:$0xff] %v4117
    %4744 = vst [vmem:[#allocation11 + $0x8] sm:$0xff] %v4119
    %4745 = vst [vmem:[#allocation11 + $0x10] sm:$0xff] %v4733
    %4746 = vst [vmem:[#allocation11 + $0x18] sm:$0xff] %v4735
    %4747 = vst [vmem:[#allocation11 + $0x20] sm:$0xff] %v4123
    %4748 = vst [vmem:[#allocation11 + $0x28] sm:$0xff] %v4125
    %4749 = vst [vmem:[#allocation11 + $0x30] sm:$0xff] %v4739
    %4750 = vst [vmem:[#allocation11 + $0x38] sm:$0xff] %v4741
    // Predicated region
    $region42: #{tpu_custom_call.1} parent=1 // pred_check
      _
    $region43: #{tpu_custom_call.1} parent=1 // pred_check_branch
      %4752 = sbr.rel (0) target = $region45
    $region44: #{tpu_custom_call.1} parent=1 // pred_region
      %s4754 = ssub.s32 1024, 1024
      %4755 = vsyncadd [#allocation4], %s4754
      %s4756 = sshll.u32 [#allocation11], 4
      %s4757 = int_to_ptr.vmem [resolvable:$true] %s4756
      %4762 = dma.vmem_to_hbm [thread:$0]  %s4757, 1024, %s5, [#allocation4], 512, 512, 32
    $region45: #{tpu_custom_call.1} parent=1 // pred_fallthru
      _
    // Predicated region
    $region46: #{tpu_custom_call.1} parent=1 // pred_check
      _
    $region47: #{tpu_custom_call.1} parent=1 // pred_check_branch
      %4764 = sbr.rel (0) target = $region49
    $region48: #{tpu_custom_call.1} parent=1 // pred_region
      %4765 = dma.done [#allocation4], 1024
    $region49: #{tpu_custom_call.1} parent=1 // pred_fallthru
      _
    %4766 = vsyncpa [#allocation3], 1
    %4767 = vsyncpa [#allocation6], 1
    %4768 = vsyncpa [#allocation9], 1
    %4769 = vsyncpa [#allocation4], 1

</llo_original>
